<compile_context>
chip_gen: v7x
topology: tpu7x:2x2x1
jax: 0.10.0
libtpu: 0.0.40
codegen_flags: <defaults>
</compile_context>

<pallas_src>
import functools
import math

import jax
import jax.numpy as jnp
from jax.experimental import pallas as pl
from jax.experimental.pallas import tpu as pltpu


def _cdiv(a, b):
    return -(-a // b)


def _erf_f32(x):
    # Abramowitz & Stegun 7.1.26 rational approximation; |abs err| <= 1.5e-7 (f32-exact).
    # Built from exp/mul/add/div only so it does not depend on an erf primitive lowering.
    p = 0.3275911
    a1, a2, a3, a4, a5 = 0.254829592, -0.284496736, 1.421413741, -1.453152027, 1.061405429
    sgn = jnp.where(x >= 0.0, 1.0, -1.0)
    ax = jnp.abs(x)
    t = 1.0 / (1.0 + p * ax)
    poly = ((((a5 * t + a4) * t + a3) * t + a2) * t + a1) * t
    return sgn * (1.0 - poly * jnp.exp(-ax * ax))


def _gelu_exact(x):
    # torch.nn.GELU() default (erf form): 0.5 * x * (1 + erf(x / sqrt(2)))
    return 0.5 * x * (1.0 + _erf_f32(x * 0.7071067811865476))


def _icc_block_kernel(xcat_ref,
                      g1_ref, be1_ref,
                      w_qkv_ref, b_qkv_ref,
                      w_o_ref, b_o_ref,
                      g2_ref, be2_ref,
                      w1_ref, b1_ref,
                      w2_ref, b2_ref,
                      out_ref,
                      *, seq_x, seq_valid, num_heads):
    """One grid step processes Bt batch elements; weights stay resident in VMEM."""
    Bt, S_pad, H = xcat_ref.shape
    hd = H // num_heads

    xc3 = xcat_ref[...].astype(jnp.float32)                   # (Bt, S_pad, H)
    xc2 = xc3.reshape(Bt * S_pad, H)                          # fold batch into the matmul M dim

    # ---------------- LayerNorm1 (eps=1e-6) over the concatenated sequence ----------------
    mu = jnp.mean(xc2, axis=-1, keepdims=True)
    var = jnp.mean(jnp.square(xc2 - mu), axis=-1, keepdims=True)
    xn = (xc2 - mu) * jax.lax.rsqrt(var + 1e-6) * g1_ref[...] + be1_ref[...]

    # ---------------- fused QKV projection (bf16 operands on the MXU, f32 accumulation) -----
    # bf16 bias add so the f32 (Bt*S_pad, 3H) intermediate does not stay live with qkv_b.
    qkv_b = (jnp.dot(xn.astype(jnp.bfloat16), w_qkv_ref[...],
                     preferred_element_type=jnp.float32).astype(jnp.bfloat16)
             + b_qkv_ref[...])                                 # (Bt*S_pad, 3H) bf16
    qkv3 = qkv_b.reshape(Bt, S_pad, 3 * H)

    # additive key bias masking the sequence padding (wrapper pads S up to a multiple of 8)
    key_bias = None
    if S_pad > seq_valid:
        kidx = jax.lax.broadcasted_iota(jnp.int32, (1, 1, S_pad), 2)
        key_bias = jnp.where(kidx < seq_valid, 0.0, -1e30).astype(jnp.float32)

    # ---------------- multi-head self-attention ----------------
    # Only the first seq_x query rows are needed: the reference module discards the
    # cond-query outputs via `attn_out[:, :x.size(1), :]`.  Each head is one batched
    # contraction over all Bt batch entries (no per-(batch, head) unrolling).
    ctx_heads = []
    for h in range(num_heads):                                 # small, fixed unroll (num_heads)
        c0 = h * hd
        qh = qkv3[:, :seq_x, c0:c0 + hd]                       # (Bt, seq_x, hd); 1/sqrt(hd) folded into W_q
        kh = qkv3[:, :, H + c0:H + c0 + hd]                    # (Bt, S_pad, hd)
        vh = qkv3[:, :, 2 * H + c0:2 * H + c0 + hd]            # (Bt, S_pad, hd)
        s = jnp.einsum('bqd,bkd->bqk', qh, kh,
                       preferred_element_type=jnp.float32)     # (Bt, seq_x, S_pad) f32
        if key_bias is not None:
            s = s + key_bias
        s = s - jnp.max(s, axis=-1, keepdims=True)
        p = jnp.exp(s)
        p = p * pl.reciprocal(jnp.sum(p, axis=-1, keepdims=True), approx=True)
        ctx_heads.append(
            jnp.einsum('bqk,bkd->bqd', p.astype(jnp.bfloat16), vh,
                       preferred_element_type=jnp.float32).astype(jnp.bfloat16))
    # lane-dense (Bt*seq_x, H) bf16 value -> single full-H output projection
    ctx = jnp.concatenate(ctx_heads, axis=-1).reshape(Bt * seq_x, H)

    attn_out = jnp.dot(ctx, w_o_ref[...],
                       preferred_element_type=jnp.float32) + b_o_ref[...]

    # ---------------- slice out the x tokens + residual ----------------
    x_res = xc3[:, :seq_x, :].reshape(Bt * seq_x, H) + attn_out

    # ---------------- LayerNorm2 + MLP (Linear -> exact GELU -> Linear) ----------------
    mu2 = jnp.mean(x_res, axis=-1, keepdims=True)
    var2 = jnp.mean(jnp.square(x_res - mu2), axis=-1, keepdims=True)
    xn2 = (x_res - mu2) * jax.lax.rsqrt(var2 + 1e-6) * g2_ref[...] + be2_ref[...]

    h1 = jnp.dot(xn2.astype(jnp.bfloat16), w1_ref[...],
                 preferred_element_type=jnp.float32) + b1_ref[...]
    h1 = _gelu_exact(h1)                                       # torch nn.GELU() (erf form)
    mlp_out = jnp.dot(h1.astype(jnp.bfloat16), w2_ref[...],
                      preferred_element_type=jnp.float32) + b2_ref[...]

    out_ref[...] = (x_res + mlp_out).reshape(Bt, seq_x, H).astype(out_ref.dtype)


def _vmem_cap_bytes():
    try:
        cap = int(pltpu.get_tpu_info().vmem_capacity_bytes)
    except Exception:
        cap = 128 * 1024 * 1024
    return int(cap * 0.85)                                     # headroom


def _pick_block_b(B, seq_x, S_pad):
    # Size off the MLP matmul M (= block_b*seq_x): target >= 256 rows so the 256-wide MXU
    # (v6e/v7x) is filled, while bounding the concat-sequence working set per step.
    bb = max(1, _cdiv(256, seq_x))
    bb = min(bb, max(1, 4096 // max(S_pad, 1)))
    steps = max(1, _cdiv(B, bb))
    # TODO(synk): on v7x (2 TensorCores) force steps >= 2 when B >= 2 so both cores get work.
    return _cdiv(B, steps)                                     # rebalance -> minimal batch padding


def init_params(hidden_size, num_heads, mlp_ratio=4.0, seed=0):
    mlp_hidden = int(hidden_size * mlp_ratio)
    key = jax.random.PRNGKey(seed)
    ks = jax.random.split(key, 8)
    w = lambda k, shp: (0.02 * jax.random.normal(k, shp, dtype=jnp.float32))
    return {
        "ln1_g": jnp.ones((1, hidden_size), jnp.float32),
        "ln1_b": jnp.zeros((1, hidden_size), jnp.float32),
        "w_qkv": w(ks[0], (hidden_size, 3 * hidden_size)),
        "b_qkv": w(ks[1], (1, 3 * hidden_size)),
        "w_o":   w(ks[2], (hidden_size, hidden_size)),
        "b_o":   w(ks[3], (1, hidden_size)),
        "ln2_g": jnp.ones((1, hidden_size), jnp.float32),
        "ln2_b": jnp.zeros((1, hidden_size), jnp.float32),
        "w1":    w(ks[4], (hidden_size, mlp_hidden)),
        "b1":    w(ks[5], (1, mlp_hidden)),
        "w2":    w(ks[6], (mlp_hidden, hidden_size)),
        "b2":    w(ks[7], (1, hidden_size)),
    }


def in_context_conditioning_block(x, cond, params, num_heads, block_b=None):
    """JAX/Pallas equivalent of InContextConditioningBlock.forward."""
    if cond.ndim == 2:
        cond = cond[:, None, :]                                # (B, 1, H)
    cond = cond.astype(x.dtype)
    B, Sx, H = x.shape
    assert H % num_heads == 0
    hd = H // num_heads
    mlp_hidden = params["w1"].shape[1]

    # concat x and cond along the sequence, padded to a multiple of 8 sublanes
    S_valid = Sx + cond.shape[1]
    S_pad = _cdiv(S_valid, 8) * 8
    pieces = [x, cond]
    if S_pad > S_valid:
        pieces.append(jnp.zeros((B, S_pad - S_valid, H), x.dtype))
    xcat = jnp.concatenate(pieces, axis=1)                     # (B, S_pad, H)

    # batch blocking: robust to awkward/prime B by padding the batch up to a block multiple
    if block_b is None:
        block_b = _pick_block_b(B, Sx, S_pad)
    B_pad = _cdiv(B, block_b) * block_b
    if B_pad > B:
        xcat = jnp.concatenate([xcat, jnp.zeros((B_pad - B, S_pad, H), xcat.dtype)], axis=0)
    grid = (B_pad // block_b,)

    # --- parameter prep (outside the kernel): fold attention scale into Q, bf16 weights ---
    scale = 1.0 / math.sqrt(hd)
    qs = jnp.concatenate([jnp.full((1, H), scale, jnp.float32),
                          jnp.ones((1, 2 * H), jnp.float32)], axis=1)
    w_qkv = (params["w_qkv"].astype(jnp.float32) * qs).astype(jnp.bfloat16)
    b_qkv = (params["b_qkv"].astype(jnp.float32) * qs).astype(jnp.bfloat16)
    weights = [
        params["ln1_g"].astype(jnp.float32), params["ln1_b"].astype(jnp.float32),
        w_qkv, b_qkv,
        params["w_o"].astype(jnp.bfloat16), params["b_o"].astype(jnp.float32),
        params["ln2_g"].astype(jnp.float32), params["ln2_b"].astype(jnp.float32),
        params["w1"].astype(jnp.bfloat16), params["b1"].astype(jnp.float32),
        params["w2"].astype(jnp.bfloat16), params["b2"].astype(jnp.float32),
    ]

    kernel = functools.partial(_icc_block_kernel, seq_x=Sx, seq_valid=S_valid,
                               num_heads=num_heads)

    # VMEM budget: resident weights + activation working set + pipelined I/O, clamped to
    # ~85% of physical VMEM (≈108 MiB on v5e/v6e, ≈54 MiB on v7x).
    # TODO(synk): for very large H on v7x, strip-tile w1 (cols) / w2 (rows) over mlp_hidden
    # with an inner pltpu.emit_pipeline instead of keeping them fully resident.
    rows_cat = block_b * S_pad
    rows_x = block_b * Sx
    w_bytes = sum(int(a.size) * a.dtype.itemsize for a in weights)
    act_bytes = (4 * rows_cat * (2 * H + 3 * H)                # f32 xcat/LN temps + f32 qkv transient
                 + 2 * rows_cat * 3 * H                        # bf16 qkv
                 + 4 * rows_x * (S_pad + 3 * H + 2 * mlp_hidden))
    io_bytes = 2 * x.dtype.itemsize * (rows_cat + rows_x) * H
    vmem_limit = int(min(max(2 * w_bytes + 2 * act_bytes + io_bytes, 32 << 20),
                         _vmem_cap_bytes()))

    def _call(single_buffer_weights):
        def weight_spec(a):
            nd = a.ndim
            idx = lambda b, _nd=nd: (0,) * _nd                 # constant block -> DMA'd once
            if single_buffer_weights:
                # single-buffer resident weights (halves their VMEM footprint; key on v7x)
                return pl.BlockSpec(a.shape, idx, pipeline_mode=pl.Buffered(1))
            return pl.BlockSpec(a.shape, idx)

        out = pl.pallas_call(
            kernel,
            out_shape=jax.ShapeDtypeStruct((B_pad, Sx, H), x.dtype),
            grid_spec=pltpu.PrefetchScalarGridSpec(
                num_scalar_prefetch=0,
                grid=grid,
                in_specs=[pl.BlockSpec((block_b, S_pad, H), lambda b: (b, 0, 0))]
                         + [weight_spec(a) for a in weights],
                out_specs=pl.BlockSpec((block_b, Sx, H), lambda b: (b, 0, 0)),
            ),
            compiler_params=pltpu.CompilerParams(
                dimension_semantics=("parallel",),
                vmem_limit_bytes=vmem_limit,
            ),
        )(xcat, *weights)
        return jax.block_until_ready(out)

    try:
        out = _call(True)
    except Exception:
        # pipeline_mode=pl.Buffered(1) not available on this jax version: fall back to the
        # default double-buffered weight specs (identical semantics, 2x weight footprint).
        out = _call(False)
    return out[:B]


if __name__ == "__main__":
    B, Sx, H = 2, 8, 32
    num_heads = 4
    mlp_ratio = 4.0

    key = jax.random.PRNGKey(0)
    kx, kc = jax.random.split(key)
    x = jax.random.normal(kx, (B, Sx, H), dtype=jnp.float32)
    cond = jax.random.normal(kc, (B, H), dtype=jnp.float32)    # 2-D cond -> unsqueeze path

    params = init_params(H, num_heads, mlp_ratio, seed=0)

    out = in_context_conditioning_block(x, cond, params, num_heads)
    out = jax.block_until_ready(out)

    assert out.shape == (B, Sx, H), out.shape
    assert bool(jnp.all(jnp.isfinite(out)))
    print("KERNEL_OK")
</pallas_src>

<mosaic_0001>
module attributes {stable_mosaic.version = 11 : i64} {
  func.func @_icc_block_kernel(%arg0: i32, %arg1: memref<2x16x32xf32, #tpu.memory_space<vmem>>, %arg2: memref<1x32xf32, #tpu.memory_space<vmem>>, %arg3: memref<1x32xf32, #tpu.memory_space<vmem>>, %arg4: memref<32x96xbf16, #tpu.memory_space<vmem>>, %arg5: memref<1x96xbf16, #tpu.memory_space<vmem>>, %arg6: memref<32x32xbf16, #tpu.memory_space<vmem>>, %arg7: memref<1x32xf32, #tpu.memory_space<vmem>>, %arg8: memref<1x32xf32, #tpu.memory_space<vmem>>, %arg9: memref<1x32xf32, #tpu.memory_space<vmem>>, %arg10: memref<32x128xbf16, #tpu.memory_space<vmem>>, %arg11: memref<1x128xf32, #tpu.memory_space<vmem>>, %arg12: memref<128x32xbf16, #tpu.memory_space<vmem>>, %arg13: memref<1x32xf32, #tpu.memory_space<vmem>>, %arg14: memref<2x8x32xf32, #tpu.memory_space<vmem>>) attributes {dimension_semantics = [#tpu.dimension_semantics<parallel>], iteration_bounds = array<i64: 1>, scalar_prefetch = 0 : i64, scratch_operands = 0 : i64, tpu.core_type = #tpu.core_type<tc>, window_params = [{transform_indices = @transform_0, window_bounds = array<i64: 2, 16, 32>}, {pipeline_mode = #tpu.pipeline_mode<synchronous>, transform_indices = @transform_1, window_bounds = array<i64: 1, 32>}, {pipeline_mode = #tpu.pipeline_mode<synchronous>, transform_indices = @transform_2, window_bounds = array<i64: 1, 32>}, {pipeline_mode = #tpu.pipeline_mode<synchronous>, transform_indices = @transform_3, window_bounds = array<i64: 32, 96>}, {pipeline_mode = #tpu.pipeline_mode<synchronous>, transform_indices = @transform_4, window_bounds = array<i64: 1, 96>}, {pipeline_mode = #tpu.pipeline_mode<synchronous>, transform_indices = @transform_5, window_bounds = array<i64: 32, 32>}, {pipeline_mode = #tpu.pipeline_mode<synchronous>, transform_indices = @transform_6, window_bounds = array<i64: 1, 32>}, {pipeline_mode = #tpu.pipeline_mode<synchronous>, transform_indices = @transform_7, window_bounds = array<i64: 1, 32>}, {pipeline_mode = #tpu.pipeline_mode<synchronous>, transform_indices = @transform_8, window_bounds = array<i64: 1, 32>}, {pipeline_mode = #tpu.pipeline_mode<synchronous>, transform_indices = @transform_9, window_bounds = array<i64: 32, 128>}, {pipeline_mode = #tpu.pipeline_mode<synchronous>, transform_indices = @transform_10, window_bounds = array<i64: 1, 128>}, {pipeline_mode = #tpu.pipeline_mode<synchronous>, transform_indices = @transform_11, window_bounds = array<i64: 128, 32>}, {pipeline_mode = #tpu.pipeline_mode<synchronous>, transform_indices = @transform_12, window_bounds = array<i64: 1, 32>}, {transform_indices = @transform_13, window_bounds = array<i64: 2, 8, 32>}]} {
    %c0 = arith.constant 0 : index
    %c0_0 = arith.constant 0 : index
    %c0_1 = arith.constant 0 : index
    %0 = vector.load %arg1[%c0, %c0_0, %c0_1] : memref<2x16x32xf32, #tpu.memory_space<vmem>>, vector<2x16x32xf32>
    %1 = vector.shape_cast %0 : vector<2x16x32xf32> to vector<32x32xf32>
    %cst = arith.constant dense<0.000000e+00> : vector<32xf32>
    %2 = vector.multi_reduction <add>, %1, %cst [1] : vector<32x32xf32> to vector<32xf32>
    %3 = vector.shape_cast %2 : vector<32xf32> to vector<32x1xf32>
    %cst_2 = arith.constant 3.200000e+01 : f32
    %4 = vector.broadcast %cst_2 : f32 to vector<32x1xf32>
    %5 = arith.divf %3, %4 : vector<32x1xf32>
    %6 = vector.broadcast %5 : vector<32x1xf32> to vector<32x32xf32>
    %7 = arith.subf %1, %6 : vector<32x32xf32>
    %8 = arith.mulf %7, %7 : vector<32x32xf32>
    %cst_3 = arith.constant dense<0.000000e+00> : vector<32xf32>
    %9 = vector.multi_reduction <add>, %8, %cst_3 [1] : vector<32x32xf32> to vector<32xf32>
    %10 = vector.shape_cast %9 : vector<32xf32> to vector<32x1xf32>
    %cst_4 = arith.constant 3.200000e+01 : f32
    %11 = vector.broadcast %cst_4 : f32 to vector<32x1xf32>
    %12 = arith.divf %10, %11 : vector<32x1xf32>
    %13 = vector.broadcast %5 : vector<32x1xf32> to vector<32x32xf32>
    %14 = arith.subf %1, %13 : vector<32x32xf32>
    %cst_5 = arith.constant 9.99999997E-7 : f32
    %15 = vector.broadcast %cst_5 : f32 to vector<32x1xf32>
    %16 = arith.addf %12, %15 : vector<32x1xf32>
    %17 = math.rsqrt %16 : vector<32x1xf32>
    %18 = vector.broadcast %17 : vector<32x1xf32> to vector<32x32xf32>
    %19 = arith.mulf %14, %18 : vector<32x32xf32>
    %c0_6 = arith.constant 0 : index
    %c0_7 = arith.constant 0 : index
    %20 = vector.load %arg2[%c0_6, %c0_7] : memref<1x32xf32, #tpu.memory_space<vmem>>, vector<1x32xf32>
    %21 = vector.broadcast %20 : vector<1x32xf32> to vector<32x32xf32>
    %22 = arith.mulf %19, %21 : vector<32x32xf32>
    %c0_8 = arith.constant 0 : index
    %c0_9 = arith.constant 0 : index
    %23 = vector.load %arg3[%c0_8, %c0_9] : memref<1x32xf32, #tpu.memory_space<vmem>>, vector<1x32xf32>
    %24 = vector.broadcast %23 : vector<1x32xf32> to vector<32x32xf32>
    %25 = arith.addf %22, %24 : vector<32x32xf32>
    %26 = arith.truncf %25 : vector<32x32xf32> to vector<32x32xbf16>
    %c0_10 = arith.constant 0 : index
    %c0_11 = arith.constant 0 : index
    %27 = vector.load %arg4[%c0_10, %c0_11] : memref<32x96xbf16, #tpu.memory_space<vmem>>, vector<32x96xbf16>
    %cst_12 = arith.constant dense<0.000000e+00> : vector<32x96xf32>
    %28 = tpu.matmul %26, %27, %cst_12 {dimension_numbers = #tpu.dot_dimension_numbers<[1], [0], [0], [1], [0, 0, 1, 1], [], []>} : vector<32x32xbf16>, vector<32x96xbf16>, vector<32x96xf32> -> vector<32x96xf32>
    %29 = arith.truncf %28 : vector<32x96xf32> to vector<32x96xbf16>
    %c0_13 = arith.constant 0 : index
    %c0_14 = arith.constant 0 : index
    %30 = vector.load %arg5[%c0_13, %c0_14] : memref<1x96xbf16, #tpu.memory_space<vmem>>, vector<1x96xbf16>
    %31 = vector.broadcast %30 : vector<1x96xbf16> to vector<32x96xbf16>
    %32 = arith.addf %29, %31 : vector<32x96xbf16>
    %33 = vector.shape_cast %32 : vector<32x96xbf16> to vector<2x16x96xbf16>
    %34 = tpu.iota {dimensions = array<i32: 2>} : vector<1x1x16xi32>
    %c9_i32 = arith.constant 9 : i32
    %35 = vector.broadcast %c9_i32 : i32 to vector<1x1x16xi32>
    %36 = arith.cmpi slt, %34, %35 : vector<1x1x16xi32>
    %cst_15 = arith.constant 0.000000e+00 : f32
    %cst_16 = arith.constant -1.000000e+30 : f32
    %37 = vector.broadcast %cst_15 : f32 to vector<1x1x16xf32>
    %38 = vector.broadcast %cst_16 : f32 to vector<1x1x16xf32>
    %39 = arith.select %36, %37, %38 : vector<1x1x16xi1>, vector<1x1x16xf32>
    %40 = vector.extract_strided_slice %33 {offsets = [0, 0, 0], sizes = [2, 8, 8], strides = [1, 1, 1]} : vector<2x16x96xbf16> to vector<2x8x8xbf16>
    %41 = vector.extract_strided_slice %33 {offsets = [0, 0, 32], sizes = [2, 16, 8], strides = [1, 1, 1]} : vector<2x16x96xbf16> to vector<2x16x8xbf16>
    %42 = vector.extract_strided_slice %33 {offsets = [0, 0, 64], sizes = [2, 16, 8], strides = [1, 1, 1]} : vector<2x16x96xbf16> to vector<2x16x8xbf16>
    "tpu.trace_start"() <{level = 10 : i32, message = "bqd,bkd->bqk"}> : () -> ()
    %cst_17 = arith.constant dense<0.000000e+00> : vector<2x8x16xf32>
    %43 = tpu.matmul %40, %41, %cst_17 {dimension_numbers = #tpu.dot_dimension_numbers<[2], [2], [1], [1], [0, 0, 0, 1, 1, 1], [0], [0]>} : vector<2x8x8xbf16>, vector<2x16x8xbf16>, vector<2x8x16xf32> -> vector<2x8x16xf32>
    "tpu.trace_stop"() : () -> ()
    %44 = vector.broadcast %39 : vector<1x1x16xf32> to vector<2x8x16xf32>
    %45 = arith.addf %43, %44 : vector<2x8x16xf32>
    %cst_18 = arith.constant dense<0xFF800000> : vector<2x8xf32>
    %46 = vector.multi_reduction <maximumf>, %45, %cst_18 [2] : vector<2x8x16xf32> to vector<2x8xf32>
    %47 = vector.shape_cast %46 : vector<2x8xf32> to vector<2x8x1xf32>
    %48 = vector.broadcast %47 : vector<2x8x1xf32> to vector<2x8x16xf32>
    %49 = arith.subf %45, %48 : vector<2x8x16xf32>
    %50 = math.exp %49 : vector<2x8x16xf32>
    %cst_19 = arith.constant dense<0.000000e+00> : vector<2x8xf32>
    %51 = vector.multi_reduction <add>, %50, %cst_19 [2] : vector<2x8x16xf32> to vector<2x8xf32>
    %52 = vector.shape_cast %51 : vector<2x8xf32> to vector<2x8x1xf32>
    %53 = tpu.reciprocal %52 {approx = true} : vector<2x8x1xf32> -> vector<2x8x1xf32>
    %54 = vector.broadcast %53 : vector<2x8x1xf32> to vector<2x8x16xf32>
    %55 = arith.mulf %50, %54 : vector<2x8x16xf32>
    %56 = arith.truncf %55 : vector<2x8x16xf32> to vector<2x8x16xbf16>
    "tpu.trace_start"() <{level = 10 : i32, message = "bqk,bkd->bqd"}> : () -> ()
    %cst_20 = arith.constant dense<0.000000e+00> : vector<2x8x8xf32>
    %57 = tpu.matmul %56, %42, %cst_20 {dimension_numbers = #tpu.dot_dimension_numbers<[2], [1], [1], [2], [0, 0, 0, 1, 1, 2], [0], [0]>} : vector<2x8x16xbf16>, vector<2x16x8xbf16>, vector<2x8x8xf32> -> vector<2x8x8xf32>
    "tpu.trace_stop"() : () -> ()
    %58 = arith.truncf %57 : vector<2x8x8xf32> to vector<2x8x8xbf16>
    %59 = vector.extract_strided_slice %33 {offsets = [0, 0, 8], sizes = [2, 8, 8], strides = [1, 1, 1]} : vector<2x16x96xbf16> to vector<2x8x8xbf16>
    %60 = vector.extract_strided_slice %33 {offsets = [0, 0, 40], sizes = [2, 16, 8], strides = [1, 1, 1]} : vector<2x16x96xbf16> to vector<2x16x8xbf16>
    %61 = vector.extract_strided_slice %33 {offsets = [0, 0, 72], sizes = [2, 16, 8], strides = [1, 1, 1]} : vector<2x16x96xbf16> to vector<2x16x8xbf16>
    "tpu.trace_start"() <{level = 10 : i32, message = "bqd,bkd->bqk"}> : () -> ()
    %cst_21 = arith.constant dense<0.000000e+00> : vector<2x8x16xf32>
    %62 = tpu.matmul %59, %60, %cst_21 {dimension_numbers = #tpu.dot_dimension_numbers<[2], [2], [1], [1], [0, 0, 0, 1, 1, 1], [0], [0]>} : vector<2x8x8xbf16>, vector<2x16x8xbf16>, vector<2x8x16xf32> -> vector<2x8x16xf32>
    "tpu.trace_stop"() : () -> ()
    %63 = vector.broadcast %39 : vector<1x1x16xf32> to vector<2x8x16xf32>
    %64 = arith.addf %62, %63 : vector<2x8x16xf32>
    %cst_22 = arith.constant dense<0xFF800000> : vector<2x8xf32>
    %65 = vector.multi_reduction <maximumf>, %64, %cst_22 [2] : vector<2x8x16xf32> to vector<2x8xf32>
    %66 = vector.shape_cast %65 : vector<2x8xf32> to vector<2x8x1xf32>
    %67 = vector.broadcast %66 : vector<2x8x1xf32> to vector<2x8x16xf32>
    %68 = arith.subf %64, %67 : vector<2x8x16xf32>
    %69 = math.exp %68 : vector<2x8x16xf32>
    %cst_23 = arith.constant dense<0.000000e+00> : vector<2x8xf32>
    %70 = vector.multi_reduction <add>, %69, %cst_23 [2] : vector<2x8x16xf32> to vector<2x8xf32>
    %71 = vector.shape_cast %70 : vector<2x8xf32> to vector<2x8x1xf32>
    %72 = tpu.reciprocal %71 {approx = true} : vector<2x8x1xf32> -> vector<2x8x1xf32>
    %73 = vector.broadcast %72 : vector<2x8x1xf32> to vector<2x8x16xf32>
    %74 = arith.mulf %69, %73 : vector<2x8x16xf32>
    %75 = arith.truncf %74 : vector<2x8x16xf32> to vector<2x8x16xbf16>
    "tpu.trace_start"() <{level = 10 : i32, message = "bqk,bkd->bqd"}> : () -> ()
    %cst_24 = arith.constant dense<0.000000e+00> : vector<2x8x8xf32>
    %76 = tpu.matmul %75, %61, %cst_24 {dimension_numbers = #tpu.dot_dimension_numbers<[2], [1], [1], [2], [0, 0, 0, 1, 1, 2], [0], [0]>} : vector<2x8x16xbf16>, vector<2x16x8xbf16>, vector<2x8x8xf32> -> vector<2x8x8xf32>
    "tpu.trace_stop"() : () -> ()
    %77 = arith.truncf %76 : vector<2x8x8xf32> to vector<2x8x8xbf16>
    %78 = vector.extract_strided_slice %33 {offsets = [0, 0, 16], sizes = [2, 8, 8], strides = [1, 1, 1]} : vector<2x16x96xbf16> to vector<2x8x8xbf16>
    %79 = vector.extract_strided_slice %33 {offsets = [0, 0, 48], sizes = [2, 16, 8], strides = [1, 1, 1]} : vector<2x16x96xbf16> to vector<2x16x8xbf16>
    %80 = vector.extract_strided_slice %33 {offsets = [0, 0, 80], sizes = [2, 16, 8], strides = [1, 1, 1]} : vector<2x16x96xbf16> to vector<2x16x8xbf16>
    "tpu.trace_start"() <{level = 10 : i32, message = "bqd,bkd->bqk"}> : () -> ()
    %cst_25 = arith.constant dense<0.000000e+00> : vector<2x8x16xf32>
    %81 = tpu.matmul %78, %79, %cst_25 {dimension_numbers = #tpu.dot_dimension_numbers<[2], [2], [1], [1], [0, 0, 0, 1, 1, 1], [0], [0]>} : vector<2x8x8xbf16>, vector<2x16x8xbf16>, vector<2x8x16xf32> -> vector<2x8x16xf32>
    "tpu.trace_stop"() : () -> ()
    %82 = vector.broadcast %39 : vector<1x1x16xf32> to vector<2x8x16xf32>
    %83 = arith.addf %81, %82 : vector<2x8x16xf32>
    %cst_26 = arith.constant dense<0xFF800000> : vector<2x8xf32>
    %84 = vector.multi_reduction <maximumf>, %83, %cst_26 [2] : vector<2x8x16xf32> to vector<2x8xf32>
    %85 = vector.shape_cast %84 : vector<2x8xf32> to vector<2x8x1xf32>
    %86 = vector.broadcast %85 : vector<2x8x1xf32> to vector<2x8x16xf32>
    %87 = arith.subf %83, %86 : vector<2x8x16xf32>
    %88 = math.exp %87 : vector<2x8x16xf32>
    %cst_27 = arith.constant dense<0.000000e+00> : vector<2x8xf32>
    %89 = vector.multi_reduction <add>, %88, %cst_27 [2] : vector<2x8x16xf32> to vector<2x8xf32>
    %90 = vector.shape_cast %89 : vector<2x8xf32> to vector<2x8x1xf32>
    %91 = tpu.reciprocal %90 {approx = true} : vector<2x8x1xf32> -> vector<2x8x1xf32>
    %92 = vector.broadcast %91 : vector<2x8x1xf32> to vector<2x8x16xf32>
    %93 = arith.mulf %88, %92 : vector<2x8x16xf32>
    %94 = arith.truncf %93 : vector<2x8x16xf32> to vector<2x8x16xbf16>
    "tpu.trace_start"() <{level = 10 : i32, message = "bqk,bkd->bqd"}> : () -> ()
    %cst_28 = arith.constant dense<0.000000e+00> : vector<2x8x8xf32>
    %95 = tpu.matmul %94, %80, %cst_28 {dimension_numbers = #tpu.dot_dimension_numbers<[2], [1], [1], [2], [0, 0, 0, 1, 1, 2], [0], [0]>} : vector<2x8x16xbf16>, vector<2x16x8xbf16>, vector<2x8x8xf32> -> vector<2x8x8xf32>
    "tpu.trace_stop"() : () -> ()
    %96 = arith.truncf %95 : vector<2x8x8xf32> to vector<2x8x8xbf16>
    %97 = vector.extract_strided_slice %33 {offsets = [0, 0, 24], sizes = [2, 8, 8], strides = [1, 1, 1]} : vector<2x16x96xbf16> to vector<2x8x8xbf16>
    %98 = vector.extract_strided_slice %33 {offsets = [0, 0, 56], sizes = [2, 16, 8], strides = [1, 1, 1]} : vector<2x16x96xbf16> to vector<2x16x8xbf16>
    %99 = vector.extract_strided_slice %33 {offsets = [0, 0, 88], sizes = [2, 16, 8], strides = [1, 1, 1]} : vector<2x16x96xbf16> to vector<2x16x8xbf16>
    "tpu.trace_start"() <{level = 10 : i32, message = "bqd,bkd->bqk"}> : () -> ()
    %cst_29 = arith.constant dense<0.000000e+00> : vector<2x8x16xf32>
    %100 = tpu.matmul %97, %98, %cst_29 {dimension_numbers = #tpu.dot_dimension_numbers<[2], [2], [1], [1], [0, 0, 0, 1, 1, 1], [0], [0]>} : vector<2x8x8xbf16>, vector<2x16x8xbf16>, vector<2x8x16xf32> -> vector<2x8x16xf32>
    "tpu.trace_stop"() : () -> ()
    %101 = vector.broadcast %39 : vector<1x1x16xf32> to vector<2x8x16xf32>
    %102 = arith.addf %100, %101 : vector<2x8x16xf32>
    %cst_30 = arith.constant dense<0xFF800000> : vector<2x8xf32>
    %103 = vector.multi_reduction <maximumf>, %102, %cst_30 [2] : vector<2x8x16xf32> to vector<2x8xf32>
    %104 = vector.shape_cast %103 : vector<2x8xf32> to vector<2x8x1xf32>
    %105 = vector.broadcast %104 : vector<2x8x1xf32> to vector<2x8x16xf32>
    %106 = arith.subf %102, %105 : vector<2x8x16xf32>
    %107 = math.exp %106 : vector<2x8x16xf32>
    %cst_31 = arith.constant dense<0.000000e+00> : vector<2x8xf32>
    %108 = vector.multi_reduction <add>, %107, %cst_31 [2] : vector<2x8x16xf32> to vector<2x8xf32>
    %109 = vector.shape_cast %108 : vector<2x8xf32> to vector<2x8x1xf32>
    %110 = tpu.reciprocal %109 {approx = true} : vector<2x8x1xf32> -> vector<2x8x1xf32>
    %111 = vector.broadcast %110 : vector<2x8x1xf32> to vector<2x8x16xf32>
    %112 = arith.mulf %107, %111 : vector<2x8x16xf32>
    %113 = arith.truncf %112 : vector<2x8x16xf32> to vector<2x8x16xbf16>
    "tpu.trace_start"() <{level = 10 : i32, message = "bqk,bkd->bqd"}> : () -> ()
    %cst_32 = arith.constant dense<0.000000e+00> : vector<2x8x8xf32>
    %114 = tpu.matmul %113, %99, %cst_32 {dimension_numbers = #tpu.dot_dimension_numbers<[2], [1], [1], [2], [0, 0, 0, 1, 1, 2], [0], [0]>} : vector<2x8x16xbf16>, vector<2x16x8xbf16>, vector<2x8x8xf32> -> vector<2x8x8xf32>
    "tpu.trace_stop"() : () -> ()
    %115 = arith.truncf %114 : vector<2x8x8xf32> to vector<2x8x8xbf16>
    %116 = tpu.concatenate %58, %77, %96, %115 in 2 : vector<2x8x8xbf16>, vector<2x8x8xbf16>, vector<2x8x8xbf16>, vector<2x8x8xbf16> -> vector<2x8x32xbf16>
    %117 = vector.shape_cast %116 : vector<2x8x32xbf16> to vector<16x32xbf16>
    %c0_33 = arith.constant 0 : index
    %c0_34 = arith.constant 0 : index
    %118 = vector.load %arg6[%c0_33, %c0_34] : memref<32x32xbf16, #tpu.memory_space<vmem>>, vector<32x32xbf16>
    %cst_35 = arith.constant dense<0.000000e+00> : vector<16x32xf32>
    %119 = tpu.matmul %117, %118, %cst_35 {dimension_numbers = #tpu.dot_dimension_numbers<[1], [0], [0], [1], [0, 0, 1, 1], [], []>} : vector<16x32xbf16>, vector<32x32xbf16>, vector<16x32xf32> -> vector<16x32xf32>
    %c0_36 = arith.constant 0 : index
    %c0_37 = arith.constant 0 : index
    %120 = vector.load %arg7[%c0_36, %c0_37] : memref<1x32xf32, #tpu.memory_space<vmem>>, vector<1x32xf32>
    %121 = vector.broadcast %120 : vector<1x32xf32> to vector<16x32xf32>
    %122 = arith.addf %119, %121 : vector<16x32xf32>
    %123 = vector.extract_strided_slice %0 {offsets = [0, 0, 0], sizes = [2, 8, 32], strides = [1, 1, 1]} : vector<2x16x32xf32> to vector<2x8x32xf32>
    %124 = vector.shape_cast %123 : vector<2x8x32xf32> to vector<16x32xf32>
    %125 = arith.addf %124, %122 : vector<16x32xf32>
    %cst_38 = arith.constant dense<0.000000e+00> : vector<16xf32>
    %126 = vector.multi_reduction <add>, %125, %cst_38 [1] : vector<16x32xf32> to vector<16xf32>
    %127 = vector.shape_cast %126 : vector<16xf32> to vector<16x1xf32>
    %cst_39 = arith.constant 3.200000e+01 : f32
    %128 = vector.broadcast %cst_39 : f32 to vector<16x1xf32>
    %129 = arith.divf %127, %128 : vector<16x1xf32>
    %130 = vector.broadcast %129 : vector<16x1xf32> to vector<16x32xf32>
    %131 = arith.subf %125, %130 : vector<16x32xf32>
    %132 = arith.mulf %131, %131 : vector<16x32xf32>
    %cst_40 = arith.constant dense<0.000000e+00> : vector<16xf32>
    %133 = vector.multi_reduction <add>, %132, %cst_40 [1] : vector<16x32xf32> to vector<16xf32>
    %134 = vector.shape_cast %133 : vector<16xf32> to vector<16x1xf32>
    %cst_41 = arith.constant 3.200000e+01 : f32
    %135 = vector.broadcast %cst_41 : f32 to vector<16x1xf32>
    %136 = arith.divf %134, %135 : vector<16x1xf32>
    %137 = vector.broadcast %129 : vector<16x1xf32> to vector<16x32xf32>
    %138 = arith.subf %125, %137 : vector<16x32xf32>
    %cst_42 = arith.constant 9.99999997E-7 : f32
    %139 = vector.broadcast %cst_42 : f32 to vector<16x1xf32>
    %140 = arith.addf %136, %139 : vector<16x1xf32>
    %141 = math.rsqrt %140 : vector<16x1xf32>
    %142 = vector.broadcast %141 : vector<16x1xf32> to vector<16x32xf32>
    %143 = arith.mulf %138, %142 : vector<16x32xf32>
    %c0_43 = arith.constant 0 : index
    %c0_44 = arith.constant 0 : index
    %144 = vector.load %arg8[%c0_43, %c0_44] : memref<1x32xf32, #tpu.memory_space<vmem>>, vector<1x32xf32>
    %145 = vector.broadcast %144 : vector<1x32xf32> to vector<16x32xf32>
    %146 = arith.mulf %143, %145 : vector<16x32xf32>
    %c0_45 = arith.constant 0 : index
    %c0_46 = arith.constant 0 : index
    %147 = vector.load %arg9[%c0_45, %c0_46] : memref<1x32xf32, #tpu.memory_space<vmem>>, vector<1x32xf32>
    %148 = vector.broadcast %147 : vector<1x32xf32> to vector<16x32xf32>
    %149 = arith.addf %146, %148 : vector<16x32xf32>
    %150 = arith.truncf %149 : vector<16x32xf32> to vector<16x32xbf16>
    %c0_47 = arith.constant 0 : index
    %c0_48 = arith.constant 0 : index
    %151 = vector.load %arg10[%c0_47, %c0_48] : memref<32x128xbf16, #tpu.memory_space<vmem>>, vector<32x128xbf16>
    %cst_49 = arith.constant dense<0.000000e+00> : vector<16x128xf32>
    %152 = tpu.matmul %150, %151, %cst_49 {dimension_numbers = #tpu.dot_dimension_numbers<[1], [0], [0], [1], [0, 0, 1, 1], [], []>} : vector<16x32xbf16>, vector<32x128xbf16>, vector<16x128xf32> -> vector<16x128xf32>
    %c0_50 = arith.constant 0 : index
    %c0_51 = arith.constant 0 : index
    %153 = vector.load %arg11[%c0_50, %c0_51] : memref<1x128xf32, #tpu.memory_space<vmem>>, vector<1x128xf32>
    %154 = vector.broadcast %153 : vector<1x128xf32> to vector<16x128xf32>
    %155 = arith.addf %152, %154 : vector<16x128xf32>
    %cst_52 = arith.constant 5.000000e-01 : f32
    %156 = vector.broadcast %cst_52 : f32 to vector<16x128xf32>
    %157 = arith.mulf %156, %155 : vector<16x128xf32>
    %cst_53 = arith.constant 0.707106769 : f32
    %158 = vector.broadcast %cst_53 : f32 to vector<16x128xf32>
    %159 = arith.mulf %155, %158 : vector<16x128xf32>
    %cst_54 = arith.constant 0.000000e+00 : f32
    %160 = vector.broadcast %cst_54 : f32 to vector<16x128xf32>
    %161 = arith.cmpf oge, %159, %160 : vector<16x128xf32>
    %cst_55 = arith.constant 1.000000e+00 : f32
    %cst_56 = arith.constant -1.000000e+00 : f32
    %162 = vector.broadcast %cst_55 : f32 to vector<16x128xf32>
    %163 = vector.broadcast %cst_56 : f32 to vector<16x128xf32>
    %164 = arith.select %161, %162, %163 : vector<16x128xi1>, vector<16x128xf32>
    %165 = math.absf %159 : vector<16x128xf32>
    %cst_57 = arith.constant 0.327591091 : f32
    %166 = vector.broadcast %cst_57 : f32 to vector<16x128xf32>
    %167 = arith.mulf %166, %165 : vector<16x128xf32>
    %cst_58 = arith.constant 1.000000e+00 : f32
    %168 = vector.broadcast %cst_58 : f32 to vector<16x128xf32>
    %169 = arith.addf %168, %167 : vector<16x128xf32>
    %cst_59 = arith.constant 1.000000e+00 : f32
    %170 = vector.broadcast %cst_59 : f32 to vector<16x128xf32>
    %171 = arith.divf %170, %169 : vector<16x128xf32>
    %cst_60 = arith.constant 1.06140542 : f32
    %172 = vector.broadcast %cst_60 : f32 to vector<16x128xf32>
    %173 = arith.mulf %172, %171 : vector<16x128xf32>
    %cst_61 = arith.constant -1.45315206 : f32
    %174 = vector.broadcast %cst_61 : f32 to vector<16x128xf32>
    %175 = arith.addf %173, %174 : vector<16x128xf32>
    %176 = arith.mulf %175, %171 : vector<16x128xf32>
    %cst_62 = arith.constant 1.42141378 : f32
    %177 = vector.broadcast %cst_62 : f32 to vector<16x128xf32>
    %178 = arith.addf %176, %177 : vector<16x128xf32>
    %179 = arith.mulf %178, %171 : vector<16x128xf32>
    %cst_63 = arith.constant -0.284496725 : f32
    %180 = vector.broadcast %cst_63 : f32 to vector<16x128xf32>
    %181 = arith.addf %179, %180 : vector<16x128xf32>
    %182 = arith.mulf %181, %171 : vector<16x128xf32>
    %cst_64 = arith.constant 0.254829586 : f32
    %183 = vector.broadcast %cst_64 : f32 to vector<16x128xf32>
    %184 = arith.addf %182, %183 : vector<16x128xf32>
    %185 = arith.mulf %184, %171 : vector<16x128xf32>
    %cst_65 = arith.constant 0.000000e+00 : f32
    %186 = vector.broadcast %cst_65 : f32 to vector<16x128xf32>
    %187 = arith.subf %186, %165 : vector<16x128xf32>
    %188 = arith.mulf %187, %165 : vector<16x128xf32>
    %189 = math.exp %188 : vector<16x128xf32>
    %190 = arith.mulf %185, %189 : vector<16x128xf32>
    %cst_66 = arith.constant 1.000000e+00 : f32
    %191 = vector.broadcast %cst_66 : f32 to vector<16x128xf32>
    %192 = arith.subf %191, %190 : vector<16x128xf32>
    %193 = arith.mulf %164, %192 : vector<16x128xf32>
    %cst_67 = arith.constant 1.000000e+00 : f32
    %194 = vector.broadcast %cst_67 : f32 to vector<16x128xf32>
    %195 = arith.addf %194, %193 : vector<16x128xf32>
    %196 = arith.mulf %157, %195 : vector<16x128xf32>
    %197 = arith.truncf %196 : vector<16x128xf32> to vector<16x128xbf16>
    %c0_68 = arith.constant 0 : index
    %c0_69 = arith.constant 0 : index
    %198 = vector.load %arg12[%c0_68, %c0_69] : memref<128x32xbf16, #tpu.memory_space<vmem>>, vector<128x32xbf16>
    %cst_70 = arith.constant dense<0.000000e+00> : vector<16x32xf32>
    %199 = tpu.matmul %197, %198, %cst_70 {dimension_numbers = #tpu.dot_dimension_numbers<[1], [0], [0], [1], [0, 0, 1, 1], [], []>} : vector<16x128xbf16>, vector<128x32xbf16>, vector<16x32xf32> -> vector<16x32xf32>
    %c0_71 = arith.constant 0 : index
    %c0_72 = arith.constant 0 : index
    %200 = vector.load %arg13[%c0_71, %c0_72] : memref<1x32xf32, #tpu.memory_space<vmem>>, vector<1x32xf32>
    %201 = vector.broadcast %200 : vector<1x32xf32> to vector<16x32xf32>
    %202 = arith.addf %199, %201 : vector<16x32xf32>
    %203 = arith.addf %125, %202 : vector<16x32xf32>
    %204 = vector.shape_cast %203 : vector<16x32xf32> to vector<2x8x32xf32>
    %c0_73 = arith.constant 0 : index
    %c0_74 = arith.constant 0 : index
    %c0_75 = arith.constant 0 : index
    %205 = vector.load %arg14[%c0_73, %c0_74, %c0_75] : memref<2x8x32xf32, #tpu.memory_space<vmem>>, vector<2x8x32xf32>
    tpu.vector_store %arg14[%c0_73, %c0_74, %c0_75], %204 {strides = array<i32>} : memref<2x8x32xf32, #tpu.memory_space<vmem>>, vector<2x8x32xf32>,
    return
  }
  func.func @transform_0(%arg0: i32) -> (i32, i32, i32) {
    %c0_i32 = arith.constant 0 : i32
    %c0_i32_0 = arith.constant 0 : i32
    %c0_i32_1 = arith.constant 0 : i32
    return %arg0, %c0_i32, %c0_i32_0 : i32, i32, i32
  }
  func.func @transform_1(%arg0: i32) -> (i32, i32) {
    %c0_i32 = arith.constant 0 : i32
    %c0_i32_0 = arith.constant 0 : i32
    %c0_i32_1 = arith.constant 0 : i32
    return %c0_i32, %c0_i32_0 : i32, i32
  }
  func.func @transform_2(%arg0: i32) -> (i32, i32) {
    %c0_i32 = arith.constant 0 : i32
    %c0_i32_0 = arith.constant 0 : i32
    %c0_i32_1 = arith.constant 0 : i32
    return %c0_i32, %c0_i32_0 : i32, i32
  }
  func.func @transform_3(%arg0: i32) -> (i32, i32) {
    %c0_i32 = arith.constant 0 : i32
    %c0_i32_0 = arith.constant 0 : i32
    %c0_i32_1 = arith.constant 0 : i32
    return %c0_i32, %c0_i32_0 : i32, i32
  }
  func.func @transform_4(%arg0: i32) -> (i32, i32) {
    %c0_i32 = arith.constant 0 : i32
    %c0_i32_0 = arith.constant 0 : i32
    %c0_i32_1 = arith.constant 0 : i32
    return %c0_i32, %c0_i32_0 : i32, i32
  }
  func.func @transform_5(%arg0: i32) -> (i32, i32) {
    %c0_i32 = arith.constant 0 : i32
    %c0_i32_0 = arith.constant 0 : i32
    %c0_i32_1 = arith.constant 0 : i32
    return %c0_i32, %c0_i32_0 : i32, i32
  }
  func.func @transform_6(%arg0: i32) -> (i32, i32) {
    %c0_i32 = arith.constant 0 : i32
    %c0_i32_0 = arith.constant 0 : i32
    %c0_i32_1 = arith.constant 0 : i32
    return %c0_i32, %c0_i32_0 : i32, i32
  }
  func.func @transform_7(%arg0: i32) -> (i32, i32) {
    %c0_i32 = arith.constant 0 : i32
    %c0_i32_0 = arith.constant 0 : i32
    %c0_i32_1 = arith.constant 0 : i32
    return %c0_i32, %c0_i32_0 : i32, i32
  }
  func.func @transform_8(%arg0: i32) -> (i32, i32) {
    %c0_i32 = arith.constant 0 : i32
    %c0_i32_0 = arith.constant 0 : i32
    %c0_i32_1 = arith.constant 0 : i32
    return %c0_i32, %c0_i32_0 : i32, i32
  }
  func.func @transform_9(%arg0: i32) -> (i32, i32) {
    %c0_i32 = arith.constant 0 : i32
    %c0_i32_0 = arith.constant 0 : i32
    %c0_i32_1 = arith.constant 0 : i32
    return %c0_i32, %c0_i32_0 : i32, i32
  }
  func.func @transform_10(%arg0: i32) -> (i32, i32) {
    %c0_i32 = arith.constant 0 : i32
    %c0_i32_0 = arith.constant 0 : i32
    %c0_i32_1 = arith.constant 0 : i32
    return %c0_i32, %c0_i32_0 : i32, i32
  }
  func.func @transform_11(%arg0: i32) -> (i32, i32) {
    %c0_i32 = arith.constant 0 : i32
    %c0_i32_0 = arith.constant 0 : i32
    %c0_i32_1 = arith.constant 0 : i32
    return %c0_i32, %c0_i32_0 : i32, i32
  }
  func.func @transform_12(%arg0: i32) -> (i32, i32) {
    %c0_i32 = arith.constant 0 : i32
    %c0_i32_0 = arith.constant 0 : i32
    %c0_i32_1 = arith.constant 0 : i32
    return %c0_i32, %c0_i32_0 : i32, i32
  }
  func.func @transform_13(%arg0: i32) -> (i32, i32, i32) {
    %c0_i32 = arith.constant 0 : i32
    %c0_i32_0 = arith.constant 0 : i32
    %c0_i32_1 = arith.constant 0 : i32
    return %arg0, %c0_i32, %c0_i32_0 : i32, i32, i32
  }
}

module attributes {stable_mosaic.version = 11 : i64} {
  func.func @_icc_block_kernel(%arg0: i32, %arg1: memref<2x16x32xf32, #tpu.memory_space<vmem>>, %arg2: memref<1x32xf32, #tpu.memory_space<vmem>>, %arg3: memref<1x32xf32, #tpu.memory_space<vmem>>, %arg4: memref<32x96xbf16, #tpu.memory_space<vmem>>, %arg5: memref<1x96xbf16, #tpu.memory_space<vmem>>, %arg6: memref<32x32xbf16, #tpu.memory_space<vmem>>, %arg7: memref<1x32xf32, #tpu.memory_space<vmem>>, %arg8: memref<1x32xf32, #tpu.memory_space<vmem>>, %arg9: memref<1x32xf32, #tpu.memory_space<vmem>>, %arg10: memref<32x128xbf16, #tpu.memory_space<vmem>>, %arg11: memref<1x128xf32, #tpu.memory_space<vmem>>, %arg12: memref<128x32xbf16, #tpu.memory_space<vmem>>, %arg13: memref<1x32xf32, #tpu.memory_space<vmem>>, %arg14: memref<2x8x32xf32, #tpu.memory_space<vmem>>) attributes {dimension_semantics = [#tpu.dimension_semantics<parallel>], iteration_bounds = array<i64: 1>, scalar_prefetch = 0 : i64, scratch_operands = 0 : i64, tpu.core_type = #tpu.core_type<tc>, window_params = [{transform_indices = @transform_0, window_bounds = array<i64: 2, 16, 32>}, {pipeline_mode = #tpu.pipeline_mode<synchronous>, transform_indices = @transform_1, window_bounds = array<i64: 1, 32>}, {pipeline_mode = #tpu.pipeline_mode<synchronous>, transform_indices = @transform_2, window_bounds = array<i64: 1, 32>}, {pipeline_mode = #tpu.pipeline_mode<synchronous>, transform_indices = @transform_3, window_bounds = array<i64: 32, 96>}, {pipeline_mode = #tpu.pipeline_mode<synchronous>, transform_indices = @transform_4, window_bounds = array<i64: 1, 96>}, {pipeline_mode = #tpu.pipeline_mode<synchronous>, transform_indices = @transform_5, window_bounds = array<i64: 32, 32>}, {pipeline_mode = #tpu.pipeline_mode<synchronous>, transform_indices = @transform_6, window_bounds = array<i64: 1, 32>}, {pipeline_mode = #tpu.pipeline_mode<synchronous>, transform_indices = @transform_7, window_bounds = array<i64: 1, 32>}, {pipeline_mode = #tpu.pipeline_mode<synchronous>, transform_indices = @transform_8, window_bounds = array<i64: 1, 32>}, {pipeline_mode = #tpu.pipeline_mode<synchronous>, transform_indices = @transform_9, window_bounds = array<i64: 32, 128>}, {pipeline_mode = #tpu.pipeline_mode<synchronous>, transform_indices = @transform_10, window_bounds = array<i64: 1, 128>}, {pipeline_mode = #tpu.pipeline_mode<synchronous>, transform_indices = @transform_11, window_bounds = array<i64: 128, 32>}, {pipeline_mode = #tpu.pipeline_mode<synchronous>, transform_indices = @transform_12, window_bounds = array<i64: 1, 32>}, {transform_indices = @transform_13, window_bounds = array<i64: 2, 8, 32>}]} {
    %c0 = arith.constant 0 : index
    %c0_0 = arith.constant 0 : index
    %c0_1 = arith.constant 0 : index
    %0 = vector.load %arg1[%c0, %c0_0, %c0_1] : memref<2x16x32xf32, #tpu.memory_space<vmem>>, vector<2x16x32xf32>
    %1 = vector.shape_cast %0 : vector<2x16x32xf32> to vector<32x32xf32>
    %cst = arith.constant dense<0.000000e+00> : vector<32xf32>
    %2 = vector.multi_reduction <add>, %1, %cst [1] : vector<32x32xf32> to vector<32xf32>
    %3 = vector.shape_cast %2 : vector<32xf32> to vector<32x1xf32>
    %cst_2 = arith.constant 3.200000e+01 : f32
    %4 = vector.broadcast %cst_2 : f32 to vector<32x1xf32>
    %5 = arith.divf %3, %4 : vector<32x1xf32>
    %6 = vector.broadcast %5 : vector<32x1xf32> to vector<32x32xf32>
    %7 = arith.subf %1, %6 : vector<32x32xf32>
    %8 = arith.mulf %7, %7 : vector<32x32xf32>
    %cst_3 = arith.constant dense<0.000000e+00> : vector<32xf32>
    %9 = vector.multi_reduction <add>, %8, %cst_3 [1] : vector<32x32xf32> to vector<32xf32>
    %10 = vector.shape_cast %9 : vector<32xf32> to vector<32x1xf32>
    %cst_4 = arith.constant 3.200000e+01 : f32
    %11 = vector.broadcast %cst_4 : f32 to vector<32x1xf32>
    %12 = arith.divf %10, %11 : vector<32x1xf32>
    %13 = vector.broadcast %5 : vector<32x1xf32> to vector<32x32xf32>
    %14 = arith.subf %1, %13 : vector<32x32xf32>
    %cst_5 = arith.constant 9.99999997E-7 : f32
    %15 = vector.broadcast %cst_5 : f32 to vector<32x1xf32>
    %16 = arith.addf %12, %15 : vector<32x1xf32>
    %17 = math.rsqrt %16 : vector<32x1xf32>
    %18 = vector.broadcast %17 : vector<32x1xf32> to vector<32x32xf32>
    %19 = arith.mulf %14, %18 : vector<32x32xf32>
    %c0_6 = arith.constant 0 : index
    %c0_7 = arith.constant 0 : index
    %20 = vector.load %arg2[%c0_6, %c0_7] : memref<1x32xf32, #tpu.memory_space<vmem>>, vector<1x32xf32>
    %21 = vector.broadcast %20 : vector<1x32xf32> to vector<32x32xf32>
    %22 = arith.mulf %19, %21 : vector<32x32xf32>
    %c0_8 = arith.constant 0 : index
    %c0_9 = arith.constant 0 : index
    %23 = vector.load %arg3[%c0_8, %c0_9] : memref<1x32xf32, #tpu.memory_space<vmem>>, vector<1x32xf32>
    %24 = vector.broadcast %23 : vector<1x32xf32> to vector<32x32xf32>
    %25 = arith.addf %22, %24 : vector<32x32xf32>
    %26 = arith.truncf %25 : vector<32x32xf32> to vector<32x32xbf16>
    %c0_10 = arith.constant 0 : index
    %c0_11 = arith.constant 0 : index
    %27 = vector.load %arg4[%c0_10, %c0_11] : memref<32x96xbf16, #tpu.memory_space<vmem>>, vector<32x96xbf16>
    %cst_12 = arith.constant dense<0.000000e+00> : vector<32x96xf32>
    %28 = tpu.matmul %26, %27, %cst_12 {dimension_numbers = #tpu.dot_dimension_numbers<[1], [0], [0], [1], [0, 0, 1, 1], [], []>} : vector<32x32xbf16>, vector<32x96xbf16>, vector<32x96xf32> -> vector<32x96xf32>
    %29 = arith.truncf %28 : vector<32x96xf32> to vector<32x96xbf16>
    %c0_13 = arith.constant 0 : index
    %c0_14 = arith.constant 0 : index
    %30 = vector.load %arg5[%c0_13, %c0_14] : memref<1x96xbf16, #tpu.memory_space<vmem>>, vector<1x96xbf16>
    %31 = vector.broadcast %30 : vector<1x96xbf16> to vector<32x96xbf16>
    %32 = arith.addf %29, %31 : vector<32x96xbf16>
    %33 = vector.shape_cast %32 : vector<32x96xbf16> to vector<2x16x96xbf16>
    %34 = tpu.iota {dimensions = array<i32: 2>} : vector<1x1x16xi32>
    %c9_i32 = arith.constant 9 : i32
    %35 = vector.broadcast %c9_i32 : i32 to vector<1x1x16xi32>
    %36 = arith.cmpi slt, %34, %35 : vector<1x1x16xi32>
    %cst_15 = arith.constant 0.000000e+00 : f32
    %cst_16 = arith.constant -1.000000e+30 : f32
    %37 = vector.broadcast %cst_15 : f32 to vector<1x1x16xf32>
    %38 = vector.broadcast %cst_16 : f32 to vector<1x1x16xf32>
    %39 = arith.select %36, %37, %38 : vector<1x1x16xi1>, vector<1x1x16xf32>
    %40 = vector.extract_strided_slice %33 {offsets = [0, 0, 0], sizes = [2, 8, 8], strides = [1, 1, 1]} : vector<2x16x96xbf16> to vector<2x8x8xbf16>
    %41 = vector.extract_strided_slice %33 {offsets = [0, 0, 32], sizes = [2, 16, 8], strides = [1, 1, 1]} : vector<2x16x96xbf16> to vector<2x16x8xbf16>
    %42 = vector.extract_strided_slice %33 {offsets = [0, 0, 64], sizes = [2, 16, 8], strides = [1, 1, 1]} : vector<2x16x96xbf16> to vector<2x16x8xbf16>
    "tpu.trace_start"() <{level = 10 : i32, message = "bqd,bkd->bqk"}> : () -> ()
    %cst_17 = arith.constant dense<0.000000e+00> : vector<2x8x16xf32>
    %43 = tpu.matmul %40, %41, %cst_17 {dimension_numbers = #tpu.dot_dimension_numbers<[2], [2], [1], [1], [0, 0, 0, 1, 1, 1], [0], [0]>} : vector<2x8x8xbf16>, vector<2x16x8xbf16>, vector<2x8x16xf32> -> vector<2x8x16xf32>
    "tpu.trace_stop"() : () -> ()
    %44 = vector.broadcast %39 : vector<1x1x16xf32> to vector<2x8x16xf32>
    %45 = arith.addf %43, %44 : vector<2x8x16xf32>
    %cst_18 = arith.constant dense<0xFF800000> : vector<2x8xf32>
    %46 = vector.multi_reduction <maximumf>, %45, %cst_18 [2] : vector<2x8x16xf32> to vector<2x8xf32>
    %47 = vector.shape_cast %46 : vector<2x8xf32> to vector<2x8x1xf32>
    %48 = vector.broadcast %47 : vector<2x8x1xf32> to vector<2x8x16xf32>
    %49 = arith.subf %45, %48 : vector<2x8x16xf32>
    %50 = math.exp %49 : vector<2x8x16xf32>
    %cst_19 = arith.constant dense<0.000000e+00> : vector<2x8xf32>
    %51 = vector.multi_reduction <add>, %50, %cst_19 [2] : vector<2x8x16xf32> to vector<2x8xf32>
    %52 = vector.shape_cast %51 : vector<2x8xf32> to vector<2x8x1xf32>
    %53 = tpu.reciprocal %52 {approx = true} : vector<2x8x1xf32> -> vector<2x8x1xf32>
    %54 = vector.broadcast %53 : vector<2x8x1xf32> to vector<2x8x16xf32>
    %55 = arith.mulf %50, %54 : vector<2x8x16xf32>
    %56 = arith.truncf %55 : vector<2x8x16xf32> to vector<2x8x16xbf16>
    "tpu.trace_start"() <{level = 10 : i32, message = "bqk,bkd->bqd"}> : () -> ()
    %cst_20 = arith.constant dense<0.000000e+00> : vector<2x8x8xf32>
    %57 = tpu.matmul %56, %42, %cst_20 {dimension_numbers = #tpu.dot_dimension_numbers<[2], [1], [1], [2], [0, 0, 0, 1, 1, 2], [0], [0]>} : vector<2x8x16xbf16>, vector<2x16x8xbf16>, vector<2x8x8xf32> -> vector<2x8x8xf32>
    "tpu.trace_stop"() : () -> ()
    %58 = arith.truncf %57 : vector<2x8x8xf32> to vector<2x8x8xbf16>
    %59 = vector.extract_strided_slice %33 {offsets = [0, 0, 8], sizes = [2, 8, 8], strides = [1, 1, 1]} : vector<2x16x96xbf16> to vector<2x8x8xbf16>
    %60 = vector.extract_strided_slice %33 {offsets = [0, 0, 40], sizes = [2, 16, 8], strides = [1, 1, 1]} : vector<2x16x96xbf16> to vector<2x16x8xbf16>
    %61 = vector.extract_strided_slice %33 {offsets = [0, 0, 72], sizes = [2, 16, 8], strides = [1, 1, 1]} : vector<2x16x96xbf16> to vector<2x16x8xbf16>
    "tpu.trace_start"() <{level = 10 : i32, message = "bqd,bkd->bqk"}> : () -> ()
    %cst_21 = arith.constant dense<0.000000e+00> : vector<2x8x16xf32>
    %62 = tpu.matmul %59, %60, %cst_21 {dimension_numbers = #tpu.dot_dimension_numbers<[2], [2], [1], [1], [0, 0, 0, 1, 1, 1], [0], [0]>} : vector<2x8x8xbf16>, vector<2x16x8xbf16>, vector<2x8x16xf32> -> vector<2x8x16xf32>
    "tpu.trace_stop"() : () -> ()
    %63 = vector.broadcast %39 : vector<1x1x16xf32> to vector<2x8x16xf32>
    %64 = arith.addf %62, %63 : vector<2x8x16xf32>
    %cst_22 = arith.constant dense<0xFF800000> : vector<2x8xf32>
    %65 = vector.multi_reduction <maximumf>, %64, %cst_22 [2] : vector<2x8x16xf32> to vector<2x8xf32>
    %66 = vector.shape_cast %65 : vector<2x8xf32> to vector<2x8x1xf32>
    %67 = vector.broadcast %66 : vector<2x8x1xf32> to vector<2x8x16xf32>
    %68 = arith.subf %64, %67 : vector<2x8x16xf32>
    %69 = math.exp %68 : vector<2x8x16xf32>
    %cst_23 = arith.constant dense<0.000000e+00> : vector<2x8xf32>
    %70 = vector.multi_reduction <add>, %69, %cst_23 [2] : vector<2x8x16xf32> to vector<2x8xf32>
    %71 = vector.shape_cast %70 : vector<2x8xf32> to vector<2x8x1xf32>
    %72 = tpu.reciprocal %71 {approx = true} : vector<2x8x1xf32> -> vector<2x8x1xf32>
    %73 = vector.broadcast %72 : vector<2x8x1xf32> to vector<2x8x16xf32>
    %74 = arith.mulf %69, %73 : vector<2x8x16xf32>
    %75 = arith.truncf %74 : vector<2x8x16xf32> to vector<2x8x16xbf16>
    "tpu.trace_start"() <{level = 10 : i32, message = "bqk,bkd->bqd"}> : () -> ()
    %cst_24 = arith.constant dense<0.000000e+00> : vector<2x8x8xf32>
    %76 = tpu.matmul %75, %61, %cst_24 {dimension_numbers = #tpu.dot_dimension_numbers<[2], [1], [1], [2], [0, 0, 0, 1, 1, 2], [0], [0]>} : vector<2x8x16xbf16>, vector<2x16x8xbf16>, vector<2x8x8xf32> -> vector<2x8x8xf32>
    "tpu.trace_stop"() : () -> ()
    %77 = arith.truncf %76 : vector<2x8x8xf32> to vector<2x8x8xbf16>
    %78 = vector.extract_strided_slice %33 {offsets = [0, 0, 16], sizes = [2, 8, 8], strides = [1, 1, 1]} : vector<2x16x96xbf16> to vector<2x8x8xbf16>
    %79 = vector.extract_strided_slice %33 {offsets = [0, 0, 48], sizes = [2, 16, 8], strides = [1, 1, 1]} : vector<2x16x96xbf16> to vector<2x16x8xbf16>
    %80 = vector.extract_strided_slice %33 {offsets = [0, 0, 80], sizes = [2, 16, 8], strides = [1, 1, 1]} : vector<2x16x96xbf16> to vector<2x16x8xbf16>
    "tpu.trace_start"() <{level = 10 : i32, message = "bqd,bkd->bqk"}> : () -> ()
    %cst_25 = arith.constant dense<0.000000e+00> : vector<2x8x16xf32>
    %81 = tpu.matmul %78, %79, %cst_25 {dimension_numbers = #tpu.dot_dimension_numbers<[2], [2], [1], [1], [0, 0, 0, 1, 1, 1], [0], [0]>} : vector<2x8x8xbf16>, vector<2x16x8xbf16>, vector<2x8x16xf32> -> vector<2x8x16xf32>
    "tpu.trace_stop"() : () -> ()
    %82 = vector.broadcast %39 : vector<1x1x16xf32> to vector<2x8x16xf32>
    %83 = arith.addf %81, %82 : vector<2x8x16xf32>
    %cst_26 = arith.constant dense<0xFF800000> : vector<2x8xf32>
    %84 = vector.multi_reduction <maximumf>, %83, %cst_26 [2] : vector<2x8x16xf32> to vector<2x8xf32>
    %85 = vector.shape_cast %84 : vector<2x8xf32> to vector<2x8x1xf32>
    %86 = vector.broadcast %85 : vector<2x8x1xf32> to vector<2x8x16xf32>
    %87 = arith.subf %83, %86 : vector<2x8x16xf32>
    %88 = math.exp %87 : vector<2x8x16xf32>
    %cst_27 = arith.constant dense<0.000000e+00> : vector<2x8xf32>
    %89 = vector.multi_reduction <add>, %88, %cst_27 [2] : vector<2x8x16xf32> to vector<2x8xf32>
    %90 = vector.shape_cast %89 : vector<2x8xf32> to vector<2x8x1xf32>
    %91 = tpu.reciprocal %90 {approx = true} : vector<2x8x1xf32> -> vector<2x8x1xf32>
    %92 = vector.broadcast %91 : vector<2x8x1xf32> to vector<2x8x16xf32>
    %93 = arith.mulf %88, %92 : vector<2x8x16xf32>
    %94 = arith.truncf %93 : vector<2x8x16xf32> to vector<2x8x16xbf16>
    "tpu.trace_start"() <{level = 10 : i32, message = "bqk,bkd->bqd"}> : () -> ()
    %cst_28 = arith.constant dense<0.000000e+00> : vector<2x8x8xf32>
    %95 = tpu.matmul %94, %80, %cst_28 {dimension_numbers = #tpu.dot_dimension_numbers<[2], [1], [1], [2], [0, 0, 0, 1, 1, 2], [0], [0]>} : vector<2x8x16xbf16>, vector<2x16x8xbf16>, vector<2x8x8xf32> -> vector<2x8x8xf32>
    "tpu.trace_stop"() : () -> ()
    %96 = arith.truncf %95 : vector<2x8x8xf32> to vector<2x8x8xbf16>
    %97 = vector.extract_strided_slice %33 {offsets = [0, 0, 24], sizes = [2, 8, 8], strides = [1, 1, 1]} : vector<2x16x96xbf16> to vector<2x8x8xbf16>
    %98 = vector.extract_strided_slice %33 {offsets = [0, 0, 56], sizes = [2, 16, 8], strides = [1, 1, 1]} : vector<2x16x96xbf16> to vector<2x16x8xbf16>
    %99 = vector.extract_strided_slice %33 {offsets = [0, 0, 88], sizes = [2, 16, 8], strides = [1, 1, 1]} : vector<2x16x96xbf16> to vector<2x16x8xbf16>
    "tpu.trace_start"() <{level = 10 : i32, message = "bqd,bkd->bqk"}> : () -> ()
    %cst_29 = arith.constant dense<0.000000e+00> : vector<2x8x16xf32>
    %100 = tpu.matmul %97, %98, %cst_29 {dimension_numbers = #tpu.dot_dimension_numbers<[2], [2], [1], [1], [0, 0, 0, 1, 1, 1], [0], [0]>} : vector<2x8x8xbf16>, vector<2x16x8xbf16>, vector<2x8x16xf32> -> vector<2x8x16xf32>
    "tpu.trace_stop"() : () -> ()
    %101 = vector.broadcast %39 : vector<1x1x16xf32> to vector<2x8x16xf32>
    %102 = arith.addf %100, %101 : vector<2x8x16xf32>
    %cst_30 = arith.constant dense<0xFF800000> : vector<2x8xf32>
    %103 = vector.multi_reduction <maximumf>, %102, %cst_30 [2] : vector<2x8x16xf32> to vector<2x8xf32>
    %104 = vector.shape_cast %103 : vector<2x8xf32> to vector<2x8x1xf32>
    %105 = vector.broadcast %104 : vector<2x8x1xf32> to vector<2x8x16xf32>
    %106 = arith.subf %102, %105 : vector<2x8x16xf32>
    %107 = math.exp %106 : vector<2x8x16xf32>
    %cst_31 = arith.constant dense<0.000000e+00> : vector<2x8xf32>
    %108 = vector.multi_reduction <add>, %107, %cst_31 [2] : vector<2x8x16xf32> to vector<2x8xf32>
    %109 = vector.shape_cast %108 : vector<2x8xf32> to vector<2x8x1xf32>
    %110 = tpu.reciprocal %109 {approx = true} : vector<2x8x1xf32> -> vector<2x8x1xf32>
    %111 = vector.broadcast %110 : vector<2x8x1xf32> to vector<2x8x16xf32>
    %112 = arith.mulf %107, %111 : vector<2x8x16xf32>
    %113 = arith.truncf %112 : vector<2x8x16xf32> to vector<2x8x16xbf16>
    "tpu.trace_start"() <{level = 10 : i32, message = "bqk,bkd->bqd"}> : () -> ()
    %cst_32 = arith.constant dense<0.000000e+00> : vector<2x8x8xf32>
    %114 = tpu.matmul %113, %99, %cst_32 {dimension_numbers = #tpu.dot_dimension_numbers<[2], [1], [1], [2], [0, 0, 0, 1, 1, 2], [0], [0]>} : vector<2x8x16xbf16>, vector<2x16x8xbf16>, vector<2x8x8xf32> -> vector<2x8x8xf32>
    "tpu.trace_stop"() : () -> ()
    %115 = arith.truncf %114 : vector<2x8x8xf32> to vector<2x8x8xbf16>
    %116 = tpu.concatenate %58, %77, %96, %115 in 2 : vector<2x8x8xbf16>, vector<2x8x8xbf16>, vector<2x8x8xbf16>, vector<2x8x8xbf16> -> vector<2x8x32xbf16>
    %117 = vector.shape_cast %116 : vector<2x8x32xbf16> to vector<16x32xbf16>
    %c0_33 = arith.constant 0 : index
    %c0_34 = arith.constant 0 : index
    %118 = vector.load %arg6[%c0_33, %c0_34] : memref<32x32xbf16, #tpu.memory_space<vmem>>, vector<32x32xbf16>
    %cst_35 = arith.constant dense<0.000000e+00> : vector<16x32xf32>
    %119 = tpu.matmul %117, %118, %cst_35 {dimension_numbers = #tpu.dot_dimension_numbers<[1], [0], [0], [1], [0, 0, 1, 1], [], []>} : vector<16x32xbf16>, vector<32x32xbf16>, vector<16x32xf32> -> vector<16x32xf32>
    %c0_36 = arith.constant 0 : index
    %c0_37 = arith.constant 0 : index
    %120 = vector.load %arg7[%c0_36, %c0_37] : memref<1x32xf32, #tpu.memory_space<vmem>>, vector<1x32xf32>
    %121 = vector.broadcast %120 : vector<1x32xf32> to vector<16x32xf32>
    %122 = arith.addf %119, %121 : vector<16x32xf32>
    %123 = vector.extract_strided_slice %0 {offsets = [0, 0, 0], sizes = [2, 8, 32], strides = [1, 1, 1]} : vector<2x16x32xf32> to vector<2x8x32xf32>
    %124 = vector.shape_cast %123 : vector<2x8x32xf32> to vector<16x32xf32>
    %125 = arith.addf %124, %122 : vector<16x32xf32>
    %cst_38 = arith.constant dense<0.000000e+00> : vector<16xf32>
    %126 = vector.multi_reduction <add>, %125, %cst_38 [1] : vector<16x32xf32> to vector<16xf32>
    %127 = vector.shape_cast %126 : vector<16xf32> to vector<16x1xf32>
    %cst_39 = arith.constant 3.200000e+01 : f32
    %128 = vector.broadcast %cst_39 : f32 to vector<16x1xf32>
    %129 = arith.divf %127, %128 : vector<16x1xf32>
    %130 = vector.broadcast %129 : vector<16x1xf32> to vector<16x32xf32>
    %131 = arith.subf %125, %130 : vector<16x32xf32>
    %132 = arith.mulf %131, %131 : vector<16x32xf32>
    %cst_40 = arith.constant dense<0.000000e+00> : vector<16xf32>
    %133 = vector.multi_reduction <add>, %132, %cst_40 [1] : vector<16x32xf32> to vector<16xf32>
    %134 = vector.shape_cast %133 : vector<16xf32> to vector<16x1xf32>
    %cst_41 = arith.constant 3.200000e+01 : f32
    %135 = vector.broadcast %cst_41 : f32 to vector<16x1xf32>
    %136 = arith.divf %134, %135 : vector<16x1xf32>
    %137 = vector.broadcast %129 : vector<16x1xf32> to vector<16x32xf32>
    %138 = arith.subf %125, %137 : vector<16x32xf32>
    %cst_42 = arith.constant 9.99999997E-7 : f32
    %139 = vector.broadcast %cst_42 : f32 to vector<16x1xf32>
    %140 = arith.addf %136, %139 : vector<16x1xf32>
    %141 = math.rsqrt %140 : vector<16x1xf32>
    %142 = vector.broadcast %141 : vector<16x1xf32> to vector<16x32xf32>
    %143 = arith.mulf %138, %142 : vector<16x32xf32>
    %c0_43 = arith.constant 0 : index
    %c0_44 = arith.constant 0 : index
    %144 = vector.load %arg8[%c0_43, %c0_44] : memref<1x32xf32, #tpu.memory_space<vmem>>, vector<1x32xf32>
    %145 = vector.broadcast %144 : vector<1x32xf32> to vector<16x32xf32>
    %146 = arith.mulf %143, %145 : vector<16x32xf32>
    %c0_45 = arith.constant 0 : index
    %c0_46 = arith.constant 0 : index
    %147 = vector.load %arg9[%c0_45, %c0_46] : memref<1x32xf32, #tpu.memory_space<vmem>>, vector<1x32xf32>
    %148 = vector.broadcast %147 : vector<1x32xf32> to vector<16x32xf32>
    %149 = arith.addf %146, %148 : vector<16x32xf32>
    %150 = arith.truncf %149 : vector<16x32xf32> to vector<16x32xbf16>
    %c0_47 = arith.constant 0 : index
    %c0_48 = arith.constant 0 : index
    %151 = vector.load %arg10[%c0_47, %c0_48] : memref<32x128xbf16, #tpu.memory_space<vmem>>, vector<32x128xbf16>
    %cst_49 = arith.constant dense<0.000000e+00> : vector<16x128xf32>
    %152 = tpu.matmul %150, %151, %cst_49 {dimension_numbers = #tpu.dot_dimension_numbers<[1], [0], [0], [1], [0, 0, 1, 1], [], []>} : vector<16x32xbf16>, vector<32x128xbf16>, vector<16x128xf32> -> vector<16x128xf32>
    %c0_50 = arith.constant 0 : index
    %c0_51 = arith.constant 0 : index
    %153 = vector.load %arg11[%c0_50, %c0_51] : memref<1x128xf32, #tpu.memory_space<vmem>>, vector<1x128xf32>
    %154 = vector.broadcast %153 : vector<1x128xf32> to vector<16x128xf32>
    %155 = arith.addf %152, %154 : vector<16x128xf32>
    %cst_52 = arith.constant 5.000000e-01 : f32
    %156 = vector.broadcast %cst_52 : f32 to vector<16x128xf32>
    %157 = arith.mulf %156, %155 : vector<16x128xf32>
    %cst_53 = arith.constant 0.707106769 : f32
    %158 = vector.broadcast %cst_53 : f32 to vector<16x128xf32>
    %159 = arith.mulf %155, %158 : vector<16x128xf32>
    %cst_54 = arith.constant 0.000000e+00 : f32
    %160 = vector.broadcast %cst_54 : f32 to vector<16x128xf32>
    %161 = arith.cmpf oge, %159, %160 : vector<16x128xf32>
    %cst_55 = arith.constant 1.000000e+00 : f32
    %cst_56 = arith.constant -1.000000e+00 : f32
    %162 = vector.broadcast %cst_55 : f32 to vector<16x128xf32>
    %163 = vector.broadcast %cst_56 : f32 to vector<16x128xf32>
    %164 = arith.select %161, %162, %163 : vector<16x128xi1>, vector<16x128xf32>
    %165 = math.absf %159 : vector<16x128xf32>
    %cst_57 = arith.constant 0.327591091 : f32
    %166 = vector.broadcast %cst_57 : f32 to vector<16x128xf32>
    %167 = arith.mulf %166, %165 : vector<16x128xf32>
    %cst_58 = arith.constant 1.000000e+00 : f32
    %168 = vector.broadcast %cst_58 : f32 to vector<16x128xf32>
    %169 = arith.addf %168, %167 : vector<16x128xf32>
    %cst_59 = arith.constant 1.000000e+00 : f32
    %170 = vector.broadcast %cst_59 : f32 to vector<16x128xf32>
    %171 = arith.divf %170, %169 : vector<16x128xf32>
    %cst_60 = arith.constant 1.06140542 : f32
    %172 = vector.broadcast %cst_60 : f32 to vector<16x128xf32>
    %173 = arith.mulf %172, %171 : vector<16x128xf32>
    %cst_61 = arith.constant -1.45315206 : f32
    %174 = vector.broadcast %cst_61 : f32 to vector<16x128xf32>
    %175 = arith.addf %173, %174 : vector<16x128xf32>
    %176 = arith.mulf %175, %171 : vector<16x128xf32>
    %cst_62 = arith.constant 1.42141378 : f32
    %177 = vector.broadcast %cst_62 : f32 to vector<16x128xf32>
    %178 = arith.addf %176, %177 : vector<16x128xf32>
    %179 = arith.mulf %178, %171 : vector<16x128xf32>
    %cst_63 = arith.constant -0.284496725 : f32
    %180 = vector.broadcast %cst_63 : f32 to vector<16x128xf32>
    %181 = arith.addf %179, %180 : vector<16x128xf32>
    %182 = arith.mulf %181, %171 : vector<16x128xf32>
    %cst_64 = arith.constant 0.254829586 : f32
    %183 = vector.broadcast %cst_64 : f32 to vector<16x128xf32>
    %184 = arith.addf %182, %183 : vector<16x128xf32>
    %185 = arith.mulf %184, %171 : vector<16x128xf32>
    %cst_65 = arith.constant 0.000000e+00 : f32
    %186 = vector.broadcast %cst_65 : f32 to vector<16x128xf32>
    %187 = arith.subf %186, %165 : vector<16x128xf32>
    %188 = arith.mulf %187, %165 : vector<16x128xf32>
    %189 = math.exp %188 : vector<16x128xf32>
    %190 = arith.mulf %185, %189 : vector<16x128xf32>
    %cst_66 = arith.constant 1.000000e+00 : f32
    %191 = vector.broadcast %cst_66 : f32 to vector<16x128xf32>
    %192 = arith.subf %191, %190 : vector<16x128xf32>
    %193 = arith.mulf %164, %192 : vector<16x128xf32>
    %cst_67 = arith.constant 1.000000e+00 : f32
    %194 = vector.broadcast %cst_67 : f32 to vector<16x128xf32>
    %195 = arith.addf %194, %193 : vector<16x128xf32>
    %196 = arith.mulf %157, %195 : vector<16x128xf32>
    %197 = arith.truncf %196 : vector<16x128xf32> to vector<16x128xbf16>
    %c0_68 = arith.constant 0 : index
    %c0_69 = arith.constant 0 : index
    %198 = vector.load %arg12[%c0_68, %c0_69] : memref<128x32xbf16, #tpu.memory_space<vmem>>, vector<128x32xbf16>
    %cst_70 = arith.constant dense<0.000000e+00> : vector<16x32xf32>
    %199 = tpu.matmul %197, %198, %cst_70 {dimension_numbers = #tpu.dot_dimension_numbers<[1], [0], [0], [1], [0, 0, 1, 1], [], []>} : vector<16x128xbf16>, vector<128x32xbf16>, vector<16x32xf32> -> vector<16x32xf32>
    %c0_71 = arith.constant 0 : index
    %c0_72 = arith.constant 0 : index
    %200 = vector.load %arg13[%c0_71, %c0_72] : memref<1x32xf32, #tpu.memory_space<vmem>>, vector<1x32xf32>
    %201 = vector.broadcast %200 : vector<1x32xf32> to vector<16x32xf32>
    %202 = arith.addf %199, %201 : vector<16x32xf32>
    %203 = arith.addf %125, %202 : vector<16x32xf32>
    %204 = vector.shape_cast %203 : vector<16x32xf32> to vector<2x8x32xf32>
    %c0_73 = arith.constant 0 : index
    %c0_74 = arith.constant 0 : index
    %c0_75 = arith.constant 0 : index
    %205 = vector.load %arg14[%c0_73, %c0_74, %c0_75] : memref<2x8x32xf32, #tpu.memory_space<vmem>>, vector<2x8x32xf32>
    tpu.vector_store %arg14[%c0_73, %c0_74, %c0_75], %204 {strides = array<i32>} : memref<2x8x32xf32, #tpu.memory_space<vmem>>, vector<2x8x32xf32>,
    return
  }
  func.func @transform_0(%arg0: i32) -> (i32, i32, i32) {
    %c0_i32 = arith.constant 0 : i32
    %c0_i32_0 = arith.constant 0 : i32
    %c0_i32_1 = arith.constant 0 : i32
    return %arg0, %c0_i32, %c0_i32_0 : i32, i32, i32
  }
  func.func @transform_1(%arg0: i32) -> (i32, i32) {
    %c0_i32 = arith.constant 0 : i32
    %c0_i32_0 = arith.constant 0 : i32
    %c0_i32_1 = arith.constant 0 : i32
    return %c0_i32, %c0_i32_0 : i32, i32
  }
  func.func @transform_2(%arg0: i32) -> (i32, i32) {
    %c0_i32 = arith.constant 0 : i32
    %c0_i32_0 = arith.constant 0 : i32
    %c0_i32_1 = arith.constant 0 : i32
    return %c0_i32, %c0_i32_0 : i32, i32
  }
  func.func @transform_3(%arg0: i32) -> (i32, i32) {
    %c0_i32 = arith.constant 0 : i32
    %c0_i32_0 = arith.constant 0 : i32
    %c0_i32_1 = arith.constant 0 : i32
    return %c0_i32, %c0_i32_0 : i32, i32
  }
  func.func @transform_4(%arg0: i32) -> (i32, i32) {
    %c0_i32 = arith.constant 0 : i32
    %c0_i32_0 = arith.constant 0 : i32
    %c0_i32_1 = arith.constant 0 : i32
    return %c0_i32, %c0_i32_0 : i32, i32
  }
  func.func @transform_5(%arg0: i32) -> (i32, i32) {
    %c0_i32 = arith.constant 0 : i32
    %c0_i32_0 = arith.constant 0 : i32
    %c0_i32_1 = arith.constant 0 : i32
    return %c0_i32, %c0_i32_0 : i32, i32
  }
  func.func @transform_6(%arg0: i32) -> (i32, i32) {
    %c0_i32 = arith.constant 0 : i32
    %c0_i32_0 = arith.constant 0 : i32
    %c0_i32_1 = arith.constant 0 : i32
    return %c0_i32, %c0_i32_0 : i32, i32
  }
  func.func @transform_7(%arg0: i32) -> (i32, i32) {
    %c0_i32 = arith.constant 0 : i32
    %c0_i32_0 = arith.constant 0 : i32
    %c0_i32_1 = arith.constant 0 : i32
    return %c0_i32, %c0_i32_0 : i32, i32
  }
  func.func @transform_8(%arg0: i32) -> (i32, i32) {
    %c0_i32 = arith.constant 0 : i32
    %c0_i32_0 = arith.constant 0 : i32
    %c0_i32_1 = arith.constant 0 : i32
    return %c0_i32, %c0_i32_0 : i32, i32
  }
  func.func @transform_9(%arg0: i32) -> (i32, i32) {
    %c0_i32 = arith.constant 0 : i32
    %c0_i32_0 = arith.constant 0 : i32
    %c0_i32_1 = arith.constant 0 : i32
    return %c0_i32, %c0_i32_0 : i32, i32
  }
  func.func @transform_10(%arg0: i32) -> (i32, i32) {
    %c0_i32 = arith.constant 0 : i32
    %c0_i32_0 = arith.constant 0 : i32
    %c0_i32_1 = arith.constant 0 : i32
    return %c0_i32, %c0_i32_0 : i32, i32
  }
  func.func @transform_11(%arg0: i32) -> (i32, i32) {
    %c0_i32 = arith.constant 0 : i32
    %c0_i32_0 = arith.constant 0 : i32
    %c0_i32_1 = arith.constant 0 : i32
    return %c0_i32, %c0_i32_0 : i32, i32
  }
  func.func @transform_12(%arg0: i32) -> (i32, i32) {
    %c0_i32 = arith.constant 0 : i32
    %c0_i32_0 = arith.constant 0 : i32
    %c0_i32_1 = arith.constant 0 : i32
    return %c0_i32, %c0_i32_0 : i32, i32
  }
  func.func @transform_13(%arg0: i32) -> (i32, i32, i32) {
    %c0_i32 = arith.constant 0 : i32
    %c0_i32_0 = arith.constant 0 : i32
    %c0_i32_1 = arith.constant 0 : i32
    return %arg0, %c0_i32, %c0_i32_0 : i32, i32, i32
  }
}

</mosaic_0001>

<llo_original>
// kernel: tpu_custom_call.1
$region0: #{tpu_custom_call.1}
  #allocation0 [shape = 'u32[]', space=smem, size = 0x4, offset = 0x4, fixed_abs, tag = 'smem constant byte address 0x4 - core index']
  #allocation1 [shape = 'u32[144,128]{1,0:T(1,128)}', space=vmem, size = 0x12000, scoped, tag = 'internal scratch']
  %s0 = inlined_call_operand.vmem [shape: f32[2,16,32], index: 0, kind: input, shape index: {}]
  %s1 = inlined_call_operand.vmem [shape: f32[1,32], index: 1, kind: input, shape index: {}]
  %s2 = inlined_call_operand.vmem [shape: f32[1,32], index: 2, kind: input, shape index: {}]
  %s3 = inlined_call_operand.vmem [shape: bf16[32,96], index: 3, kind: input, shape index: {}]
  %s4 = inlined_call_operand.vmem [shape: bf16[1,96], index: 4, kind: input, shape index: {}]
  %s5 = inlined_call_operand.vmem [shape: bf16[32,32], index: 5, kind: input, shape index: {}]
  %s6 = inlined_call_operand.vmem [shape: f32[1,32], index: 6, kind: input, shape index: {}]
  %s7 = inlined_call_operand.vmem [shape: f32[1,32], index: 7, kind: input, shape index: {}]
  %s8 = inlined_call_operand.vmem [shape: f32[1,32], index: 8, kind: input, shape index: {}]
  %s9 = inlined_call_operand.vmem [shape: bf16[32,128], index: 9, kind: input, shape index: {}]
  %s10 = inlined_call_operand.vmem [shape: f32[1,128], index: 10, kind: input, shape index: {}]
  %s11 = inlined_call_operand.vmem [shape: bf16[128,32], index: 11, kind: input, shape index: {}]
  %s12 = inlined_call_operand.vmem [shape: f32[1,32], index: 12, kind: input, shape index: {}]
  %s13 = inlined_call_operand.hbm [shape: f32[2,8,32], index: 13, kind: output, shape index: {}]
  %s14 = sld [smem:[#allocation0]]
  $region62: #{tpu_custom_call.1} parent=0
    _
  %s16 = ssub.s32 1, %s14
  %s17 = scalar_select 0, %s16, %s14
  $region1: #{tpu_custom_call.1} parent=0
    #allocation2 [shape = 'u8[8192]{0}', space=vmem, size = 0x2000, scoped, tag = 'output window, operand 0, single buffered']
    #allocation3 [shape = 's32[1]{0}', space=sflag, size = 0x4, scoped, tag = 'scoped memory for tpu_custom_call.1']
    %18 = vsyncpa [#allocation3], 0
    // Predicated region
    $region2: #{tpu_custom_call.1} parent=1 // pred_check
      _
    $region3: #{tpu_custom_call.1} parent=1 // pred_check_branch
      %20 = sbr.rel (0) target = $region5
    $region4: #{tpu_custom_call.1} parent=1 // pred_region
      _
    $region5: #{tpu_custom_call.1} parent=1 // pred_fallthru
      _
    // Predicated region
    $region6: #{tpu_custom_call.1} parent=1 // pred_check
      _
    $region7: #{tpu_custom_call.1} parent=1 // pred_check_branch
      %22 = sbr.rel (0) target = $region9
    $region8: #{tpu_custom_call.1} parent=1 // pred_region
      _
    $region9: #{tpu_custom_call.1} parent=1 // pred_fallthru
      _
    // Predicated region
    $region10: #{tpu_custom_call.1} parent=1 // pred_check
      _
    $region11: #{tpu_custom_call.1} parent=1 // pred_check_branch
      %24 = sbr.rel (0) target = $region13
    $region12: #{tpu_custom_call.1} parent=1 // pred_region
      _
    $region13: #{tpu_custom_call.1} parent=1 // pred_fallthru
      _
    // Predicated region
    $region14: #{tpu_custom_call.1} parent=1 // pred_check
      _
    $region15: #{tpu_custom_call.1} parent=1 // pred_check_branch
      %26 = sbr.rel (0) target = $region17
    $region16: #{tpu_custom_call.1} parent=1 // pred_region
      _
    $region17: #{tpu_custom_call.1} parent=1 // pred_fallthru
      _
    // Predicated region
    $region18: #{tpu_custom_call.1} parent=1 // pred_check
      _
    $region19: #{tpu_custom_call.1} parent=1 // pred_check_branch
      %28 = sbr.rel (0) target = $region21
    $region20: #{tpu_custom_call.1} parent=1 // pred_region
      _
    $region21: #{tpu_custom_call.1} parent=1 // pred_fallthru
      _
    // Predicated region
    $region22: #{tpu_custom_call.1} parent=1 // pred_check
      _
    $region23: #{tpu_custom_call.1} parent=1 // pred_check_branch
      %30 = sbr.rel (0) target = $region25
    $region24: #{tpu_custom_call.1} parent=1 // pred_region
      _
    $region25: #{tpu_custom_call.1} parent=1 // pred_fallthru
      _
    // Predicated region
    $region26: #{tpu_custom_call.1} parent=1 // pred_check
      _
    $region27: #{tpu_custom_call.1} parent=1 // pred_check_branch
      %32 = sbr.rel (0) target = $region29
    $region28: #{tpu_custom_call.1} parent=1 // pred_region
      _
    $region29: #{tpu_custom_call.1} parent=1 // pred_fallthru
      _
    // Predicated region
    $region30: #{tpu_custom_call.1} parent=1 // pred_check
      _
    $region31: #{tpu_custom_call.1} parent=1 // pred_check_branch
      %34 = sbr.rel (0) target = $region33
    $region32: #{tpu_custom_call.1} parent=1 // pred_region
      _
    $region33: #{tpu_custom_call.1} parent=1 // pred_fallthru
      _
    // Predicated region
    $region34: #{tpu_custom_call.1} parent=1 // pred_check
      _
    $region35: #{tpu_custom_call.1} parent=1 // pred_check_branch
      %36 = sbr.rel (0) target = $region37
    $region36: #{tpu_custom_call.1} parent=1 // pred_region
      _
    $region37: #{tpu_custom_call.1} parent=1 // pred_fallthru
      _
    // Predicated region
    $region38: #{tpu_custom_call.1} parent=1 // pred_check
      _
    $region39: #{tpu_custom_call.1} parent=1 // pred_check_branch
      %38 = sbr.rel (0) target = $region41
    $region40: #{tpu_custom_call.1} parent=1 // pred_region
      _
    $region41: #{tpu_custom_call.1} parent=1 // pred_fallthru
      _
    // Predicated region
    $region42: #{tpu_custom_call.1} parent=1 // pred_check
      _
    $region43: #{tpu_custom_call.1} parent=1 // pred_check_branch
      %40 = sbr.rel (0) target = $region45
    $region44: #{tpu_custom_call.1} parent=1 // pred_region
      _
    $region45: #{tpu_custom_call.1} parent=1 // pred_fallthru
      _
    // Predicated region
    $region46: #{tpu_custom_call.1} parent=1 // pred_check
      _
    $region47: #{tpu_custom_call.1} parent=1 // pred_check_branch
      %42 = sbr.rel (0) target = $region49
    $region48: #{tpu_custom_call.1} parent=1 // pred_region
      _
    $region49: #{tpu_custom_call.1} parent=1 // pred_fallthru
      _
    // Predicated region
    $region50: #{tpu_custom_call.1} parent=1 // pred_check
      _
    $region51: #{tpu_custom_call.1} parent=1 // pred_check_branch
      %44 = sbr.rel (0) target = $region53
    $region52: #{tpu_custom_call.1} parent=1 // pred_region
      _
    $region53: #{tpu_custom_call.1} parent=1 // pred_fallthru
      _
    %v46 = vld [vmem:[%s0] sm:$0xff]
    %v47 = vld [vmem:[%s0 + $0x8] sm:$0xff]
    %v48 = vld [vmem:[%s0 + $0x10] sm:$0xff]
    %v49 = vld [vmem:[%s0 + $0x18] sm:$0xff]
    %vm50 = vcmask 261120
    %v51 = vsel %vm50, %v46, 0.0
    %52 = vadd.xlane.f32.xlu0 %v51
    %v53 = vpop.xlane.xlu0 %52
    %v54 = vsel %vm50, %v47, 0.0
    %55 = vadd.xlane.f32.xlu0 %v54
    %v56 = vpop.xlane.xlu0 %55
    %v57 = vsel %vm50, %v48, 0.0
    %58 = vadd.xlane.f32.xlu0 %v57
    %v59 = vpop.xlane.xlu0 %58
    %v60 = vsel %vm50, %v49, 0.0
    %61 = vadd.xlane.f32.xlu0 %v60
    %v62 = vpop.xlane.xlu0 %61
    %v63 = vrcp.pop 32.0
    %v64 = vmul.f32 %v53, %v63
    %v65 = vmul.f32 %v56, %v63
    %v66 = vmul.f32 %v59, %v63
    %v67 = vmul.f32 %v62, %v63
    %v68 = vsub.f32 %v46, %v64
    %v69 = vsub.f32 %v47, %v65
    %v70 = vsub.f32 %v48, %v66
    %v71 = vsub.f32 %v49, %v67
    %v72 = vmul.f32 %v68, %v68
    %v73 = vmul.f32 %v69, %v69
    %v74 = vmul.f32 %v70, %v70
    %v75 = vmul.f32 %v71, %v71
    %v76 = vsel %vm50, %v72, 0.0
    %77 = vadd.xlane.f32.xlu0 %v76
    %v78 = vpop.xlane.xlu0 %77
    %v79 = vsel %vm50, %v73, 0.0
    %80 = vadd.xlane.f32.xlu0 %v79
    %v81 = vpop.xlane.xlu0 %80
    %v82 = vsel %vm50, %v74, 0.0
    %83 = vadd.xlane.f32.xlu0 %v82
    %v84 = vpop.xlane.xlu0 %83
    %v85 = vsel %vm50, %v75, 0.0
    %86 = vadd.xlane.f32.xlu0 %v85
    %v87 = vpop.xlane.xlu0 %86
    %v88 = vmul.f32 %v78, %v63
    %v89 = vmul.f32 %v81, %v63
    %v90 = vmul.f32 %v84, %v63
    %v91 = vmul.f32 %v87, %v63
    %v92 = vadd.f32 %v88, 1e-06
    %v93 = vadd.f32 %v89, 1e-06
    %v94 = vadd.f32 %v90, 1e-06
    %v95 = vadd.f32 %v91, 1e-06
    %v96 = vrsqrt.pop %v92
    %v97 = vrsqrt.pop %v93
    %v98 = vrsqrt.pop %v94
    %v99 = vrsqrt.pop %v95
    %v100 = vmul.f32 %v68, %v96
    %v101 = vmul.f32 %v69, %v97
    %v102 = vmul.f32 %v70, %v98
    %v103 = vmul.f32 %v71, %v99
    %v104 = vld [vmem:[%s1] sm:$0x1]
    %v106 = vlaneseq
    %v107 = vshrl.u32 %v106, 7
    %v108 = vsub.s32 0, %v107
    %v109 = vrot.slane %v104, %v108
    %v111 = vmul.f32 %v100, %v109
    %v112 = vmul.f32 %v101, %v109
    %v113 = vmul.f32 %v102, %v109
    %v114 = vmul.f32 %v103, %v109
    %v115 = vld [vmem:[%s2] sm:$0x1]
    %v117 = vlaneseq
    %v118 = vshrl.u32 %v117, 7
    %v119 = vsub.s32 0, %v118
    %v120 = vrot.slane %v115, %v119
    %v122 = vadd.f32 %v111, %v120
    %v123 = vadd.f32 %v112, %v120
    %v124 = vadd.f32 %v113, %v120
    %v125 = vadd.f32 %v114, %v120
    %v126 = vpack.c.bf16 %v123, %v122
    %v127 = vpack.c.bf16 %v125, %v124
    %v128 = vld [vmem:[%s3] sm:$0xf]
    %v129 = vld [vmem:[%s3 + $0x4] sm:$0xf]
    %v130 = vld [vmem:[%s3 + $0x8] sm:$0xf]
    %v131 = vld [vmem:[%s3 + $0xc] sm:$0xf]
    %v136 = vunpack.c.l.b16 %v128
    %v137 = vunpack.c.l.b16 %v129
    %v138 = vunpack.c.l.b16 %v130
    %v139 = vunpack.c.l.b16 %v131
    %v140 = vpack.c.b16 %v137, %v136
    %v141 = vpack.c.b16 %v139, %v138
    %v145 = vsel %vm50, %v126, 0
    %v148 = vsel %vm50, %v127, 0
    %150 = vmatprep.subr.bf16.mxu0 0
    %151 = vmatpush1.bf16.msra.mxu0 %v140
    %152 = vmatprep.subr.bf16.mxu0 0
    %153 = vmatpush1.bf16.msra.mxu0 %v141
    %154 = vmatprep.subr.bf16.mxu0 0
    %155 = vmatpush1.bf16.msra.mxu0 0
    %156 = vmatprep.subr.bf16.mxu0 0
    %157 = vmatpush1.bf16.msra.mxu0 0
    %158 = vmatprep.subr.bf16.mxu0 0
    %159 = vmatpush1.bf16.msra.mxu0 0
    %160 = vmatprep.subr.bf16.mxu0 0
    %161 = vmatpush1.bf16.msra.mxu0 0
    %162 = vmatprep.subr.bf16.mxu0 0
    %163 = vmatpush1.bf16.msra.mxu0 0
    %164 = vmatprep.subr.bf16.mxu0 0
    %165 = vmatpush1.bf16.msra.mxu0 0
    %166 = vmatprep.subr.bf16.mxu0 0
    %167 = vmatpush1.bf16.msra.mxu0 0
    %168 = vmatprep.subr.bf16.mxu0 0
    %169 = vmatpush1.bf16.msra.mxu0 0
    %170 = vmatprep.subr.bf16.mxu0 0
    %171 = vmatpush1.bf16.msra.mxu0 0
    %172 = vmatprep.subr.bf16.mxu0 0
    %173 = vmatpush1.bf16.msra.mxu0 0
    %174 = vmatprep.subr.bf16.mxu0 0
    %175 = vmatpush1.bf16.msra.mxu0 0
    %176 = vmatprep.subr.bf16.mxu0 0
    %177 = vmatpush1.bf16.msra.mxu0 0
    %178 = vmatprep.subr.bf16.mxu0 0
    %179 = vmatpush1.bf16.msra.mxu0 0
    %180 = vmatprep.subr.bf16.mxu0 0
    %181 = vmatpush1.bf16.msra.mxu0 0
    %182 = vmatprep.mubr.bf16.mxu0 0
    %183 = vmatmul.mubr.bf16.gmra.mrb[0].mxu0 %v145
    %v184 = vpop.f32.mrb[0].mxu0
    %v185 = vadd.f32 0.0, %v184
    %v186 = vpop.f32.mrb[0].mxu0
    %v187 = vpop.f32.mrb[0].mxu0
    %v188 = vadd.f32 0.0, %v187
    %v189 = vpop.f32.mrb[0].mxu0
    %190 = vmatprep.mubr.bf16.mxu0 0
    %191 = vmatmul.mubr.bf16.gmra.mrb[0].mxu0 %v148
    %v192 = vpop.f32.mrb[0].mxu0
    %v193 = vadd.f32 0.0, %v192
    %v194 = vpop.f32.mrb[0].mxu0
    %v195 = vpop.f32.mrb[0].mxu0
    %v196 = vadd.f32 0.0, %v195
    %v197 = vpop.f32.mrb[0].mxu0
    %198 = vdwg.mxu0
    %v199 = vpack.c.bf16 %v188, %v185
    %v200 = vpack.c.bf16 %v196, %v193
    %v201 = vld [vmem:[%s4] sm:$0x1]
    %v203 = vpack.i.b16 %v201, %v201
    %v205 = vlaneseq
    %v206 = vshrl.u32 %v205, 7
    %v207 = vsub.s32 0, %v206
    %v208 = vrot.slane %v203, %v207
    %v209 = vadd.bf16 %v199, %v208
    %v210 = vadd.bf16 %v200, %v208
    %v211 = vlaneseq
    %v212 = vand.u32 %v211, 127
    %vm213 = vcmp.lt.s32.totalorder %v212, 9
    %v214 = vsel %vm213, 0.0, -1e+30
    %216 = vrot.lane.b32.xlu0 %v209, 96
    %v217 = vpop.permute.xlu0 %216
    %vm218 = vcmask 64512
    %v220 = vsel %vm218, %v209, 0
    %v223 = vsel %vm218, %v217, 0
    %225 = vmatprep.subr.bf16.mxu0 0
    %226 = vmatpush1.bf16.xpose.msra.mxu0 %v223
    %227 = vmatprep.subr.bf16.mxu0 0
    %228 = vmatpush1.bf16.xpose.msra.mxu0 0
    %229 = vmatprep.subr.bf16.mxu0 0
    %230 = vmatpush1.bf16.xpose.msra.mxu0 0
    %231 = vmatprep.subr.bf16.mxu0 0
    %232 = vmatpush1.bf16.xpose.msra.mxu0 0
    %233 = vmatprep.subr.bf16.mxu0 0
    %234 = vmatpush1.bf16.xpose.msra.mxu0 0
    %235 = vmatprep.subr.bf16.mxu0 0
    %236 = vmatpush1.bf16.xpose.msra.mxu0 0
    %237 = vmatprep.subr.bf16.mxu0 0
    %238 = vmatpush1.bf16.xpose.msra.mxu0 0
    %239 = vmatprep.subr.bf16.mxu0 0
    %240 = vmatpush1.bf16.xpose.msra.mxu0 0
    %241 = vmatprep.subr.bf16.mxu0 0
    %242 = vmatpush1.bf16.xpose.msra.mxu0 0
    %243 = vmatprep.subr.bf16.mxu0 0
    %244 = vmatpush1.bf16.xpose.msra.mxu0 0
    %245 = vmatprep.subr.bf16.mxu0 0
    %246 = vmatpush1.bf16.xpose.msra.mxu0 0
    %247 = vmatprep.subr.bf16.mxu0 0
    %248 = vmatpush1.bf16.xpose.msra.mxu0 0
    %249 = vmatprep.subr.bf16.mxu0 0
    %250 = vmatpush1.bf16.xpose.msra.mxu0 0
    %251 = vmatprep.subr.bf16.mxu0 0
    %252 = vmatpush1.bf16.xpose.msra.mxu0 0
    %253 = vmatprep.subr.bf16.mxu0 0
    %254 = vmatpush1.bf16.xpose.msra.mxu0 0
    %255 = vmatprep.subr.bf16.mxu0 0
    %256 = vmatpush1.bf16.xpose.msra.mxu0 0
    %257 = vmatprep.mubr.bf16.mxu0 0
    %258 = vmatmul.mubr.bf16.gmra.mrb[0].mxu0 %v220
    %v259 = vpop.f32.mrb[0].mxu0
    %v260 = vadd.f32 %v214, %v259
    %v261 = vpop.f32.mrb[0].mxu0
    %v262 = vpop.f32.mrb[0].mxu0
    %v263 = vpop.f32.mrb[0].mxu0
    %264 = vdwg.mxu0
    %266 = vrot.lane.b32.xlu0 %v210, 96
    %v267 = vpop.permute.xlu0 %266
    %v269 = vsel %vm218, %v210, 0
    %v272 = vsel %vm218, %v267, 0
    %274 = vmatprep.subr.bf16.mxu0 0
    %275 = vmatpush1.bf16.xpose.msra.mxu0 %v272
    %276 = vmatprep.subr.bf16.mxu0 0
    %277 = vmatpush1.bf16.xpose.msra.mxu0 0
    %278 = vmatprep.subr.bf16.mxu0 0
    %279 = vmatpush1.bf16.xpose.msra.mxu0 0
    %280 = vmatprep.subr.bf16.mxu0 0
    %281 = vmatpush1.bf16.xpose.msra.mxu0 0
    %282 = vmatprep.subr.bf16.mxu0 0
    %283 = vmatpush1.bf16.xpose.msra.mxu0 0
    %284 = vmatprep.subr.bf16.mxu0 0
    %285 = vmatpush1.bf16.xpose.msra.mxu0 0
    %286 = vmatprep.subr.bf16.mxu0 0
    %287 = vmatpush1.bf16.xpose.msra.mxu0 0
    %288 = vmatprep.subr.bf16.mxu0 0
    %289 = vmatpush1.bf16.xpose.msra.mxu0 0
    %290 = vmatprep.subr.bf16.mxu0 0
    %291 = vmatpush1.bf16.xpose.msra.mxu0 0
    %292 = vmatprep.subr.bf16.mxu0 0
    %293 = vmatpush1.bf16.xpose.msra.mxu0 0
    %294 = vmatprep.subr.bf16.mxu0 0
    %295 = vmatpush1.bf16.xpose.msra.mxu0 0
    %296 = vmatprep.subr.bf16.mxu0 0
    %297 = vmatpush1.bf16.xpose.msra.mxu0 0
    %298 = vmatprep.subr.bf16.mxu0 0
    %299 = vmatpush1.bf16.xpose.msra.mxu0 0
    %300 = vmatprep.subr.bf16.mxu0 0
    %301 = vmatpush1.bf16.xpose.msra.mxu0 0
    %302 = vmatprep.subr.bf16.mxu0 0
    %303 = vmatpush1.bf16.xpose.msra.mxu0 0
    %304 = vmatprep.subr.bf16.mxu0 0
    %305 = vmatpush1.bf16.xpose.msra.mxu0 0
    %306 = vmatprep.mubr.bf16.mxu0 0
    %307 = vmatmul.mubr.bf16.gmra.mrb[0].mxu0 %v269
    %v308 = vpop.f32.mrb[0].mxu0
    %v309 = vadd.f32 %v214, %v308
    %v310 = vpop.f32.mrb[0].mxu0
    %v311 = vpop.f32.mrb[0].mxu0
    %v312 = vpop.f32.mrb[0].mxu0
    %313 = vdwg.mxu0
    %vm314 = vcmask 130048
    %v315 = vsel %vm314, %v260, -inf
    %316 = vmax.xlane.f32.xlu0 %v315
    %v317 = vpop.xlane.xlu0 %316
    %v318 = vsel %vm314, %v309, -inf
    %319 = vmax.xlane.f32.xlu0 %v318
    %v320 = vpop.xlane.xlu0 %319
    %v321 = vsub.f32 %v260, %v317
    %v322 = vsub.f32 %v309, %v320
    %v323 = vmul.f32 %v321, 1.442695
    %v324 = vpow.pop %v323
    %v325 = vmul.f32 %v322, 1.442695
    %v326 = vpow.pop %v325
    %v327 = vsel %vm314, %v324, 0.0
    %328 = vadd.xlane.f32.xlu0 %v327
    %v329 = vpop.xlane.xlu0 %328
    %v330 = vsel %vm314, %v326, 0.0
    %331 = vadd.xlane.f32.xlu0 %v330
    %v332 = vpop.xlane.xlu0 %331
    %v333 = vrcp.pop %v329
    %v334 = vrcp.pop %v332
    %v335 = vmul.f32 %v324, %v333
    %v336 = vmul.f32 %v326, %v334
    %v337 = vpack.c.bf16 %v335, %v335
    %v338 = vpack.c.bf16 %v336, %v336
    %339 = vrot.lane.b32.xlu0 %v209, 64
    %v340 = vpop.permute.xlu0 %339
    %v343 = vsel %vm314, %v337, 0
    %345 = vmatprep.subr.bf16.mxu0 0
    %346 = vmatpush1.bf16.msra.mxu0 %v340
    %347 = vmatprep.subr.bf16.mxu0 0
    %348 = vmatpush1.bf16.msra.mxu0 0
    %349 = vmatprep.subr.bf16.mxu0 0
    %350 = vmatpush1.bf16.msra.mxu0 0
    %351 = vmatprep.subr.bf16.mxu0 0
    %352 = vmatpush1.bf16.msra.mxu0 0
    %353 = vmatprep.subr.bf16.mxu0 0
    %354 = vmatpush1.bf16.msra.mxu0 0
    %355 = vmatprep.subr.bf16.mxu0 0
    %356 = vmatpush1.bf16.msra.mxu0 0
    %357 = vmatprep.subr.bf16.mxu0 0
    %358 = vmatpush1.bf16.msra.mxu0 0
    %359 = vmatprep.subr.bf16.mxu0 0
    %360 = vmatpush1.bf16.msra.mxu0 0
    %361 = vmatprep.subr.bf16.mxu0 0
    %362 = vmatpush1.bf16.msra.mxu0 0
    %363 = vmatprep.subr.bf16.mxu0 0
    %364 = vmatpush1.bf16.msra.mxu0 0
    %365 = vmatprep.subr.bf16.mxu0 0
    %366 = vmatpush1.bf16.msra.mxu0 0
    %367 = vmatprep.subr.bf16.mxu0 0
    %368 = vmatpush1.bf16.msra.mxu0 0
    %369 = vmatprep.subr.bf16.mxu0 0
    %370 = vmatpush1.bf16.msra.mxu0 0
    %371 = vmatprep.subr.bf16.mxu0 0
    %372 = vmatpush1.bf16.msra.mxu0 0
    %373 = vmatprep.subr.bf16.mxu0 0
    %374 = vmatpush1.bf16.msra.mxu0 0
    %375 = vmatprep.subr.bf16.mxu0 0
    %376 = vmatpush1.bf16.msra.mxu0 0
    %377 = vmatprep.mubr.bf16.mxu0 0
    %378 = vmatmul.mubr.bf16.gmra.mrb[0].mxu0 %v343
    %v379 = vpop.f32.mrb[0].mxu0
    %v380 = vadd.f32 0.0, %v379
    %v381 = vpop.f32.mrb[0].mxu0
    %v382 = vpop.f32.mrb[0].mxu0
    %v383 = vpop.f32.mrb[0].mxu0
    %384 = vdwg.mxu0
    %385 = vrot.lane.b32.xlu0 %v210, 64
    %v386 = vpop.permute.xlu0 %385
    %v389 = vsel %vm314, %v338, 0
    %391 = vmatprep.subr.bf16.mxu0 0
    %392 = vmatpush1.bf16.msra.mxu0 %v386
    %393 = vmatprep.subr.bf16.mxu0 0
    %394 = vmatpush1.bf16.msra.mxu0 0
    %395 = vmatprep.subr.bf16.mxu0 0
    %396 = vmatpush1.bf16.msra.mxu0 0
    %397 = vmatprep.subr.bf16.mxu0 0
    %398 = vmatpush1.bf16.msra.mxu0 0
    %399 = vmatprep.subr.bf16.mxu0 0
    %400 = vmatpush1.bf16.msra.mxu0 0
    %401 = vmatprep.subr.bf16.mxu0 0
    %402 = vmatpush1.bf16.msra.mxu0 0
    %403 = vmatprep.subr.bf16.mxu0 0
    %404 = vmatpush1.bf16.msra.mxu0 0
    %405 = vmatprep.subr.bf16.mxu0 0
    %406 = vmatpush1.bf16.msra.mxu0 0
    %407 = vmatprep.subr.bf16.mxu0 0
    %408 = vmatpush1.bf16.msra.mxu0 0
    %409 = vmatprep.subr.bf16.mxu0 0
    %410 = vmatpush1.bf16.msra.mxu0 0
    %411 = vmatprep.subr.bf16.mxu0 0
    %412 = vmatpush1.bf16.msra.mxu0 0
    %413 = vmatprep.subr.bf16.mxu0 0
    %414 = vmatpush1.bf16.msra.mxu0 0
    %415 = vmatprep.subr.bf16.mxu0 0
    %416 = vmatpush1.bf16.msra.mxu0 0
    %417 = vmatprep.subr.bf16.mxu0 0
    %418 = vmatpush1.bf16.msra.mxu0 0
    %419 = vmatprep.subr.bf16.mxu0 0
    %420 = vmatpush1.bf16.msra.mxu0 0
    %421 = vmatprep.subr.bf16.mxu0 0
    %422 = vmatpush1.bf16.msra.mxu0 0
    %423 = vmatprep.mubr.bf16.mxu0 0
    %424 = vmatmul.mubr.bf16.gmra.mrb[0].mxu0 %v389
    %v425 = vpop.f32.mrb[0].mxu0
    %v426 = vadd.f32 0.0, %v425
    %v427 = vpop.f32.mrb[0].mxu0
    %v428 = vpop.f32.mrb[0].mxu0
    %v429 = vpop.f32.mrb[0].mxu0
    %430 = vdwg.mxu0
    %v431 = vpack.c.bf16 %v380, %v380
    %v432 = vpack.c.bf16 %v426, %v426
    %433 = vrot.lane.b32.xlu0 %v209, 120
    %v434 = vpop.permute.xlu0 %433
    %435 = vrot.lane.b32.xlu0 %v209, 88
    %v436 = vpop.permute.xlu0 %435
    %v438 = vsel %vm218, %v434, 0
    %v441 = vsel %vm218, %v436, 0
    %443 = vmatprep.subr.bf16.mxu0 0
    %444 = vmatpush1.bf16.xpose.msra.mxu0 %v441
    %445 = vmatprep.subr.bf16.mxu0 0
    %446 = vmatpush1.bf16.xpose.msra.mxu0 0
    %447 = vmatprep.subr.bf16.mxu0 0
    %448 = vmatpush1.bf16.xpose.msra.mxu0 0
    %449 = vmatprep.subr.bf16.mxu0 0
    %450 = vmatpush1.bf16.xpose.msra.mxu0 0
    %451 = vmatprep.subr.bf16.mxu0 0
    %452 = vmatpush1.bf16.xpose.msra.mxu0 0
    %453 = vmatprep.subr.bf16.mxu0 0
    %454 = vmatpush1.bf16.xpose.msra.mxu0 0
    %455 = vmatprep.subr.bf16.mxu0 0
    %456 = vmatpush1.bf16.xpose.msra.mxu0 0
    %457 = vmatprep.subr.bf16.mxu0 0
    %458 = vmatpush1.bf16.xpose.msra.mxu0 0
    %459 = vmatprep.subr.bf16.mxu0 0
    %460 = vmatpush1.bf16.xpose.msra.mxu0 0
    %461 = vmatprep.subr.bf16.mxu0 0
    %462 = vmatpush1.bf16.xpose.msra.mxu0 0
    %463 = vmatprep.subr.bf16.mxu0 0
    %464 = vmatpush1.bf16.xpose.msra.mxu0 0
    %465 = vmatprep.subr.bf16.mxu0 0
    %466 = vmatpush1.bf16.xpose.msra.mxu0 0
    %467 = vmatprep.subr.bf16.mxu0 0
    %468 = vmatpush1.bf16.xpose.msra.mxu0 0
    %469 = vmatprep.subr.bf16.mxu0 0
    %470 = vmatpush1.bf16.xpose.msra.mxu0 0
    %471 = vmatprep.subr.bf16.mxu0 0
    %472 = vmatpush1.bf16.xpose.msra.mxu0 0
    %473 = vmatprep.subr.bf16.mxu0 0
    %474 = vmatpush1.bf16.xpose.msra.mxu0 0
    %475 = vmatprep.mubr.bf16.mxu0 0
    %476 = vmatmul.mubr.bf16.gmra.mrb[0].mxu0 %v438
    %v477 = vpop.f32.mrb[0].mxu0
    %v478 = vadd.f32 %v214, %v477
    %v479 = vpop.f32.mrb[0].mxu0
    %v480 = vpop.f32.mrb[0].mxu0
    %v481 = vpop.f32.mrb[0].mxu0
    %482 = vdwg.mxu0
    %483 = vrot.lane.b32.xlu0 %v210, 120
    %v484 = vpop.permute.xlu0 %483
    %485 = vrot.lane.b32.xlu0 %v210, 88
    %v486 = vpop.permute.xlu0 %485
    %v488 = vsel %vm218, %v484, 0
    %v491 = vsel %vm218, %v486, 0
    %493 = vmatprep.subr.bf16.mxu0 0
    %494 = vmatpush1.bf16.xpose.msra.mxu0 %v491
    %495 = vmatprep.subr.bf16.mxu0 0
    %496 = vmatpush1.bf16.xpose.msra.mxu0 0
    %497 = vmatprep.subr.bf16.mxu0 0
    %498 = vmatpush1.bf16.xpose.msra.mxu0 0
    %499 = vmatprep.subr.bf16.mxu0 0
    %500 = vmatpush1.bf16.xpose.msra.mxu0 0
    %501 = vmatprep.subr.bf16.mxu0 0
    %502 = vmatpush1.bf16.xpose.msra.mxu0 0
    %503 = vmatprep.subr.bf16.mxu0 0
    %504 = vmatpush1.bf16.xpose.msra.mxu0 0
    %505 = vmatprep.subr.bf16.mxu0 0
    %506 = vmatpush1.bf16.xpose.msra.mxu0 0
    %507 = vmatprep.subr.bf16.mxu0 0
    %508 = vmatpush1.bf16.xpose.msra.mxu0 0
    %509 = vmatprep.subr.bf16.mxu0 0
    %510 = vmatpush1.bf16.xpose.msra.mxu0 0
    %511 = vmatprep.subr.bf16.mxu0 0
    %512 = vmatpush1.bf16.xpose.msra.mxu0 0
    %513 = vmatprep.subr.bf16.mxu0 0
    %514 = vmatpush1.bf16.xpose.msra.mxu0 0
    %515 = vmatprep.subr.bf16.mxu0 0
    %516 = vmatpush1.bf16.xpose.msra.mxu0 0
    %517 = vmatprep.subr.bf16.mxu0 0
    %518 = vmatpush1.bf16.xpose.msra.mxu0 0
    %519 = vmatprep.subr.bf16.mxu0 0
    %520 = vmatpush1.bf16.xpose.msra.mxu0 0
    %521 = vmatprep.subr.bf16.mxu0 0
    %522 = vmatpush1.bf16.xpose.msra.mxu0 0
    %523 = vmatprep.subr.bf16.mxu0 0
    %524 = vmatpush1.bf16.xpose.msra.mxu0 0
    %525 = vmatprep.mubr.bf16.mxu0 0
    %526 = vmatmul.mubr.bf16.gmra.mrb[0].mxu0 %v488
    %v527 = vpop.f32.mrb[0].mxu0
    %v528 = vadd.f32 %v214, %v527
    %v529 = vpop.f32.mrb[0].mxu0
    %v530 = vpop.f32.mrb[0].mxu0
    %v531 = vpop.f32.mrb[0].mxu0
    %532 = vdwg.mxu0
    %v533 = vsel %vm314, %v478, -inf
    %534 = vmax.xlane.f32.xlu0 %v533
    %v535 = vpop.xlane.xlu0 %534
    %v536 = vsel %vm314, %v528, -inf
    %537 = vmax.xlane.f32.xlu0 %v536
    %v538 = vpop.xlane.xlu0 %537
    %v539 = vsub.f32 %v478, %v535
    %v540 = vsub.f32 %v528, %v538
    %v541 = vmul.f32 %v539, 1.442695
    %v542 = vpow.pop %v541
    %v543 = vmul.f32 %v540, 1.442695
    %v544 = vpow.pop %v543
    %v545 = vsel %vm314, %v542, 0.0
    %546 = vadd.xlane.f32.xlu0 %v545
    %v547 = vpop.xlane.xlu0 %546
    %v548 = vsel %vm314, %v544, 0.0
    %549 = vadd.xlane.f32.xlu0 %v548
    %v550 = vpop.xlane.xlu0 %549
    %v551 = vrcp.pop %v547
    %v552 = vrcp.pop %v550
    %v553 = vmul.f32 %v542, %v551
    %v554 = vmul.f32 %v544, %v552
    %v555 = vpack.c.bf16 %v553, %v553
    %v556 = vpack.c.bf16 %v554, %v554
    %557 = vrot.lane.b32.xlu0 %v209, 56
    %v558 = vpop.permute.xlu0 %557
    %v561 = vsel %vm314, %v555, 0
    %563 = vmatprep.subr.bf16.mxu0 0
    %564 = vmatpush1.bf16.msra.mxu0 %v558
    %565 = vmatprep.subr.bf16.mxu0 0
    %566 = vmatpush1.bf16.msra.mxu0 0
    %567 = vmatprep.subr.bf16.mxu0 0
    %568 = vmatpush1.bf16.msra.mxu0 0
    %569 = vmatprep.subr.bf16.mxu0 0
    %570 = vmatpush1.bf16.msra.mxu0 0
    %571 = vmatprep.subr.bf16.mxu0 0
    %572 = vmatpush1.bf16.msra.mxu0 0
    %573 = vmatprep.subr.bf16.mxu0 0
    %574 = vmatpush1.bf16.msra.mxu0 0
    %575 = vmatprep.subr.bf16.mxu0 0
    %576 = vmatpush1.bf16.msra.mxu0 0
    %577 = vmatprep.subr.bf16.mxu0 0
    %578 = vmatpush1.bf16.msra.mxu0 0
    %579 = vmatprep.subr.bf16.mxu0 0
    %580 = vmatpush1.bf16.msra.mxu0 0
    %581 = vmatprep.subr.bf16.mxu0 0
    %582 = vmatpush1.bf16.msra.mxu0 0
    %583 = vmatprep.subr.bf16.mxu0 0
    %584 = vmatpush1.bf16.msra.mxu0 0
    %585 = vmatprep.subr.bf16.mxu0 0
    %586 = vmatpush1.bf16.msra.mxu0 0
    %587 = vmatprep.subr.bf16.mxu0 0
    %588 = vmatpush1.bf16.msra.mxu0 0
    %589 = vmatprep.subr.bf16.mxu0 0
    %590 = vmatpush1.bf16.msra.mxu0 0
    %591 = vmatprep.subr.bf16.mxu0 0
    %592 = vmatpush1.bf16.msra.mxu0 0
    %593 = vmatprep.subr.bf16.mxu0 0
    %594 = vmatpush1.bf16.msra.mxu0 0
    %595 = vmatprep.mubr.bf16.mxu0 0
    %596 = vmatmul.mubr.bf16.gmra.mrb[0].mxu0 %v561
    %v597 = vpop.f32.mrb[0].mxu0
    %v598 = vadd.f32 0.0, %v597
    %v599 = vpop.f32.mrb[0].mxu0
    %v600 = vpop.f32.mrb[0].mxu0
    %v601 = vpop.f32.mrb[0].mxu0
    %602 = vdwg.mxu0
    %603 = vrot.lane.b32.xlu0 %v210, 56
    %v604 = vpop.permute.xlu0 %603
    %v607 = vsel %vm314, %v556, 0
    %609 = vmatprep.subr.bf16.mxu0 0
    %610 = vmatpush1.bf16.msra.mxu0 %v604
    %611 = vmatprep.subr.bf16.mxu0 0
    %612 = vmatpush1.bf16.msra.mxu0 0
    %613 = vmatprep.subr.bf16.mxu0 0
    %614 = vmatpush1.bf16.msra.mxu0 0
    %615 = vmatprep.subr.bf16.mxu0 0
    %616 = vmatpush1.bf16.msra.mxu0 0
    %617 = vmatprep.subr.bf16.mxu0 0
    %618 = vmatpush1.bf16.msra.mxu0 0
    %619 = vmatprep.subr.bf16.mxu0 0
    %620 = vmatpush1.bf16.msra.mxu0 0
    %621 = vmatprep.subr.bf16.mxu0 0
    %622 = vmatpush1.bf16.msra.mxu0 0
    %623 = vmatprep.subr.bf16.mxu0 0
    %624 = vmatpush1.bf16.msra.mxu0 0
    %625 = vmatprep.subr.bf16.mxu0 0
    %626 = vmatpush1.bf16.msra.mxu0 0
    %627 = vmatprep.subr.bf16.mxu0 0
    %628 = vmatpush1.bf16.msra.mxu0 0
    %629 = vmatprep.subr.bf16.mxu0 0
    %630 = vmatpush1.bf16.msra.mxu0 0
    %631 = vmatprep.subr.bf16.mxu0 0
    %632 = vmatpush1.bf16.msra.mxu0 0
    %633 = vmatprep.subr.bf16.mxu0 0
    %634 = vmatpush1.bf16.msra.mxu0 0
    %635 = vmatprep.subr.bf16.mxu0 0
    %636 = vmatpush1.bf16.msra.mxu0 0
    %637 = vmatprep.subr.bf16.mxu0 0
    %638 = vmatpush1.bf16.msra.mxu0 0
    %639 = vmatprep.subr.bf16.mxu0 0
    %640 = vmatpush1.bf16.msra.mxu0 0
    %641 = vmatprep.mubr.bf16.mxu0 0
    %642 = vmatmul.mubr.bf16.gmra.mrb[0].mxu0 %v607
    %v643 = vpop.f32.mrb[0].mxu0
    %v644 = vadd.f32 0.0, %v643
    %v645 = vpop.f32.mrb[0].mxu0
    %v646 = vpop.f32.mrb[0].mxu0
    %v647 = vpop.f32.mrb[0].mxu0
    %648 = vdwg.mxu0
    %v649 = vpack.c.bf16 %v598, %v598
    %v650 = vpack.c.bf16 %v644, %v644
    %651 = vrot.lane.b32.xlu0 %v209, 112
    %v652 = vpop.permute.xlu0 %651
    %653 = vrot.lane.b32.xlu0 %v209, 80
    %v654 = vpop.permute.xlu0 %653
    %v656 = vsel %vm218, %v652, 0
    %v659 = vsel %vm218, %v654, 0
    %661 = vmatprep.subr.bf16.mxu0 0
    %662 = vmatpush1.bf16.xpose.msra.mxu0 %v659
    %663 = vmatprep.subr.bf16.mxu0 0
    %664 = vmatpush1.bf16.xpose.msra.mxu0 0
    %665 = vmatprep.subr.bf16.mxu0 0
    %666 = vmatpush1.bf16.xpose.msra.mxu0 0
    %667 = vmatprep.subr.bf16.mxu0 0
    %668 = vmatpush1.bf16.xpose.msra.mxu0 0
    %669 = vmatprep.subr.bf16.mxu0 0
    %670 = vmatpush1.bf16.xpose.msra.mxu0 0
    %671 = vmatprep.subr.bf16.mxu0 0
    %672 = vmatpush1.bf16.xpose.msra.mxu0 0
    %673 = vmatprep.subr.bf16.mxu0 0
    %674 = vmatpush1.bf16.xpose.msra.mxu0 0
    %675 = vmatprep.subr.bf16.mxu0 0
    %676 = vmatpush1.bf16.xpose.msra.mxu0 0
    %677 = vmatprep.subr.bf16.mxu0 0
    %678 = vmatpush1.bf16.xpose.msra.mxu0 0
    %679 = vmatprep.subr.bf16.mxu0 0
    %680 = vmatpush1.bf16.xpose.msra.mxu0 0
    %681 = vmatprep.subr.bf16.mxu0 0
    %682 = vmatpush1.bf16.xpose.msra.mxu0 0
    %683 = vmatprep.subr.bf16.mxu0 0
    %684 = vmatpush1.bf16.xpose.msra.mxu0 0
    %685 = vmatprep.subr.bf16.mxu0 0
    %686 = vmatpush1.bf16.xpose.msra.mxu0 0
    %687 = vmatprep.subr.bf16.mxu0 0
    %688 = vmatpush1.bf16.xpose.msra.mxu0 0
    %689 = vmatprep.subr.bf16.mxu0 0
    %690 = vmatpush1.bf16.xpose.msra.mxu0 0
    %691 = vmatprep.subr.bf16.mxu0 0
    %692 = vmatpush1.bf16.xpose.msra.mxu0 0
    %693 = vmatprep.mubr.bf16.mxu0 0
    %694 = vmatmul.mubr.bf16.gmra.mrb[0].mxu0 %v656
    %v695 = vpop.f32.mrb[0].mxu0
    %v696 = vadd.f32 %v214, %v695
    %v697 = vpop.f32.mrb[0].mxu0
    %v698 = vpop.f32.mrb[0].mxu0
    %v699 = vpop.f32.mrb[0].mxu0
    %700 = vdwg.mxu0
    %701 = vrot.lane.b32.xlu0 %v210, 112
    %v702 = vpop.permute.xlu0 %701
    %703 = vrot.lane.b32.xlu0 %v210, 80
    %v704 = vpop.permute.xlu0 %703
    %v706 = vsel %vm218, %v702, 0
    %v709 = vsel %vm218, %v704, 0
    %711 = vmatprep.subr.bf16.mxu0 0
    %712 = vmatpush1.bf16.xpose.msra.mxu0 %v709
    %713 = vmatprep.subr.bf16.mxu0 0
    %714 = vmatpush1.bf16.xpose.msra.mxu0 0
    %715 = vmatprep.subr.bf16.mxu0 0
    %716 = vmatpush1.bf16.xpose.msra.mxu0 0
    %717 = vmatprep.subr.bf16.mxu0 0
    %718 = vmatpush1.bf16.xpose.msra.mxu0 0
    %719 = vmatprep.subr.bf16.mxu0 0
    %720 = vmatpush1.bf16.xpose.msra.mxu0 0
    %721 = vmatprep.subr.bf16.mxu0 0
    %722 = vmatpush1.bf16.xpose.msra.mxu0 0
    %723 = vmatprep.subr.bf16.mxu0 0
    %724 = vmatpush1.bf16.xpose.msra.mxu0 0
    %725 = vmatprep.subr.bf16.mxu0 0
    %726 = vmatpush1.bf16.xpose.msra.mxu0 0
    %727 = vmatprep.subr.bf16.mxu0 0
    %728 = vmatpush1.bf16.xpose.msra.mxu0 0
    %729 = vmatprep.subr.bf16.mxu0 0
    %730 = vmatpush1.bf16.xpose.msra.mxu0 0
    %731 = vmatprep.subr.bf16.mxu0 0
    %732 = vmatpush1.bf16.xpose.msra.mxu0 0
    %733 = vmatprep.subr.bf16.mxu0 0
    %734 = vmatpush1.bf16.xpose.msra.mxu0 0
    %735 = vmatprep.subr.bf16.mxu0 0
    %736 = vmatpush1.bf16.xpose.msra.mxu0 0
    %737 = vmatprep.subr.bf16.mxu0 0
    %738 = vmatpush1.bf16.xpose.msra.mxu0 0
    %739 = vmatprep.subr.bf16.mxu0 0
    %740 = vmatpush1.bf16.xpose.msra.mxu0 0
    %741 = vmatprep.subr.bf16.mxu0 0
    %742 = vmatpush1.bf16.xpose.msra.mxu0 0
    %743 = vmatprep.mubr.bf16.mxu0 0
    %744 = vmatmul.mubr.bf16.gmra.mrb[0].mxu0 %v706
    %v745 = vpop.f32.mrb[0].mxu0
    %v746 = vadd.f32 %v214, %v745
    %v747 = vpop.f32.mrb[0].mxu0
    %v748 = vpop.f32.mrb[0].mxu0
    %v749 = vpop.f32.mrb[0].mxu0
    %750 = vdwg.mxu0
    %v751 = vsel %vm314, %v696, -inf
    %752 = vmax.xlane.f32.xlu0 %v751
    %v753 = vpop.xlane.xlu0 %752
    %v754 = vsel %vm314, %v746, -inf
    %755 = vmax.xlane.f32.xlu0 %v754
    %v756 = vpop.xlane.xlu0 %755
    %v757 = vsub.f32 %v696, %v753
    %v758 = vsub.f32 %v746, %v756
    %v759 = vmul.f32 %v757, 1.442695
    %v760 = vpow.pop %v759
    %v761 = vmul.f32 %v758, 1.442695
    %v762 = vpow.pop %v761
    %v763 = vsel %vm314, %v760, 0.0
    %764 = vadd.xlane.f32.xlu0 %v763
    %v765 = vpop.xlane.xlu0 %764
    %v766 = vsel %vm314, %v762, 0.0
    %767 = vadd.xlane.f32.xlu0 %v766
    %v768 = vpop.xlane.xlu0 %767
    %v769 = vrcp.pop %v765
    %v770 = vrcp.pop %v768
    %v771 = vmul.f32 %v760, %v769
    %v772 = vmul.f32 %v762, %v770
    %v773 = vpack.c.bf16 %v771, %v771
    %v774 = vpack.c.bf16 %v772, %v772
    %775 = vrot.lane.b32.xlu0 %v209, 48
    %v776 = vpop.permute.xlu0 %775
    %v779 = vsel %vm314, %v773, 0
    %781 = vmatprep.subr.bf16.mxu0 0
    %782 = vmatpush1.bf16.msra.mxu0 %v776
    %783 = vmatprep.subr.bf16.mxu0 0
    %784 = vmatpush1.bf16.msra.mxu0 0
    %785 = vmatprep.subr.bf16.mxu0 0
    %786 = vmatpush1.bf16.msra.mxu0 0
    %787 = vmatprep.subr.bf16.mxu0 0
    %788 = vmatpush1.bf16.msra.mxu0 0
    %789 = vmatprep.subr.bf16.mxu0 0
    %790 = vmatpush1.bf16.msra.mxu0 0
    %791 = vmatprep.subr.bf16.mxu0 0
    %792 = vmatpush1.bf16.msra.mxu0 0
    %793 = vmatprep.subr.bf16.mxu0 0
    %794 = vmatpush1.bf16.msra.mxu0 0
    %795 = vmatprep.subr.bf16.mxu0 0
    %796 = vmatpush1.bf16.msra.mxu0 0
    %797 = vmatprep.subr.bf16.mxu0 0
    %798 = vmatpush1.bf16.msra.mxu0 0
    %799 = vmatprep.subr.bf16.mxu0 0
    %800 = vmatpush1.bf16.msra.mxu0 0
    %801 = vmatprep.subr.bf16.mxu0 0
    %802 = vmatpush1.bf16.msra.mxu0 0
    %803 = vmatprep.subr.bf16.mxu0 0
    %804 = vmatpush1.bf16.msra.mxu0 0
    %805 = vmatprep.subr.bf16.mxu0 0
    %806 = vmatpush1.bf16.msra.mxu0 0
    %807 = vmatprep.subr.bf16.mxu0 0
    %808 = vmatpush1.bf16.msra.mxu0 0
    %809 = vmatprep.subr.bf16.mxu0 0
    %810 = vmatpush1.bf16.msra.mxu0 0
    %811 = vmatprep.subr.bf16.mxu0 0
    %812 = vmatpush1.bf16.msra.mxu0 0
    %813 = vmatprep.mubr.bf16.mxu0 0
    %814 = vmatmul.mubr.bf16.gmra.mrb[0].mxu0 %v779
    %v815 = vpop.f32.mrb[0].mxu0
    %v816 = vadd.f32 0.0, %v815
    %v817 = vpop.f32.mrb[0].mxu0
    %v818 = vpop.f32.mrb[0].mxu0
    %v819 = vpop.f32.mrb[0].mxu0
    %820 = vdwg.mxu0
    %821 = vrot.lane.b32.xlu0 %v210, 48
    %v822 = vpop.permute.xlu0 %821
    %v825 = vsel %vm314, %v774, 0
    %827 = vmatprep.subr.bf16.mxu0 0
    %828 = vmatpush1.bf16.msra.mxu0 %v822
    %829 = vmatprep.subr.bf16.mxu0 0
    %830 = vmatpush1.bf16.msra.mxu0 0
    %831 = vmatprep.subr.bf16.mxu0 0
    %832 = vmatpush1.bf16.msra.mxu0 0
    %833 = vmatprep.subr.bf16.mxu0 0
    %834 = vmatpush1.bf16.msra.mxu0 0
    %835 = vmatprep.subr.bf16.mxu0 0
    %836 = vmatpush1.bf16.msra.mxu0 0
    %837 = vmatprep.subr.bf16.mxu0 0
    %838 = vmatpush1.bf16.msra.mxu0 0
    %839 = vmatprep.subr.bf16.mxu0 0
    %840 = vmatpush1.bf16.msra.mxu0 0
    %841 = vmatprep.subr.bf16.mxu0 0
    %842 = vmatpush1.bf16.msra.mxu0 0
    %843 = vmatprep.subr.bf16.mxu0 0
    %844 = vmatpush1.bf16.msra.mxu0 0
    %845 = vmatprep.subr.bf16.mxu0 0
    %846 = vmatpush1.bf16.msra.mxu0 0
    %847 = vmatprep.subr.bf16.mxu0 0
    %848 = vmatpush1.bf16.msra.mxu0 0
    %849 = vmatprep.subr.bf16.mxu0 0
    %850 = vmatpush1.bf16.msra.mxu0 0
    %851 = vmatprep.subr.bf16.mxu0 0
    %852 = vmatpush1.bf16.msra.mxu0 0
    %853 = vmatprep.subr.bf16.mxu0 0
    %854 = vmatpush1.bf16.msra.mxu0 0
    %855 = vmatprep.subr.bf16.mxu0 0
    %856 = vmatpush1.bf16.msra.mxu0 0
    %857 = vmatprep.subr.bf16.mxu0 0
    %858 = vmatpush1.bf16.msra.mxu0 0
    %859 = vmatprep.mubr.bf16.mxu0 0
    %860 = vmatmul.mubr.bf16.gmra.mrb[0].mxu0 %v825
    %v861 = vpop.f32.mrb[0].mxu0
    %v862 = vadd.f32 0.0, %v861
    %v863 = vpop.f32.mrb[0].mxu0
    %v864 = vpop.f32.mrb[0].mxu0
    %v865 = vpop.f32.mrb[0].mxu0
    %866 = vdwg.mxu0
    %v867 = vpack.c.bf16 %v816, %v816
    %v868 = vpack.c.bf16 %v862, %v862
    %869 = vrot.lane.b32.xlu0 %v209, 104
    %v870 = vpop.permute.xlu0 %869
    %871 = vrot.lane.b32.xlu0 %v209, 72
    %v872 = vpop.permute.xlu0 %871
    %v874 = vsel %vm218, %v870, 0
    %v877 = vsel %vm218, %v872, 0
    %879 = vmatprep.subr.bf16.mxu0 0
    %880 = vmatpush1.bf16.xpose.msra.mxu0 %v877
    %881 = vmatprep.subr.bf16.mxu0 0
    %882 = vmatpush1.bf16.xpose.msra.mxu0 0
    %883 = vmatprep.subr.bf16.mxu0 0
    %884 = vmatpush1.bf16.xpose.msra.mxu0 0
    %885 = vmatprep.subr.bf16.mxu0 0
    %886 = vmatpush1.bf16.xpose.msra.mxu0 0
    %887 = vmatprep.subr.bf16.mxu0 0
    %888 = vmatpush1.bf16.xpose.msra.mxu0 0
    %889 = vmatprep.subr.bf16.mxu0 0
    %890 = vmatpush1.bf16.xpose.msra.mxu0 0
    %891 = vmatprep.subr.bf16.mxu0 0
    %892 = vmatpush1.bf16.xpose.msra.mxu0 0
    %893 = vmatprep.subr.bf16.mxu0 0
    %894 = vmatpush1.bf16.xpose.msra.mxu0 0
    %895 = vmatprep.subr.bf16.mxu0 0
    %896 = vmatpush1.bf16.xpose.msra.mxu0 0
    %897 = vmatprep.subr.bf16.mxu0 0
    %898 = vmatpush1.bf16.xpose.msra.mxu0 0
    %899 = vmatprep.subr.bf16.mxu0 0
    %900 = vmatpush1.bf16.xpose.msra.mxu0 0
    %901 = vmatprep.subr.bf16.mxu0 0
    %902 = vmatpush1.bf16.xpose.msra.mxu0 0
    %903 = vmatprep.subr.bf16.mxu0 0
    %904 = vmatpush1.bf16.xpose.msra.mxu0 0
    %905 = vmatprep.subr.bf16.mxu0 0
    %906 = vmatpush1.bf16.xpose.msra.mxu0 0
    %907 = vmatprep.subr.bf16.mxu0 0
    %908 = vmatpush1.bf16.xpose.msra.mxu0 0
    %909 = vmatprep.subr.bf16.mxu0 0
    %910 = vmatpush1.bf16.xpose.msra.mxu0 0
    %911 = vmatprep.mubr.bf16.mxu0 0
    %912 = vmatmul.mubr.bf16.gmra.mrb[0].mxu0 %v874
    %v913 = vpop.f32.mrb[0].mxu0
    %v914 = vadd.f32 %v214, %v913
    %v915 = vpop.f32.mrb[0].mxu0
    %v916 = vpop.f32.mrb[0].mxu0
    %v917 = vpop.f32.mrb[0].mxu0
    %918 = vdwg.mxu0
    %919 = vrot.lane.b32.xlu0 %v210, 104
    %v920 = vpop.permute.xlu0 %919
    %921 = vrot.lane.b32.xlu0 %v210, 72
    %v922 = vpop.permute.xlu0 %921
    %v924 = vsel %vm218, %v920, 0
    %v927 = vsel %vm218, %v922, 0
    %929 = vmatprep.subr.bf16.mxu0 0
    %930 = vmatpush1.bf16.xpose.msra.mxu0 %v927
    %931 = vmatprep.subr.bf16.mxu0 0
    %932 = vmatpush1.bf16.xpose.msra.mxu0 0
    %933 = vmatprep.subr.bf16.mxu0 0
    %934 = vmatpush1.bf16.xpose.msra.mxu0 0
    %935 = vmatprep.subr.bf16.mxu0 0
    %936 = vmatpush1.bf16.xpose.msra.mxu0 0
    %937 = vmatprep.subr.bf16.mxu0 0
    %938 = vmatpush1.bf16.xpose.msra.mxu0 0
    %939 = vmatprep.subr.bf16.mxu0 0
    %940 = vmatpush1.bf16.xpose.msra.mxu0 0
    %941 = vmatprep.subr.bf16.mxu0 0
    %942 = vmatpush1.bf16.xpose.msra.mxu0 0
    %943 = vmatprep.subr.bf16.mxu0 0
    %944 = vmatpush1.bf16.xpose.msra.mxu0 0
    %945 = vmatprep.subr.bf16.mxu0 0
    %946 = vmatpush1.bf16.xpose.msra.mxu0 0
    %947 = vmatprep.subr.bf16.mxu0 0
    %948 = vmatpush1.bf16.xpose.msra.mxu0 0
    %949 = vmatprep.subr.bf16.mxu0 0
    %950 = vmatpush1.bf16.xpose.msra.mxu0 0
    %951 = vmatprep.subr.bf16.mxu0 0
    %952 = vmatpush1.bf16.xpose.msra.mxu0 0
    %953 = vmatprep.subr.bf16.mxu0 0
    %954 = vmatpush1.bf16.xpose.msra.mxu0 0
    %955 = vmatprep.subr.bf16.mxu0 0
    %956 = vmatpush1.bf16.xpose.msra.mxu0 0
    %957 = vmatprep.subr.bf16.mxu0 0
    %958 = vmatpush1.bf16.xpose.msra.mxu0 0
    %959 = vmatprep.subr.bf16.mxu0 0
    %960 = vmatpush1.bf16.xpose.msra.mxu0 0
    %961 = vmatprep.mubr.bf16.mxu0 0
    %962 = vmatmul.mubr.bf16.gmra.mrb[0].mxu0 %v924
    %v963 = vpop.f32.mrb[0].mxu0
    %v964 = vadd.f32 %v214, %v963
    %v965 = vpop.f32.mrb[0].mxu0
    %v966 = vpop.f32.mrb[0].mxu0
    %v967 = vpop.f32.mrb[0].mxu0
    %968 = vdwg.mxu0
    %v969 = vsel %vm314, %v914, -inf
    %970 = vmax.xlane.f32.xlu0 %v969
    %v971 = vpop.xlane.xlu0 %970
    %v972 = vsel %vm314, %v964, -inf
    %973 = vmax.xlane.f32.xlu0 %v972
    %v974 = vpop.xlane.xlu0 %973
    %v975 = vsub.f32 %v914, %v971
    %v976 = vsub.f32 %v964, %v974
    %v977 = vmul.f32 %v975, 1.442695
    %v978 = vpow.pop %v977
    %v979 = vmul.f32 %v976, 1.442695
    %v980 = vpow.pop %v979
    %v981 = vsel %vm314, %v978, 0.0
    %982 = vadd.xlane.f32.xlu0 %v981
    %v983 = vpop.xlane.xlu0 %982
    %v984 = vsel %vm314, %v980, 0.0
    %985 = vadd.xlane.f32.xlu0 %v984
    %v986 = vpop.xlane.xlu0 %985
    %v987 = vrcp.pop %v983
    %v988 = vrcp.pop %v986
    %v989 = vmul.f32 %v978, %v987
    %v990 = vmul.f32 %v980, %v988
    %v991 = vpack.c.bf16 %v989, %v989
    %v992 = vpack.c.bf16 %v990, %v990
    %993 = vrot.lane.b32.xlu0 %v209, 40
    %v994 = vpop.permute.xlu0 %993
    %v997 = vsel %vm314, %v991, 0
    %999 = vmatprep.subr.bf16.mxu0 0
    %1000 = vmatpush1.bf16.msra.mxu0 %v994
    %1001 = vmatprep.subr.bf16.mxu0 0
    %1002 = vmatpush1.bf16.msra.mxu0 0
    %1003 = vmatprep.subr.bf16.mxu0 0
    %1004 = vmatpush1.bf16.msra.mxu0 0
    %1005 = vmatprep.subr.bf16.mxu0 0
    %1006 = vmatpush1.bf16.msra.mxu0 0
    %1007 = vmatprep.subr.bf16.mxu0 0
    %1008 = vmatpush1.bf16.msra.mxu0 0
    %1009 = vmatprep.subr.bf16.mxu0 0
    %1010 = vmatpush1.bf16.msra.mxu0 0
    %1011 = vmatprep.subr.bf16.mxu0 0
    %1012 = vmatpush1.bf16.msra.mxu0 0
    %1013 = vmatprep.subr.bf16.mxu0 0
    %1014 = vmatpush1.bf16.msra.mxu0 0
    %1015 = vmatprep.subr.bf16.mxu0 0
    %1016 = vmatpush1.bf16.msra.mxu0 0
    %1017 = vmatprep.subr.bf16.mxu0 0
    %1018 = vmatpush1.bf16.msra.mxu0 0
    %1019 = vmatprep.subr.bf16.mxu0 0
    %1020 = vmatpush1.bf16.msra.mxu0 0
    %1021 = vmatprep.subr.bf16.mxu0 0
    %1022 = vmatpush1.bf16.msra.mxu0 0
    %1023 = vmatprep.subr.bf16.mxu0 0
    %1024 = vmatpush1.bf16.msra.mxu0 0
    %1025 = vmatprep.subr.bf16.mxu0 0
    %1026 = vmatpush1.bf16.msra.mxu0 0
    %1027 = vmatprep.subr.bf16.mxu0 0
    %1028 = vmatpush1.bf16.msra.mxu0 0
    %1029 = vmatprep.subr.bf16.mxu0 0
    %1030 = vmatpush1.bf16.msra.mxu0 0
    %1031 = vmatprep.mubr.bf16.mxu0 0
    %1032 = vmatmul.mubr.bf16.gmra.mrb[0].mxu0 %v997
    %v1033 = vpop.f32.mrb[0].mxu0
    %v1034 = vadd.f32 0.0, %v1033
    %v1035 = vpop.f32.mrb[0].mxu0
    %v1036 = vpop.f32.mrb[0].mxu0
    %v1037 = vpop.f32.mrb[0].mxu0
    %1038 = vdwg.mxu0
    %1039 = vrot.lane.b32.xlu0 %v210, 40
    %v1040 = vpop.permute.xlu0 %1039
    %v1043 = vsel %vm314, %v992, 0
    %1045 = vmatprep.subr.bf16.mxu0 0
    %1046 = vmatpush1.bf16.msra.mxu0 %v1040
    %1047 = vmatprep.subr.bf16.mxu0 0
    %1048 = vmatpush1.bf16.msra.mxu0 0
    %1049 = vmatprep.subr.bf16.mxu0 0
    %1050 = vmatpush1.bf16.msra.mxu0 0
    %1051 = vmatprep.subr.bf16.mxu0 0
    %1052 = vmatpush1.bf16.msra.mxu0 0
    %1053 = vmatprep.subr.bf16.mxu0 0
    %1054 = vmatpush1.bf16.msra.mxu0 0
    %1055 = vmatprep.subr.bf16.mxu0 0
    %1056 = vmatpush1.bf16.msra.mxu0 0
    %1057 = vmatprep.subr.bf16.mxu0 0
    %1058 = vmatpush1.bf16.msra.mxu0 0
    %1059 = vmatprep.subr.bf16.mxu0 0
    %1060 = vmatpush1.bf16.msra.mxu0 0
    %1061 = vmatprep.subr.bf16.mxu0 0
    %1062 = vmatpush1.bf16.msra.mxu0 0
    %1063 = vmatprep.subr.bf16.mxu0 0
    %1064 = vmatpush1.bf16.msra.mxu0 0
    %1065 = vmatprep.subr.bf16.mxu0 0
    %1066 = vmatpush1.bf16.msra.mxu0 0
    %1067 = vmatprep.subr.bf16.mxu0 0
    %1068 = vmatpush1.bf16.msra.mxu0 0
    %1069 = vmatprep.subr.bf16.mxu0 0
    %1070 = vmatpush1.bf16.msra.mxu0 0
    %1071 = vmatprep.subr.bf16.mxu0 0
    %1072 = vmatpush1.bf16.msra.mxu0 0
    %1073 = vmatprep.subr.bf16.mxu0 0
    %1074 = vmatpush1.bf16.msra.mxu0 0
    %1075 = vmatprep.subr.bf16.mxu0 0
    %1076 = vmatpush1.bf16.msra.mxu0 0
    %1077 = vmatprep.mubr.bf16.mxu0 0
    %1078 = vmatmul.mubr.bf16.gmra.mrb[0].mxu0 %v1043
    %v1079 = vpop.f32.mrb[0].mxu0
    %v1080 = vadd.f32 0.0, %v1079
    %v1081 = vpop.f32.mrb[0].mxu0
    %v1082 = vpop.f32.mrb[0].mxu0
    %v1083 = vpop.f32.mrb[0].mxu0
    %1084 = vdwg.mxu0
    %v1085 = vpack.c.bf16 %v1034, %v1034
    %v1086 = vpack.c.bf16 %v1080, %v1080
    %1089 = vrot.lane.b32.xlu0 %v649, 8
    %v1090 = vpop.permute.xlu0 %1089
    %1091 = vrot.lane.b32.xlu0 %v650, 8
    %v1092 = vpop.permute.xlu0 %1091
    %1095 = vrot.lane.b32.xlu0 %v867, 16
    %v1096 = vpop.permute.xlu0 %1095
    %1097 = vrot.lane.b32.xlu0 %v868, 16
    %v1098 = vpop.permute.xlu0 %1097
    %1101 = vrot.lane.b32.xlu0 %v1085, 24
    %v1102 = vpop.permute.xlu0 %1101
    %1103 = vrot.lane.b32.xlu0 %v1086, 24
    %v1104 = vpop.permute.xlu0 %1103
    %v1107 = vsel %vm218, %v431, %v1090
    %v1110 = vsel %vm218, %v432, %v1092
    %v1112 = vsel %vm314, %v1107, %v1096
    %v1114 = vsel %vm314, %v1110, %v1098
    %vm1115 = vcmask 195584
    %v1117 = vsel %vm1115, %v1112, %v1102
    %v1119 = vsel %vm1115, %v1114, %v1104
    %v1120 = vld [vmem:[%s5] sm:$0xf]
    %v1121 = vld [vmem:[%s5 + $0x4] sm:$0xf]
    %v1122 = vld [vmem:[%s5 + $0x8] sm:$0xf]
    %v1123 = vld [vmem:[%s5 + $0xc] sm:$0xf]
    %v1124 = vld [vmem:[%s6] sm:$0x1]
    %v1126 = vlaneseq
    %v1127 = vshrl.u32 %v1126, 7
    %v1128 = vsub.s32 0, %v1127
    %v1129 = vrot.slane %v1124, %v1128
    %v1133 = vunpack.c.l.b16 %v1117
    %v1134 = vunpack.c.l.b16 %v1119
    %v1135 = vpack.c.b16 %v1134, %v1133
    %v1140 = vunpack.c.l.b16 %v1120
    %v1141 = vunpack.c.l.b16 %v1121
    %v1142 = vunpack.c.l.b16 %v1122
    %v1143 = vunpack.c.l.b16 %v1123
    %v1144 = vpack.c.b16 %v1141, %v1140
    %v1145 = vpack.c.b16 %v1143, %v1142
    %v1149 = vsel %vm50, %v1135, 0
    %1151 = vmatprep.subr.bf16.mxu0 0
    %1152 = vmatpush1.bf16.msra.mxu0 %v1144
    %1153 = vmatprep.subr.bf16.mxu0 0
    %1154 = vmatpush1.bf16.msra.mxu0 %v1145
    %1155 = vmatprep.subr.bf16.mxu0 0
    %1156 = vmatpush1.bf16.msra.mxu0 0
    %1157 = vmatprep.subr.bf16.mxu0 0
    %1158 = vmatpush1.bf16.msra.mxu0 0
    %1159 = vmatprep.subr.bf16.mxu0 0
    %1160 = vmatpush1.bf16.msra.mxu0 0
    %1161 = vmatprep.subr.bf16.mxu0 0
    %1162 = vmatpush1.bf16.msra.mxu0 0
    %1163 = vmatprep.subr.bf16.mxu0 0
    %1164 = vmatpush1.bf16.msra.mxu0 0
    %1165 = vmatprep.subr.bf16.mxu0 0
    %1166 = vmatpush1.bf16.msra.mxu0 0
    %1167 = vmatprep.subr.bf16.mxu0 0
    %1168 = vmatpush1.bf16.msra.mxu0 0
    %1169 = vmatprep.subr.bf16.mxu0 0
    %1170 = vmatpush1.bf16.msra.mxu0 0
    %1171 = vmatprep.subr.bf16.mxu0 0
    %1172 = vmatpush1.bf16.msra.mxu0 0
    %1173 = vmatprep.subr.bf16.mxu0 0
    %1174 = vmatpush1.bf16.msra.mxu0 0
    %1175 = vmatprep.subr.bf16.mxu0 0
    %1176 = vmatpush1.bf16.msra.mxu0 0
    %1177 = vmatprep.subr.bf16.mxu0 0
    %1178 = vmatpush1.bf16.msra.mxu0 0
    %1179 = vmatprep.subr.bf16.mxu0 0
    %1180 = vmatpush1.bf16.msra.mxu0 0
    %1181 = vmatprep.subr.bf16.mxu0 0
    %1182 = vmatpush1.bf16.msra.mxu0 0
    %1183 = vmatprep.mubr.bf16.mxu0 0
    %1184 = vmatmul.mubr.bf16.gmra.mrb[0].mxu0 %v1149
    %v1185 = vpop.f32.mrb[0].mxu0
    %v1186 = vadd.f32 %v1129, %v1185
    %v1187 = vpop.f32.mrb[0].mxu0
    %v1188 = vpop.f32.mrb[0].mxu0
    %v1189 = vadd.f32 %v1129, %v1188
    %v1190 = vpop.f32.mrb[0].mxu0
    %1191 = vdwg.mxu0
    %v1192 = vadd.f32 %v46, %v1186
    %v1193 = vadd.f32 %v48, %v1189
    %v1194 = vsel %vm50, %v1192, 0.0
    %1195 = vadd.xlane.f32.xlu0 %v1194
    %v1196 = vpop.xlane.xlu0 %1195
    %v1197 = vsel %vm50, %v1193, 0.0
    %1198 = vadd.xlane.f32.xlu0 %v1197
    %v1199 = vpop.xlane.xlu0 %1198
    %v1200 = vmul.f32 %v1196, %v63
    %v1201 = vmul.f32 %v1199, %v63
    %v1202 = vsub.f32 %v1192, %v1200
    %v1203 = vsub.f32 %v1193, %v1201
    %v1204 = vmul.f32 %v1202, %v1202
    %v1205 = vmul.f32 %v1203, %v1203
    %v1206 = vsel %vm50, %v1204, 0.0
    %1207 = vadd.xlane.f32.xlu0 %v1206
    %v1208 = vpop.xlane.xlu0 %1207
    %v1209 = vsel %vm50, %v1205, 0.0
    %1210 = vadd.xlane.f32.xlu0 %v1209
    %v1211 = vpop.xlane.xlu0 %1210
    %v1212 = vmul.f32 %v1208, %v63
    %v1213 = vmul.f32 %v1211, %v63
    %v1214 = vadd.f32 %v1212, 1e-06
    %v1215 = vadd.f32 %v1213, 1e-06
    %v1216 = vrsqrt.pop %v1214
    %v1217 = vrsqrt.pop %v1215
    %v1218 = vmul.f32 %v1202, %v1216
    %v1219 = vmul.f32 %v1203, %v1217
    %v1220 = vld [vmem:[%s7] sm:$0x1]
    %v1222 = vlaneseq
    %v1223 = vshrl.u32 %v1222, 7
    %v1224 = vsub.s32 0, %v1223
    %v1225 = vrot.slane %v1220, %v1224
    %v1227 = vmul.f32 %v1218, %v1225
    %v1228 = vmul.f32 %v1219, %v1225
    %v1229 = vld [vmem:[%s8] sm:$0x1]
    %v1231 = vlaneseq
    %v1232 = vshrl.u32 %v1231, 7
    %v1233 = vsub.s32 0, %v1232
    %v1234 = vrot.slane %v1229, %v1233
    %v1236 = vadd.f32 %v1227, %v1234
    %v1237 = vadd.f32 %v1228, %v1234
    %v1238 = vpack.c.bf16 %v1237, %v1236
    %v1239 = vld [vmem:[%s9] sm:$0xf]
    %v1240 = vld [vmem:[%s9 + $0x4] sm:$0xf]
    %v1241 = vld [vmem:[%s9 + $0x8] sm:$0xf]
    %v1242 = vld [vmem:[%s9 + $0xc] sm:$0xf]
    %v1243 = vld [vmem:[%s10] sm:$0x1]
    %v1245 = vlaneseq
    %v1246 = vshrl.u32 %v1245, 7
    %v1247 = vsub.s32 0, %v1246
    %v1248 = vrot.slane %v1243, %v1247
    %v1254 = vunpack.c.l.b16 %v1239
    %v1255 = vunpack.c.l.b16 %v1240
    %v1256 = vunpack.c.l.b16 %v1241
    %v1257 = vunpack.c.l.b16 %v1242
    %v1258 = vpack.c.b16 %v1255, %v1254
    %v1259 = vpack.c.b16 %v1257, %v1256
    %v1263 = vsel %vm50, %v1238, 0
    %1265 = vmatprep.subr.bf16.mxu0 0
    %1266 = vmatpush1.bf16.msra.mxu0 %v1258
    %1267 = vmatprep.subr.bf16.mxu0 0
    %1268 = vmatpush1.bf16.msra.mxu0 %v1259
    %1269 = vmatprep.subr.bf16.mxu0 0
    %1270 = vmatpush1.bf16.msra.mxu0 0
    %1271 = vmatprep.subr.bf16.mxu0 0
    %1272 = vmatpush1.bf16.msra.mxu0 0
    %1273 = vmatprep.subr.bf16.mxu0 0
    %1274 = vmatpush1.bf16.msra.mxu0 0
    %1275 = vmatprep.subr.bf16.mxu0 0
    %1276 = vmatpush1.bf16.msra.mxu0 0
    %1277 = vmatprep.subr.bf16.mxu0 0
    %1278 = vmatpush1.bf16.msra.mxu0 0
    %1279 = vmatprep.subr.bf16.mxu0 0
    %1280 = vmatpush1.bf16.msra.mxu0 0
    %1281 = vmatprep.subr.bf16.mxu0 0
    %1282 = vmatpush1.bf16.msra.mxu0 0
    %1283 = vmatprep.subr.bf16.mxu0 0
    %1284 = vmatpush1.bf16.msra.mxu0 0
    %1285 = vmatprep.subr.bf16.mxu0 0
    %1286 = vmatpush1.bf16.msra.mxu0 0
    %1287 = vmatprep.subr.bf16.mxu0 0
    %1288 = vmatpush1.bf16.msra.mxu0 0
    %1289 = vmatprep.subr.bf16.mxu0 0
    %1290 = vmatpush1.bf16.msra.mxu0 0
    %1291 = vmatprep.subr.bf16.mxu0 0
    %1292 = vmatpush1.bf16.msra.mxu0 0
    %1293 = vmatprep.subr.bf16.mxu0 0
    %1294 = vmatpush1.bf16.msra.mxu0 0
    %1295 = vmatprep.subr.bf16.mxu0 0
    %1296 = vmatpush1.bf16.msra.mxu0 0
    %1297 = vmatprep.mubr.bf16.mxu0 0
    %1298 = vmatmul.mubr.bf16.gmra.mrb[0].mxu0 %v1263
    %v1299 = vpop.f32.mrb[0].mxu0
    %v1300 = vadd.f32 %v1248, %v1299
    %v1301 = vpop.f32.mrb[0].mxu0
    %v1302 = vpop.f32.mrb[0].mxu0
    %v1303 = vadd.f32 %v1248, %v1302
    %v1304 = vpop.f32.mrb[0].mxu0
    %1305 = vdwg.mxu0
    %v1306 = vmul.f32 %v1300, 0.5
    %v1307 = vmul.f32 %v1303, 0.5
    %v1308 = vmul.f32 %v1300, 0.70710677
    %v1309 = vmul.f32 %v1303, 0.70710677
    %vm1310 = vcmp.ge.f32.partialorder %v1308, 0.0
    %vm1311 = vcmp.ge.f32.partialorder %v1309, 0.0
    %v1312 = vsel %vm1310, 1.0, -1.0
    %v1313 = vsel %vm1311, 1.0, -1.0
    %v1314 = vand.u32 2147483647, %v1308
    %v1315 = vand.u32 2147483647, %v1309
    %v1316 = vmul.f32 %v1314, 0.3275911
    %v1317 = vmul.f32 %v1315, 0.3275911
    %v1318 = vadd.f32 %v1316, 1.0
    %v1319 = vadd.f32 %v1317, 1.0
    %v1320 = vrcp.pop %v1318
    %v1321 = vmul.f32 1.0, %v1320
    %v1322 = vrcp.pop %v1319
    %v1323 = vmul.f32 1.0, %v1322
    %v1324 = vmul.f32 %v1321, 1.0614054
    %v1325 = vmul.f32 %v1323, 1.0614054
    %v1326 = vadd.f32 %v1324, -1.4531521
    %v1327 = vadd.f32 %v1325, -1.4531521
    %v1328 = vmul.f32 %v1326, %v1321
    %v1329 = vmul.f32 %v1327, %v1323
    %v1330 = vadd.f32 %v1328, 1.4214138
    %v1331 = vadd.f32 %v1329, 1.4214138
    %v1332 = vmul.f32 %v1330, %v1321
    %v1333 = vmul.f32 %v1331, %v1323
    %v1334 = vadd.f32 %v1332, -0.28449672
    %v1335 = vadd.f32 %v1333, -0.28449672
    %v1336 = vmul.f32 %v1334, %v1321
    %v1337 = vmul.f32 %v1335, %v1323
    %v1338 = vadd.f32 %v1336, 0.2548296
    %v1339 = vadd.f32 %v1337, 0.2548296
    %v1340 = vmul.f32 %v1338, %v1321
    %v1341 = vmul.f32 %v1339, %v1323
    %v1342 = vsub.f32 0.0, %v1314
    %v1343 = vsub.f32 0.0, %v1315
    %v1344 = vmul.f32 %v1342, %v1314
    %v1345 = vmul.f32 %v1343, %v1315
    %v1346 = vmul.f32 %v1344, 1.442695
    %v1347 = vpow.pop %v1346
    %v1348 = vmul.f32 %v1345, 1.442695
    %v1349 = vpow.pop %v1348
    %v1350 = vmul.f32 %v1340, %v1347
    %v1351 = vmul.f32 %v1341, %v1349
    %v1352 = vsub.f32 1.0, %v1350
    %v1353 = vsub.f32 1.0, %v1351
    %v1354 = vmul.f32 %v1312, %v1352
    %v1355 = vmul.f32 %v1313, %v1353
    %v1356 = vadd.f32 %v1354, 1.0
    %v1357 = vadd.f32 %v1355, 1.0
    %v1358 = vmul.f32 %v1306, %v1356
    %v1359 = vmul.f32 %v1307, %v1357
    %v1360 = vpack.c.bf16 %v1359, %v1358
    %v1361 = vld [vmem:[%s11] sm:$0xf]
    %v1362 = vld [vmem:[%s11 + $0x4] sm:$0xf]
    %v1363 = vld [vmem:[%s11 + $0x8] sm:$0xf]
    %v1364 = vld [vmem:[%s11 + $0xc] sm:$0xf]
    %v1365 = vld [vmem:[%s11 + $0x10] sm:$0xf]
    %v1366 = vld [vmem:[%s11 + $0x14] sm:$0xf]
    %v1367 = vld [vmem:[%s11 + $0x18] sm:$0xf]
    %v1368 = vld [vmem:[%s11 + $0x1c] sm:$0xf]
    %v1369 = vld [vmem:[%s11 + $0x20] sm:$0xf]
    %v1370 = vld [vmem:[%s11 + $0x24] sm:$0xf]
    %v1371 = vld [vmem:[%s11 + $0x28] sm:$0xf]
    %v1372 = vld [vmem:[%s11 + $0x2c] sm:$0xf]
    %v1373 = vld [vmem:[%s11 + $0x30] sm:$0xf]
    %v1374 = vld [vmem:[%s11 + $0x34] sm:$0xf]
    %v1375 = vld [vmem:[%s11 + $0x38] sm:$0xf]
    %v1376 = vld [vmem:[%s11 + $0x3c] sm:$0xf]
    %v1377 = vld [vmem:[%s12] sm:$0x1]
    %v1379 = vlaneseq
    %v1380 = vshrl.u32 %v1379, 7
    %v1381 = vsub.s32 0, %v1380
    %v1382 = vrot.slane %v1377, %v1381
    %v1400 = vunpack.c.l.b16 %v1361
    %v1401 = vunpack.c.l.b16 %v1362
    %v1402 = vunpack.c.l.b16 %v1363
    %v1403 = vunpack.c.l.b16 %v1364
    %v1404 = vunpack.c.l.b16 %v1365
    %v1405 = vunpack.c.l.b16 %v1366
    %v1406 = vunpack.c.l.b16 %v1367
    %v1407 = vunpack.c.l.b16 %v1368
    %v1408 = vunpack.c.l.b16 %v1369
    %v1409 = vunpack.c.l.b16 %v1370
    %v1410 = vunpack.c.l.b16 %v1371
    %v1411 = vunpack.c.l.b16 %v1372
    %v1412 = vunpack.c.l.b16 %v1373
    %v1413 = vunpack.c.l.b16 %v1374
    %v1414 = vunpack.c.l.b16 %v1375
    %v1415 = vunpack.c.l.b16 %v1376
    %v1416 = vpack.c.b16 %v1401, %v1400
    %v1417 = vpack.c.b16 %v1403, %v1402
    %v1418 = vpack.c.b16 %v1405, %v1404
    %v1419 = vpack.c.b16 %v1407, %v1406
    %v1420 = vpack.c.b16 %v1409, %v1408
    %v1421 = vpack.c.b16 %v1411, %v1410
    %v1422 = vpack.c.b16 %v1413, %v1412
    %v1423 = vpack.c.b16 %v1415, %v1414
    %1432 = vmatprep.subr.bf16.mxu0 0
    %1433 = vmatpush1.bf16.msra.mxu0 %v1416
    %1434 = vmatprep.subr.bf16.mxu0 0
    %1435 = vmatpush1.bf16.msra.mxu0 %v1417
    %1436 = vmatprep.subr.bf16.mxu0 0
    %1437 = vmatpush1.bf16.msra.mxu0 %v1418
    %1438 = vmatprep.subr.bf16.mxu0 0
    %1439 = vmatpush1.bf16.msra.mxu0 %v1419
    %1440 = vmatprep.subr.bf16.mxu0 0
    %1441 = vmatpush1.bf16.msra.mxu0 %v1420
    %1442 = vmatprep.subr.bf16.mxu0 0
    %1443 = vmatpush1.bf16.msra.mxu0 %v1421
    %1444 = vmatprep.subr.bf16.mxu0 0
    %1445 = vmatpush1.bf16.msra.mxu0 %v1422
    %1446 = vmatprep.subr.bf16.mxu0 0
    %1447 = vmatpush1.bf16.msra.mxu0 %v1423
    %1448 = vmatprep.subr.bf16.mxu0 0
    %1449 = vmatpush1.bf16.msra.mxu0 0
    %1450 = vmatprep.subr.bf16.mxu0 0
    %1451 = vmatpush1.bf16.msra.mxu0 0
    %1452 = vmatprep.subr.bf16.mxu0 0
    %1453 = vmatpush1.bf16.msra.mxu0 0
    %1454 = vmatprep.subr.bf16.mxu0 0
    %1455 = vmatpush1.bf16.msra.mxu0 0
    %1456 = vmatprep.subr.bf16.mxu0 0
    %1457 = vmatpush1.bf16.msra.mxu0 0
    %1458 = vmatprep.subr.bf16.mxu0 0
    %1459 = vmatpush1.bf16.msra.mxu0 0
    %1460 = vmatprep.subr.bf16.mxu0 0
    %1461 = vmatpush1.bf16.msra.mxu0 0
    %1462 = vmatprep.subr.bf16.mxu0 0
    %1463 = vmatpush1.bf16.msra.mxu0 0
    %1464 = vmatprep.mubr.bf16.mxu0 0
    %1465 = vmatmul.mubr.bf16.gmra.mrb[0].mxu0 %v1360
    %v1466 = vpop.f32.mrb[0].mxu0
    %v1467 = vadd.f32 %v1382, %v1466
    %v1468 = vpop.f32.mrb[0].mxu0
    %v1469 = vpop.f32.mrb[0].mxu0
    %v1470 = vadd.f32 %v1382, %v1469
    %v1471 = vpop.f32.mrb[0].mxu0
    %1472 = vdwg.mxu0
    %v1473 = vadd.f32 %v1192, %v1467
    %v1474 = vadd.f32 %v1193, %v1470
    %1475 = vst.msk [vmem:[#allocation2] sm:$0xff] %vm50, %v1473
    %1476 = vst.msk [vmem:[#allocation2 + $0x8] sm:$0xff] %vm50, %v1474
    // Predicated region
    $region54: #{tpu_custom_call.1} parent=1 // pred_check
      _
    $region55: #{tpu_custom_call.1} parent=1 // pred_check_branch
      %1478 = sbr.rel (0) target = $region57
    $region56: #{tpu_custom_call.1} parent=1 // pred_region
      %s1480 = ssub.s32 256, 256
      %1481 = vsyncadd [#allocation3], %s1480
      %s1482 = sshll.u32 [#allocation2], 4
      %s1483 = int_to_ptr.vmem [resolvable:$true] %s1482
      %1488 = dma.vmem_to_hbm [thread:$0]  %s1483, 256, %s13, [#allocation3], 128, 128, 8
    $region57: #{tpu_custom_call.1} parent=1 // pred_fallthru
      _
    // Predicated region
    $region58: #{tpu_custom_call.1} parent=1 // pred_check
      _
    $region59: #{tpu_custom_call.1} parent=1 // pred_check_branch
      %1490 = sbr.rel (0) target = $region61
    $region60: #{tpu_custom_call.1} parent=1 // pred_region
      %1491 = dma.done [#allocation3], 256
    $region61: #{tpu_custom_call.1} parent=1 // pred_fallthru
      _
    %1492 = vsyncpa [#allocation3], 1

// kernel: tpu_custom_call.1
$region0: #{tpu_custom_call.1}
  #allocation0 [shape = 'u32[]', space=smem, size = 0x4, offset = 0x4, fixed_abs, tag = 'smem constant byte address 0x4 - core index']
  #allocation1 [shape = 'u32[144,128]{1,0:T(1,128)}', space=vmem, size = 0x12000, scoped, tag = 'internal scratch']
  %s0 = inlined_call_operand.vmem [shape: f32[2,16,32], index: 0, kind: input, shape index: {}]
  %s1 = inlined_call_operand.vmem [shape: f32[1,32], index: 1, kind: input, shape index: {}]
  %s2 = inlined_call_operand.vmem [shape: f32[1,32], index: 2, kind: input, shape index: {}]
  %s3 = inlined_call_operand.vmem [shape: bf16[32,96], index: 3, kind: input, shape index: {}]
  %s4 = inlined_call_operand.vmem [shape: bf16[1,96], index: 4, kind: input, shape index: {}]
  %s5 = inlined_call_operand.vmem [shape: bf16[32,32], index: 5, kind: input, shape index: {}]
  %s6 = inlined_call_operand.vmem [shape: f32[1,32], index: 6, kind: input, shape index: {}]
  %s7 = inlined_call_operand.vmem [shape: f32[1,32], index: 7, kind: input, shape index: {}]
  %s8 = inlined_call_operand.vmem [shape: f32[1,32], index: 8, kind: input, shape index: {}]
  %s9 = inlined_call_operand.vmem [shape: bf16[32,128], index: 9, kind: input, shape index: {}]
  %s10 = inlined_call_operand.vmem [shape: f32[1,128], index: 10, kind: input, shape index: {}]
  %s11 = inlined_call_operand.vmem [shape: bf16[128,32], index: 11, kind: input, shape index: {}]
  %s12 = inlined_call_operand.vmem [shape: f32[1,32], index: 12, kind: input, shape index: {}]
  %s13 = inlined_call_operand.hbm [shape: f32[2,8,32], index: 13, kind: output, shape index: {}]
  %s14 = sld [smem:[#allocation0]]
  $region62: #{tpu_custom_call.1} parent=0
    _
  %s16 = ssub.s32 1, %s14
  %s17 = scalar_select 0, %s16, %s14
  $region1: #{tpu_custom_call.1} parent=0
    #allocation2 [shape = 'u8[8192]{0}', space=vmem, size = 0x2000, scoped, tag = 'output window, operand 0, single buffered']
    #allocation3 [shape = 's32[1]{0}', space=sflag, size = 0x4, scoped, tag = 'scoped memory for tpu_custom_call.1']
    %18 = vsyncpa [#allocation3], 0
    // Predicated region
    $region2: #{tpu_custom_call.1} parent=1 // pred_check
      _
    $region3: #{tpu_custom_call.1} parent=1 // pred_check_branch
      %20 = sbr.rel (0) target = $region5
    $region4: #{tpu_custom_call.1} parent=1 // pred_region
      _
    $region5: #{tpu_custom_call.1} parent=1 // pred_fallthru
      _
    // Predicated region
    $region6: #{tpu_custom_call.1} parent=1 // pred_check
      _
    $region7: #{tpu_custom_call.1} parent=1 // pred_check_branch
      %22 = sbr.rel (0) target = $region9
    $region8: #{tpu_custom_call.1} parent=1 // pred_region
      _
    $region9: #{tpu_custom_call.1} parent=1 // pred_fallthru
      _
    // Predicated region
    $region10: #{tpu_custom_call.1} parent=1 // pred_check
      _
    $region11: #{tpu_custom_call.1} parent=1 // pred_check_branch
      %24 = sbr.rel (0) target = $region13
    $region12: #{tpu_custom_call.1} parent=1 // pred_region
      _
    $region13: #{tpu_custom_call.1} parent=1 // pred_fallthru
      _
    // Predicated region
    $region14: #{tpu_custom_call.1} parent=1 // pred_check
      _
    $region15: #{tpu_custom_call.1} parent=1 // pred_check_branch
      %26 = sbr.rel (0) target = $region17
    $region16: #{tpu_custom_call.1} parent=1 // pred_region
      _
    $region17: #{tpu_custom_call.1} parent=1 // pred_fallthru
      _
    // Predicated region
    $region18: #{tpu_custom_call.1} parent=1 // pred_check
      _
    $region19: #{tpu_custom_call.1} parent=1 // pred_check_branch
      %28 = sbr.rel (0) target = $region21
    $region20: #{tpu_custom_call.1} parent=1 // pred_region
      _
    $region21: #{tpu_custom_call.1} parent=1 // pred_fallthru
      _
    // Predicated region
    $region22: #{tpu_custom_call.1} parent=1 // pred_check
      _
    $region23: #{tpu_custom_call.1} parent=1 // pred_check_branch
      %30 = sbr.rel (0) target = $region25
    $region24: #{tpu_custom_call.1} parent=1 // pred_region
      _
    $region25: #{tpu_custom_call.1} parent=1 // pred_fallthru
      _
    // Predicated region
    $region26: #{tpu_custom_call.1} parent=1 // pred_check
      _
    $region27: #{tpu_custom_call.1} parent=1 // pred_check_branch
      %32 = sbr.rel (0) target = $region29
    $region28: #{tpu_custom_call.1} parent=1 // pred_region
      _
    $region29: #{tpu_custom_call.1} parent=1 // pred_fallthru
      _
    // Predicated region
    $region30: #{tpu_custom_call.1} parent=1 // pred_check
      _
    $region31: #{tpu_custom_call.1} parent=1 // pred_check_branch
      %34 = sbr.rel (0) target = $region33
    $region32: #{tpu_custom_call.1} parent=1 // pred_region
      _
    $region33: #{tpu_custom_call.1} parent=1 // pred_fallthru
      _
    // Predicated region
    $region34: #{tpu_custom_call.1} parent=1 // pred_check
      _
    $region35: #{tpu_custom_call.1} parent=1 // pred_check_branch
      %36 = sbr.rel (0) target = $region37
    $region36: #{tpu_custom_call.1} parent=1 // pred_region
      _
    $region37: #{tpu_custom_call.1} parent=1 // pred_fallthru
      _
    // Predicated region
    $region38: #{tpu_custom_call.1} parent=1 // pred_check
      _
    $region39: #{tpu_custom_call.1} parent=1 // pred_check_branch
      %38 = sbr.rel (0) target = $region41
    $region40: #{tpu_custom_call.1} parent=1 // pred_region
      _
    $region41: #{tpu_custom_call.1} parent=1 // pred_fallthru
      _
    // Predicated region
    $region42: #{tpu_custom_call.1} parent=1 // pred_check
      _
    $region43: #{tpu_custom_call.1} parent=1 // pred_check_branch
      %40 = sbr.rel (0) target = $region45
    $region44: #{tpu_custom_call.1} parent=1 // pred_region
      _
    $region45: #{tpu_custom_call.1} parent=1 // pred_fallthru
      _
    // Predicated region
    $region46: #{tpu_custom_call.1} parent=1 // pred_check
      _
    $region47: #{tpu_custom_call.1} parent=1 // pred_check_branch
      %42 = sbr.rel (0) target = $region49
    $region48: #{tpu_custom_call.1} parent=1 // pred_region
      _
    $region49: #{tpu_custom_call.1} parent=1 // pred_fallthru
      _
    // Predicated region
    $region50: #{tpu_custom_call.1} parent=1 // pred_check
      _
    $region51: #{tpu_custom_call.1} parent=1 // pred_check_branch
      %44 = sbr.rel (0) target = $region53
    $region52: #{tpu_custom_call.1} parent=1 // pred_region
      _
    $region53: #{tpu_custom_call.1} parent=1 // pred_fallthru
      _
    %v46 = vld [vmem:[%s0] sm:$0xff]
    %v47 = vld [vmem:[%s0 + $0x8] sm:$0xff]
    %v48 = vld [vmem:[%s0 + $0x10] sm:$0xff]
    %v49 = vld [vmem:[%s0 + $0x18] sm:$0xff]
    %vm50 = vcmask 261120
    %v51 = vsel %vm50, %v46, 0.0
    %52 = vadd.xlane.f32.xlu0 %v51
    %v53 = vpop.xlane.xlu0 %52
    %v54 = vsel %vm50, %v47, 0.0
    %55 = vadd.xlane.f32.xlu0 %v54
    %v56 = vpop.xlane.xlu0 %55
    %v57 = vsel %vm50, %v48, 0.0
    %58 = vadd.xlane.f32.xlu0 %v57
    %v59 = vpop.xlane.xlu0 %58
    %v60 = vsel %vm50, %v49, 0.0
    %61 = vadd.xlane.f32.xlu0 %v60
    %v62 = vpop.xlane.xlu0 %61
    %v63 = vrcp.pop 32.0
    %v64 = vmul.f32 %v53, %v63
    %v65 = vmul.f32 %v56, %v63
    %v66 = vmul.f32 %v59, %v63
    %v67 = vmul.f32 %v62, %v63
    %v68 = vsub.f32 %v46, %v64
    %v69 = vsub.f32 %v47, %v65
    %v70 = vsub.f32 %v48, %v66
    %v71 = vsub.f32 %v49, %v67
    %v72 = vmul.f32 %v68, %v68
    %v73 = vmul.f32 %v69, %v69
    %v74 = vmul.f32 %v70, %v70
    %v75 = vmul.f32 %v71, %v71
    %v76 = vsel %vm50, %v72, 0.0
    %77 = vadd.xlane.f32.xlu0 %v76
    %v78 = vpop.xlane.xlu0 %77
    %v79 = vsel %vm50, %v73, 0.0
    %80 = vadd.xlane.f32.xlu0 %v79
    %v81 = vpop.xlane.xlu0 %80
    %v82 = vsel %vm50, %v74, 0.0
    %83 = vadd.xlane.f32.xlu0 %v82
    %v84 = vpop.xlane.xlu0 %83
    %v85 = vsel %vm50, %v75, 0.0
    %86 = vadd.xlane.f32.xlu0 %v85
    %v87 = vpop.xlane.xlu0 %86
    %v88 = vmul.f32 %v78, %v63
    %v89 = vmul.f32 %v81, %v63
    %v90 = vmul.f32 %v84, %v63
    %v91 = vmul.f32 %v87, %v63
    %v92 = vadd.f32 %v88, 1e-06
    %v93 = vadd.f32 %v89, 1e-06
    %v94 = vadd.f32 %v90, 1e-06
    %v95 = vadd.f32 %v91, 1e-06
    %v96 = vrsqrt.pop %v92
    %v97 = vrsqrt.pop %v93
    %v98 = vrsqrt.pop %v94
    %v99 = vrsqrt.pop %v95
    %v100 = vmul.f32 %v68, %v96
    %v101 = vmul.f32 %v69, %v97
    %v102 = vmul.f32 %v70, %v98
    %v103 = vmul.f32 %v71, %v99
    %v104 = vld [vmem:[%s1] sm:$0x1]
    %v106 = vlaneseq
    %v107 = vshrl.u32 %v106, 7
    %v108 = vsub.s32 0, %v107
    %v109 = vrot.slane %v104, %v108
    %v111 = vmul.f32 %v100, %v109
    %v112 = vmul.f32 %v101, %v109
    %v113 = vmul.f32 %v102, %v109
    %v114 = vmul.f32 %v103, %v109
    %v115 = vld [vmem:[%s2] sm:$0x1]
    %v117 = vlaneseq
    %v118 = vshrl.u32 %v117, 7
    %v119 = vsub.s32 0, %v118
    %v120 = vrot.slane %v115, %v119
    %v122 = vadd.f32 %v111, %v120
    %v123 = vadd.f32 %v112, %v120
    %v124 = vadd.f32 %v113, %v120
    %v125 = vadd.f32 %v114, %v120
    %v126 = vpack.c.bf16 %v123, %v122
    %v127 = vpack.c.bf16 %v125, %v124
    %v128 = vld [vmem:[%s3] sm:$0xf]
    %v129 = vld [vmem:[%s3 + $0x4] sm:$0xf]
    %v130 = vld [vmem:[%s3 + $0x8] sm:$0xf]
    %v131 = vld [vmem:[%s3 + $0xc] sm:$0xf]
    %v136 = vunpack.c.l.b16 %v128
    %v137 = vunpack.c.l.b16 %v129
    %v138 = vunpack.c.l.b16 %v130
    %v139 = vunpack.c.l.b16 %v131
    %v140 = vpack.c.b16 %v137, %v136
    %v141 = vpack.c.b16 %v139, %v138
    %v145 = vsel %vm50, %v126, 0
    %v148 = vsel %vm50, %v127, 0
    %150 = vmatprep.subr.bf16.mxu0 0
    %151 = vmatpush1.bf16.msra.mxu0 %v140
    %152 = vmatprep.subr.bf16.mxu0 0
    %153 = vmatpush1.bf16.msra.mxu0 %v141
    %154 = vmatprep.subr.bf16.mxu0 0
    %155 = vmatpush1.bf16.msra.mxu0 0
    %156 = vmatprep.subr.bf16.mxu0 0
    %157 = vmatpush1.bf16.msra.mxu0 0
    %158 = vmatprep.subr.bf16.mxu0 0
    %159 = vmatpush1.bf16.msra.mxu0 0
    %160 = vmatprep.subr.bf16.mxu0 0
    %161 = vmatpush1.bf16.msra.mxu0 0
    %162 = vmatprep.subr.bf16.mxu0 0
    %163 = vmatpush1.bf16.msra.mxu0 0
    %164 = vmatprep.subr.bf16.mxu0 0
    %165 = vmatpush1.bf16.msra.mxu0 0
    %166 = vmatprep.subr.bf16.mxu0 0
    %167 = vmatpush1.bf16.msra.mxu0 0
    %168 = vmatprep.subr.bf16.mxu0 0
    %169 = vmatpush1.bf16.msra.mxu0 0
    %170 = vmatprep.subr.bf16.mxu0 0
    %171 = vmatpush1.bf16.msra.mxu0 0
    %172 = vmatprep.subr.bf16.mxu0 0
    %173 = vmatpush1.bf16.msra.mxu0 0
    %174 = vmatprep.subr.bf16.mxu0 0
    %175 = vmatpush1.bf16.msra.mxu0 0
    %176 = vmatprep.subr.bf16.mxu0 0
    %177 = vmatpush1.bf16.msra.mxu0 0
    %178 = vmatprep.subr.bf16.mxu0 0
    %179 = vmatpush1.bf16.msra.mxu0 0
    %180 = vmatprep.subr.bf16.mxu0 0
    %181 = vmatpush1.bf16.msra.mxu0 0
    %182 = vmatprep.mubr.bf16.mxu0 0
    %183 = vmatmul.mubr.bf16.gmra.mrb[0].mxu0 %v145
    %v184 = vpop.f32.mrb[0].mxu0
    %v185 = vadd.f32 0.0, %v184
    %v186 = vpop.f32.mrb[0].mxu0
    %v187 = vpop.f32.mrb[0].mxu0
    %v188 = vadd.f32 0.0, %v187
    %v189 = vpop.f32.mrb[0].mxu0
    %190 = vmatprep.mubr.bf16.mxu0 0
    %191 = vmatmul.mubr.bf16.gmra.mrb[0].mxu0 %v148
    %v192 = vpop.f32.mrb[0].mxu0
    %v193 = vadd.f32 0.0, %v192
    %v194 = vpop.f32.mrb[0].mxu0
    %v195 = vpop.f32.mrb[0].mxu0
    %v196 = vadd.f32 0.0, %v195
    %v197 = vpop.f32.mrb[0].mxu0
    %198 = vdwg.mxu0
    %v199 = vpack.c.bf16 %v188, %v185
    %v200 = vpack.c.bf16 %v196, %v193
    %v201 = vld [vmem:[%s4] sm:$0x1]
    %v203 = vpack.i.b16 %v201, %v201
    %v205 = vlaneseq
    %v206 = vshrl.u32 %v205, 7
    %v207 = vsub.s32 0, %v206
    %v208 = vrot.slane %v203, %v207
    %v209 = vadd.bf16 %v199, %v208
    %v210 = vadd.bf16 %v200, %v208
    %v211 = vlaneseq
    %v212 = vand.u32 %v211, 127
    %vm213 = vcmp.lt.s32.totalorder %v212, 9
    %v214 = vsel %vm213, 0.0, -1e+30
    %216 = vrot.lane.b32.xlu0 %v209, 96
    %v217 = vpop.permute.xlu0 %216
    %vm218 = vcmask 64512
    %v220 = vsel %vm218, %v209, 0
    %v223 = vsel %vm218, %v217, 0
    %225 = vmatprep.subr.bf16.mxu0 0
    %226 = vmatpush1.bf16.xpose.msra.mxu0 %v223
    %227 = vmatprep.subr.bf16.mxu0 0
    %228 = vmatpush1.bf16.xpose.msra.mxu0 0
    %229 = vmatprep.subr.bf16.mxu0 0
    %230 = vmatpush1.bf16.xpose.msra.mxu0 0
    %231 = vmatprep.subr.bf16.mxu0 0
    %232 = vmatpush1.bf16.xpose.msra.mxu0 0
    %233 = vmatprep.subr.bf16.mxu0 0
    %234 = vmatpush1.bf16.xpose.msra.mxu0 0
    %235 = vmatprep.subr.bf16.mxu0 0
    %236 = vmatpush1.bf16.xpose.msra.mxu0 0
    %237 = vmatprep.subr.bf16.mxu0 0
    %238 = vmatpush1.bf16.xpose.msra.mxu0 0
    %239 = vmatprep.subr.bf16.mxu0 0
    %240 = vmatpush1.bf16.xpose.msra.mxu0 0
    %241 = vmatprep.subr.bf16.mxu0 0
    %242 = vmatpush1.bf16.xpose.msra.mxu0 0
    %243 = vmatprep.subr.bf16.mxu0 0
    %244 = vmatpush1.bf16.xpose.msra.mxu0 0
    %245 = vmatprep.subr.bf16.mxu0 0
    %246 = vmatpush1.bf16.xpose.msra.mxu0 0
    %247 = vmatprep.subr.bf16.mxu0 0
    %248 = vmatpush1.bf16.xpose.msra.mxu0 0
    %249 = vmatprep.subr.bf16.mxu0 0
    %250 = vmatpush1.bf16.xpose.msra.mxu0 0
    %251 = vmatprep.subr.bf16.mxu0 0
    %252 = vmatpush1.bf16.xpose.msra.mxu0 0
    %253 = vmatprep.subr.bf16.mxu0 0
    %254 = vmatpush1.bf16.xpose.msra.mxu0 0
    %255 = vmatprep.subr.bf16.mxu0 0
    %256 = vmatpush1.bf16.xpose.msra.mxu0 0
    %257 = vmatprep.mubr.bf16.mxu0 0
    %258 = vmatmul.mubr.bf16.gmra.mrb[0].mxu0 %v220
    %v259 = vpop.f32.mrb[0].mxu0
    %v260 = vadd.f32 %v214, %v259
    %v261 = vpop.f32.mrb[0].mxu0
    %v262 = vpop.f32.mrb[0].mxu0
    %v263 = vpop.f32.mrb[0].mxu0
    %264 = vdwg.mxu0
    %266 = vrot.lane.b32.xlu0 %v210, 96
    %v267 = vpop.permute.xlu0 %266
    %v269 = vsel %vm218, %v210, 0
    %v272 = vsel %vm218, %v267, 0
    %274 = vmatprep.subr.bf16.mxu0 0
    %275 = vmatpush1.bf16.xpose.msra.mxu0 %v272
    %276 = vmatprep.subr.bf16.mxu0 0
    %277 = vmatpush1.bf16.xpose.msra.mxu0 0
    %278 = vmatprep.subr.bf16.mxu0 0
    %279 = vmatpush1.bf16.xpose.msra.mxu0 0
    %280 = vmatprep.subr.bf16.mxu0 0
    %281 = vmatpush1.bf16.xpose.msra.mxu0 0
    %282 = vmatprep.subr.bf16.mxu0 0
    %283 = vmatpush1.bf16.xpose.msra.mxu0 0
    %284 = vmatprep.subr.bf16.mxu0 0
    %285 = vmatpush1.bf16.xpose.msra.mxu0 0
    %286 = vmatprep.subr.bf16.mxu0 0
    %287 = vmatpush1.bf16.xpose.msra.mxu0 0
    %288 = vmatprep.subr.bf16.mxu0 0
    %289 = vmatpush1.bf16.xpose.msra.mxu0 0
    %290 = vmatprep.subr.bf16.mxu0 0
    %291 = vmatpush1.bf16.xpose.msra.mxu0 0
    %292 = vmatprep.subr.bf16.mxu0 0
    %293 = vmatpush1.bf16.xpose.msra.mxu0 0
    %294 = vmatprep.subr.bf16.mxu0 0
    %295 = vmatpush1.bf16.xpose.msra.mxu0 0
    %296 = vmatprep.subr.bf16.mxu0 0
    %297 = vmatpush1.bf16.xpose.msra.mxu0 0
    %298 = vmatprep.subr.bf16.mxu0 0
    %299 = vmatpush1.bf16.xpose.msra.mxu0 0
    %300 = vmatprep.subr.bf16.mxu0 0
    %301 = vmatpush1.bf16.xpose.msra.mxu0 0
    %302 = vmatprep.subr.bf16.mxu0 0
    %303 = vmatpush1.bf16.xpose.msra.mxu0 0
    %304 = vmatprep.subr.bf16.mxu0 0
    %305 = vmatpush1.bf16.xpose.msra.mxu0 0
    %306 = vmatprep.mubr.bf16.mxu0 0
    %307 = vmatmul.mubr.bf16.gmra.mrb[0].mxu0 %v269
    %v308 = vpop.f32.mrb[0].mxu0
    %v309 = vadd.f32 %v214, %v308
    %v310 = vpop.f32.mrb[0].mxu0
    %v311 = vpop.f32.mrb[0].mxu0
    %v312 = vpop.f32.mrb[0].mxu0
    %313 = vdwg.mxu0
    %vm314 = vcmask 130048
    %v315 = vsel %vm314, %v260, -inf
    %316 = vmax.xlane.f32.xlu0 %v315
    %v317 = vpop.xlane.xlu0 %316
    %v318 = vsel %vm314, %v309, -inf
    %319 = vmax.xlane.f32.xlu0 %v318
    %v320 = vpop.xlane.xlu0 %319
    %v321 = vsub.f32 %v260, %v317
    %v322 = vsub.f32 %v309, %v320
    %v323 = vmul.f32 %v321, 1.442695
    %v324 = vpow.pop %v323
    %v325 = vmul.f32 %v322, 1.442695
    %v326 = vpow.pop %v325
    %v327 = vsel %vm314, %v324, 0.0
    %328 = vadd.xlane.f32.xlu0 %v327
    %v329 = vpop.xlane.xlu0 %328
    %v330 = vsel %vm314, %v326, 0.0
    %331 = vadd.xlane.f32.xlu0 %v330
    %v332 = vpop.xlane.xlu0 %331
    %v333 = vrcp.pop %v329
    %v334 = vrcp.pop %v332
    %v335 = vmul.f32 %v324, %v333
    %v336 = vmul.f32 %v326, %v334
    %v337 = vpack.c.bf16 %v335, %v335
    %v338 = vpack.c.bf16 %v336, %v336
    %339 = vrot.lane.b32.xlu0 %v209, 64
    %v340 = vpop.permute.xlu0 %339
    %v343 = vsel %vm314, %v337, 0
    %345 = vmatprep.subr.bf16.mxu0 0
    %346 = vmatpush1.bf16.msra.mxu0 %v340
    %347 = vmatprep.subr.bf16.mxu0 0
    %348 = vmatpush1.bf16.msra.mxu0 0
    %349 = vmatprep.subr.bf16.mxu0 0
    %350 = vmatpush1.bf16.msra.mxu0 0
    %351 = vmatprep.subr.bf16.mxu0 0
    %352 = vmatpush1.bf16.msra.mxu0 0
    %353 = vmatprep.subr.bf16.mxu0 0
    %354 = vmatpush1.bf16.msra.mxu0 0
    %355 = vmatprep.subr.bf16.mxu0 0
    %356 = vmatpush1.bf16.msra.mxu0 0
    %357 = vmatprep.subr.bf16.mxu0 0
    %358 = vmatpush1.bf16.msra.mxu0 0
    %359 = vmatprep.subr.bf16.mxu0 0
    %360 = vmatpush1.bf16.msra.mxu0 0
    %361 = vmatprep.subr.bf16.mxu0 0
    %362 = vmatpush1.bf16.msra.mxu0 0
    %363 = vmatprep.subr.bf16.mxu0 0
    %364 = vmatpush1.bf16.msra.mxu0 0
    %365 = vmatprep.subr.bf16.mxu0 0
    %366 = vmatpush1.bf16.msra.mxu0 0
    %367 = vmatprep.subr.bf16.mxu0 0
    %368 = vmatpush1.bf16.msra.mxu0 0
    %369 = vmatprep.subr.bf16.mxu0 0
    %370 = vmatpush1.bf16.msra.mxu0 0
    %371 = vmatprep.subr.bf16.mxu0 0
    %372 = vmatpush1.bf16.msra.mxu0 0
    %373 = vmatprep.subr.bf16.mxu0 0
    %374 = vmatpush1.bf16.msra.mxu0 0
    %375 = vmatprep.subr.bf16.mxu0 0
    %376 = vmatpush1.bf16.msra.mxu0 0
    %377 = vmatprep.mubr.bf16.mxu0 0
    %378 = vmatmul.mubr.bf16.gmra.mrb[0].mxu0 %v343
    %v379 = vpop.f32.mrb[0].mxu0
    %v380 = vadd.f32 0.0, %v379
    %v381 = vpop.f32.mrb[0].mxu0
    %v382 = vpop.f32.mrb[0].mxu0
    %v383 = vpop.f32.mrb[0].mxu0
    %384 = vdwg.mxu0
    %385 = vrot.lane.b32.xlu0 %v210, 64
    %v386 = vpop.permute.xlu0 %385
    %v389 = vsel %vm314, %v338, 0
    %391 = vmatprep.subr.bf16.mxu0 0
    %392 = vmatpush1.bf16.msra.mxu0 %v386
    %393 = vmatprep.subr.bf16.mxu0 0
    %394 = vmatpush1.bf16.msra.mxu0 0
    %395 = vmatprep.subr.bf16.mxu0 0
    %396 = vmatpush1.bf16.msra.mxu0 0
    %397 = vmatprep.subr.bf16.mxu0 0
    %398 = vmatpush1.bf16.msra.mxu0 0
    %399 = vmatprep.subr.bf16.mxu0 0
    %400 = vmatpush1.bf16.msra.mxu0 0
    %401 = vmatprep.subr.bf16.mxu0 0
    %402 = vmatpush1.bf16.msra.mxu0 0
    %403 = vmatprep.subr.bf16.mxu0 0
    %404 = vmatpush1.bf16.msra.mxu0 0
    %405 = vmatprep.subr.bf16.mxu0 0
    %406 = vmatpush1.bf16.msra.mxu0 0
    %407 = vmatprep.subr.bf16.mxu0 0
    %408 = vmatpush1.bf16.msra.mxu0 0
    %409 = vmatprep.subr.bf16.mxu0 0
    %410 = vmatpush1.bf16.msra.mxu0 0
    %411 = vmatprep.subr.bf16.mxu0 0
    %412 = vmatpush1.bf16.msra.mxu0 0
    %413 = vmatprep.subr.bf16.mxu0 0
    %414 = vmatpush1.bf16.msra.mxu0 0
    %415 = vmatprep.subr.bf16.mxu0 0
    %416 = vmatpush1.bf16.msra.mxu0 0
    %417 = vmatprep.subr.bf16.mxu0 0
    %418 = vmatpush1.bf16.msra.mxu0 0
    %419 = vmatprep.subr.bf16.mxu0 0
    %420 = vmatpush1.bf16.msra.mxu0 0
    %421 = vmatprep.subr.bf16.mxu0 0
    %422 = vmatpush1.bf16.msra.mxu0 0
    %423 = vmatprep.mubr.bf16.mxu0 0
    %424 = vmatmul.mubr.bf16.gmra.mrb[0].mxu0 %v389
    %v425 = vpop.f32.mrb[0].mxu0
    %v426 = vadd.f32 0.0, %v425
    %v427 = vpop.f32.mrb[0].mxu0
    %v428 = vpop.f32.mrb[0].mxu0
    %v429 = vpop.f32.mrb[0].mxu0
    %430 = vdwg.mxu0
    %v431 = vpack.c.bf16 %v380, %v380
    %v432 = vpack.c.bf16 %v426, %v426
    %433 = vrot.lane.b32.xlu0 %v209, 120
    %v434 = vpop.permute.xlu0 %433
    %435 = vrot.lane.b32.xlu0 %v209, 88
    %v436 = vpop.permute.xlu0 %435
    %v438 = vsel %vm218, %v434, 0
    %v441 = vsel %vm218, %v436, 0
    %443 = vmatprep.subr.bf16.mxu0 0
    %444 = vmatpush1.bf16.xpose.msra.mxu0 %v441
    %445 = vmatprep.subr.bf16.mxu0 0
    %446 = vmatpush1.bf16.xpose.msra.mxu0 0
    %447 = vmatprep.subr.bf16.mxu0 0
    %448 = vmatpush1.bf16.xpose.msra.mxu0 0
    %449 = vmatprep.subr.bf16.mxu0 0
    %450 = vmatpush1.bf16.xpose.msra.mxu0 0
    %451 = vmatprep.subr.bf16.mxu0 0
    %452 = vmatpush1.bf16.xpose.msra.mxu0 0
    %453 = vmatprep.subr.bf16.mxu0 0
    %454 = vmatpush1.bf16.xpose.msra.mxu0 0
    %455 = vmatprep.subr.bf16.mxu0 0
    %456 = vmatpush1.bf16.xpose.msra.mxu0 0
    %457 = vmatprep.subr.bf16.mxu0 0
    %458 = vmatpush1.bf16.xpose.msra.mxu0 0
    %459 = vmatprep.subr.bf16.mxu0 0
    %460 = vmatpush1.bf16.xpose.msra.mxu0 0
    %461 = vmatprep.subr.bf16.mxu0 0
    %462 = vmatpush1.bf16.xpose.msra.mxu0 0
    %463 = vmatprep.subr.bf16.mxu0 0
    %464 = vmatpush1.bf16.xpose.msra.mxu0 0
    %465 = vmatprep.subr.bf16.mxu0 0
    %466 = vmatpush1.bf16.xpose.msra.mxu0 0
    %467 = vmatprep.subr.bf16.mxu0 0
    %468 = vmatpush1.bf16.xpose.msra.mxu0 0
    %469 = vmatprep.subr.bf16.mxu0 0
    %470 = vmatpush1.bf16.xpose.msra.mxu0 0
    %471 = vmatprep.subr.bf16.mxu0 0
    %472 = vmatpush1.bf16.xpose.msra.mxu0 0
    %473 = vmatprep.subr.bf16.mxu0 0
    %474 = vmatpush1.bf16.xpose.msra.mxu0 0
    %475 = vmatprep.mubr.bf16.mxu0 0
    %476 = vmatmul.mubr.bf16.gmra.mrb[0].mxu0 %v438
    %v477 = vpop.f32.mrb[0].mxu0
    %v478 = vadd.f32 %v214, %v477
    %v479 = vpop.f32.mrb[0].mxu0
    %v480 = vpop.f32.mrb[0].mxu0
    %v481 = vpop.f32.mrb[0].mxu0
    %482 = vdwg.mxu0
    %483 = vrot.lane.b32.xlu0 %v210, 120
    %v484 = vpop.permute.xlu0 %483
    %485 = vrot.lane.b32.xlu0 %v210, 88
    %v486 = vpop.permute.xlu0 %485
    %v488 = vsel %vm218, %v484, 0
    %v491 = vsel %vm218, %v486, 0
    %493 = vmatprep.subr.bf16.mxu0 0
    %494 = vmatpush1.bf16.xpose.msra.mxu0 %v491
    %495 = vmatprep.subr.bf16.mxu0 0
    %496 = vmatpush1.bf16.xpose.msra.mxu0 0
    %497 = vmatprep.subr.bf16.mxu0 0
    %498 = vmatpush1.bf16.xpose.msra.mxu0 0
    %499 = vmatprep.subr.bf16.mxu0 0
    %500 = vmatpush1.bf16.xpose.msra.mxu0 0
    %501 = vmatprep.subr.bf16.mxu0 0
    %502 = vmatpush1.bf16.xpose.msra.mxu0 0
    %503 = vmatprep.subr.bf16.mxu0 0
    %504 = vmatpush1.bf16.xpose.msra.mxu0 0
    %505 = vmatprep.subr.bf16.mxu0 0
    %506 = vmatpush1.bf16.xpose.msra.mxu0 0
    %507 = vmatprep.subr.bf16.mxu0 0
    %508 = vmatpush1.bf16.xpose.msra.mxu0 0
    %509 = vmatprep.subr.bf16.mxu0 0
    %510 = vmatpush1.bf16.xpose.msra.mxu0 0
    %511 = vmatprep.subr.bf16.mxu0 0
    %512 = vmatpush1.bf16.xpose.msra.mxu0 0
    %513 = vmatprep.subr.bf16.mxu0 0
    %514 = vmatpush1.bf16.xpose.msra.mxu0 0
    %515 = vmatprep.subr.bf16.mxu0 0
    %516 = vmatpush1.bf16.xpose.msra.mxu0 0
    %517 = vmatprep.subr.bf16.mxu0 0
    %518 = vmatpush1.bf16.xpose.msra.mxu0 0
    %519 = vmatprep.subr.bf16.mxu0 0
    %520 = vmatpush1.bf16.xpose.msra.mxu0 0
    %521 = vmatprep.subr.bf16.mxu0 0
    %522 = vmatpush1.bf16.xpose.msra.mxu0 0
    %523 = vmatprep.subr.bf16.mxu0 0
    %524 = vmatpush1.bf16.xpose.msra.mxu0 0
    %525 = vmatprep.mubr.bf16.mxu0 0
    %526 = vmatmul.mubr.bf16.gmra.mrb[0].mxu0 %v488
    %v527 = vpop.f32.mrb[0].mxu0
    %v528 = vadd.f32 %v214, %v527
    %v529 = vpop.f32.mrb[0].mxu0
    %v530 = vpop.f32.mrb[0].mxu0
    %v531 = vpop.f32.mrb[0].mxu0
    %532 = vdwg.mxu0
    %v533 = vsel %vm314, %v478, -inf
    %534 = vmax.xlane.f32.xlu0 %v533
    %v535 = vpop.xlane.xlu0 %534
    %v536 = vsel %vm314, %v528, -inf
    %537 = vmax.xlane.f32.xlu0 %v536
    %v538 = vpop.xlane.xlu0 %537
    %v539 = vsub.f32 %v478, %v535
    %v540 = vsub.f32 %v528, %v538
    %v541 = vmul.f32 %v539, 1.442695
    %v542 = vpow.pop %v541
    %v543 = vmul.f32 %v540, 1.442695
    %v544 = vpow.pop %v543
    %v545 = vsel %vm314, %v542, 0.0
    %546 = vadd.xlane.f32.xlu0 %v545
    %v547 = vpop.xlane.xlu0 %546
    %v548 = vsel %vm314, %v544, 0.0
    %549 = vadd.xlane.f32.xlu0 %v548
    %v550 = vpop.xlane.xlu0 %549
    %v551 = vrcp.pop %v547
    %v552 = vrcp.pop %v550
    %v553 = vmul.f32 %v542, %v551
    %v554 = vmul.f32 %v544, %v552
    %v555 = vpack.c.bf16 %v553, %v553
    %v556 = vpack.c.bf16 %v554, %v554
    %557 = vrot.lane.b32.xlu0 %v209, 56
    %v558 = vpop.permute.xlu0 %557
    %v561 = vsel %vm314, %v555, 0
    %563 = vmatprep.subr.bf16.mxu0 0
    %564 = vmatpush1.bf16.msra.mxu0 %v558
    %565 = vmatprep.subr.bf16.mxu0 0
    %566 = vmatpush1.bf16.msra.mxu0 0
    %567 = vmatprep.subr.bf16.mxu0 0
    %568 = vmatpush1.bf16.msra.mxu0 0
    %569 = vmatprep.subr.bf16.mxu0 0
    %570 = vmatpush1.bf16.msra.mxu0 0
    %571 = vmatprep.subr.bf16.mxu0 0
    %572 = vmatpush1.bf16.msra.mxu0 0
    %573 = vmatprep.subr.bf16.mxu0 0
    %574 = vmatpush1.bf16.msra.mxu0 0
    %575 = vmatprep.subr.bf16.mxu0 0
    %576 = vmatpush1.bf16.msra.mxu0 0
    %577 = vmatprep.subr.bf16.mxu0 0
    %578 = vmatpush1.bf16.msra.mxu0 0
    %579 = vmatprep.subr.bf16.mxu0 0
    %580 = vmatpush1.bf16.msra.mxu0 0
    %581 = vmatprep.subr.bf16.mxu0 0
    %582 = vmatpush1.bf16.msra.mxu0 0
    %583 = vmatprep.subr.bf16.mxu0 0
    %584 = vmatpush1.bf16.msra.mxu0 0
    %585 = vmatprep.subr.bf16.mxu0 0
    %586 = vmatpush1.bf16.msra.mxu0 0
    %587 = vmatprep.subr.bf16.mxu0 0
    %588 = vmatpush1.bf16.msra.mxu0 0
    %589 = vmatprep.subr.bf16.mxu0 0
    %590 = vmatpush1.bf16.msra.mxu0 0
    %591 = vmatprep.subr.bf16.mxu0 0
    %592 = vmatpush1.bf16.msra.mxu0 0
    %593 = vmatprep.subr.bf16.mxu0 0
    %594 = vmatpush1.bf16.msra.mxu0 0
    %595 = vmatprep.mubr.bf16.mxu0 0
    %596 = vmatmul.mubr.bf16.gmra.mrb[0].mxu0 %v561
    %v597 = vpop.f32.mrb[0].mxu0
    %v598 = vadd.f32 0.0, %v597
    %v599 = vpop.f32.mrb[0].mxu0
    %v600 = vpop.f32.mrb[0].mxu0
    %v601 = vpop.f32.mrb[0].mxu0
    %602 = vdwg.mxu0
    %603 = vrot.lane.b32.xlu0 %v210, 56
    %v604 = vpop.permute.xlu0 %603
    %v607 = vsel %vm314, %v556, 0
    %609 = vmatprep.subr.bf16.mxu0 0
    %610 = vmatpush1.bf16.msra.mxu0 %v604
    %611 = vmatprep.subr.bf16.mxu0 0
    %612 = vmatpush1.bf16.msra.mxu0 0
    %613 = vmatprep.subr.bf16.mxu0 0
    %614 = vmatpush1.bf16.msra.mxu0 0
    %615 = vmatprep.subr.bf16.mxu0 0
    %616 = vmatpush1.bf16.msra.mxu0 0
    %617 = vmatprep.subr.bf16.mxu0 0
    %618 = vmatpush1.bf16.msra.mxu0 0
    %619 = vmatprep.subr.bf16.mxu0 0
    %620 = vmatpush1.bf16.msra.mxu0 0
    %621 = vmatprep.subr.bf16.mxu0 0
    %622 = vmatpush1.bf16.msra.mxu0 0
    %623 = vmatprep.subr.bf16.mxu0 0
    %624 = vmatpush1.bf16.msra.mxu0 0
    %625 = vmatprep.subr.bf16.mxu0 0
    %626 = vmatpush1.bf16.msra.mxu0 0
    %627 = vmatprep.subr.bf16.mxu0 0
    %628 = vmatpush1.bf16.msra.mxu0 0
    %629 = vmatprep.subr.bf16.mxu0 0
    %630 = vmatpush1.bf16.msra.mxu0 0
    %631 = vmatprep.subr.bf16.mxu0 0
    %632 = vmatpush1.bf16.msra.mxu0 0
    %633 = vmatprep.subr.bf16.mxu0 0
    %634 = vmatpush1.bf16.msra.mxu0 0
    %635 = vmatprep.subr.bf16.mxu0 0
    %636 = vmatpush1.bf16.msra.mxu0 0
    %637 = vmatprep.subr.bf16.mxu0 0
    %638 = vmatpush1.bf16.msra.mxu0 0
    %639 = vmatprep.subr.bf16.mxu0 0
    %640 = vmatpush1.bf16.msra.mxu0 0
    %641 = vmatprep.mubr.bf16.mxu0 0
    %642 = vmatmul.mubr.bf16.gmra.mrb[0].mxu0 %v607
    %v643 = vpop.f32.mrb[0].mxu0
    %v644 = vadd.f32 0.0, %v643
    %v645 = vpop.f32.mrb[0].mxu0
    %v646 = vpop.f32.mrb[0].mxu0
    %v647 = vpop.f32.mrb[0].mxu0
    %648 = vdwg.mxu0
    %v649 = vpack.c.bf16 %v598, %v598
    %v650 = vpack.c.bf16 %v644, %v644
    %651 = vrot.lane.b32.xlu0 %v209, 112
    %v652 = vpop.permute.xlu0 %651
    %653 = vrot.lane.b32.xlu0 %v209, 80
    %v654 = vpop.permute.xlu0 %653
    %v656 = vsel %vm218, %v652, 0
    %v659 = vsel %vm218, %v654, 0
    %661 = vmatprep.subr.bf16.mxu0 0
    %662 = vmatpush1.bf16.xpose.msra.mxu0 %v659
    %663 = vmatprep.subr.bf16.mxu0 0
    %664 = vmatpush1.bf16.xpose.msra.mxu0 0
    %665 = vmatprep.subr.bf16.mxu0 0
    %666 = vmatpush1.bf16.xpose.msra.mxu0 0
    %667 = vmatprep.subr.bf16.mxu0 0
    %668 = vmatpush1.bf16.xpose.msra.mxu0 0
    %669 = vmatprep.subr.bf16.mxu0 0
    %670 = vmatpush1.bf16.xpose.msra.mxu0 0
    %671 = vmatprep.subr.bf16.mxu0 0
    %672 = vmatpush1.bf16.xpose.msra.mxu0 0
    %673 = vmatprep.subr.bf16.mxu0 0
    %674 = vmatpush1.bf16.xpose.msra.mxu0 0
    %675 = vmatprep.subr.bf16.mxu0 0
    %676 = vmatpush1.bf16.xpose.msra.mxu0 0
    %677 = vmatprep.subr.bf16.mxu0 0
    %678 = vmatpush1.bf16.xpose.msra.mxu0 0
    %679 = vmatprep.subr.bf16.mxu0 0
    %680 = vmatpush1.bf16.xpose.msra.mxu0 0
    %681 = vmatprep.subr.bf16.mxu0 0
    %682 = vmatpush1.bf16.xpose.msra.mxu0 0
    %683 = vmatprep.subr.bf16.mxu0 0
    %684 = vmatpush1.bf16.xpose.msra.mxu0 0
    %685 = vmatprep.subr.bf16.mxu0 0
    %686 = vmatpush1.bf16.xpose.msra.mxu0 0
    %687 = vmatprep.subr.bf16.mxu0 0
    %688 = vmatpush1.bf16.xpose.msra.mxu0 0
    %689 = vmatprep.subr.bf16.mxu0 0
    %690 = vmatpush1.bf16.xpose.msra.mxu0 0
    %691 = vmatprep.subr.bf16.mxu0 0
    %692 = vmatpush1.bf16.xpose.msra.mxu0 0
    %693 = vmatprep.mubr.bf16.mxu0 0
    %694 = vmatmul.mubr.bf16.gmra.mrb[0].mxu0 %v656
    %v695 = vpop.f32.mrb[0].mxu0
    %v696 = vadd.f32 %v214, %v695
    %v697 = vpop.f32.mrb[0].mxu0
    %v698 = vpop.f32.mrb[0].mxu0
    %v699 = vpop.f32.mrb[0].mxu0
    %700 = vdwg.mxu0
    %701 = vrot.lane.b32.xlu0 %v210, 112
    %v702 = vpop.permute.xlu0 %701
    %703 = vrot.lane.b32.xlu0 %v210, 80
    %v704 = vpop.permute.xlu0 %703
    %v706 = vsel %vm218, %v702, 0
    %v709 = vsel %vm218, %v704, 0
    %711 = vmatprep.subr.bf16.mxu0 0
    %712 = vmatpush1.bf16.xpose.msra.mxu0 %v709
    %713 = vmatprep.subr.bf16.mxu0 0
    %714 = vmatpush1.bf16.xpose.msra.mxu0 0
    %715 = vmatprep.subr.bf16.mxu0 0
    %716 = vmatpush1.bf16.xpose.msra.mxu0 0
    %717 = vmatprep.subr.bf16.mxu0 0
    %718 = vmatpush1.bf16.xpose.msra.mxu0 0
    %719 = vmatprep.subr.bf16.mxu0 0
    %720 = vmatpush1.bf16.xpose.msra.mxu0 0
    %721 = vmatprep.subr.bf16.mxu0 0
    %722 = vmatpush1.bf16.xpose.msra.mxu0 0
    %723 = vmatprep.subr.bf16.mxu0 0
    %724 = vmatpush1.bf16.xpose.msra.mxu0 0
    %725 = vmatprep.subr.bf16.mxu0 0
    %726 = vmatpush1.bf16.xpose.msra.mxu0 0
    %727 = vmatprep.subr.bf16.mxu0 0
    %728 = vmatpush1.bf16.xpose.msra.mxu0 0
    %729 = vmatprep.subr.bf16.mxu0 0
    %730 = vmatpush1.bf16.xpose.msra.mxu0 0
    %731 = vmatprep.subr.bf16.mxu0 0
    %732 = vmatpush1.bf16.xpose.msra.mxu0 0
    %733 = vmatprep.subr.bf16.mxu0 0
    %734 = vmatpush1.bf16.xpose.msra.mxu0 0
    %735 = vmatprep.subr.bf16.mxu0 0
    %736 = vmatpush1.bf16.xpose.msra.mxu0 0
    %737 = vmatprep.subr.bf16.mxu0 0
    %738 = vmatpush1.bf16.xpose.msra.mxu0 0
    %739 = vmatprep.subr.bf16.mxu0 0
    %740 = vmatpush1.bf16.xpose.msra.mxu0 0
    %741 = vmatprep.subr.bf16.mxu0 0
    %742 = vmatpush1.bf16.xpose.msra.mxu0 0
    %743 = vmatprep.mubr.bf16.mxu0 0
    %744 = vmatmul.mubr.bf16.gmra.mrb[0].mxu0 %v706
    %v745 = vpop.f32.mrb[0].mxu0
    %v746 = vadd.f32 %v214, %v745
    %v747 = vpop.f32.mrb[0].mxu0
    %v748 = vpop.f32.mrb[0].mxu0
    %v749 = vpop.f32.mrb[0].mxu0
    %750 = vdwg.mxu0
    %v751 = vsel %vm314, %v696, -inf
    %752 = vmax.xlane.f32.xlu0 %v751
    %v753 = vpop.xlane.xlu0 %752
    %v754 = vsel %vm314, %v746, -inf
    %755 = vmax.xlane.f32.xlu0 %v754
    %v756 = vpop.xlane.xlu0 %755
    %v757 = vsub.f32 %v696, %v753
    %v758 = vsub.f32 %v746, %v756
    %v759 = vmul.f32 %v757, 1.442695
    %v760 = vpow.pop %v759
    %v761 = vmul.f32 %v758, 1.442695
    %v762 = vpow.pop %v761
    %v763 = vsel %vm314, %v760, 0.0
    %764 = vadd.xlane.f32.xlu0 %v763
    %v765 = vpop.xlane.xlu0 %764
    %v766 = vsel %vm314, %v762, 0.0
    %767 = vadd.xlane.f32.xlu0 %v766
    %v768 = vpop.xlane.xlu0 %767
    %v769 = vrcp.pop %v765
    %v770 = vrcp.pop %v768
    %v771 = vmul.f32 %v760, %v769
    %v772 = vmul.f32 %v762, %v770
    %v773 = vpack.c.bf16 %v771, %v771
    %v774 = vpack.c.bf16 %v772, %v772
    %775 = vrot.lane.b32.xlu0 %v209, 48
    %v776 = vpop.permute.xlu0 %775
    %v779 = vsel %vm314, %v773, 0
    %781 = vmatprep.subr.bf16.mxu0 0
    %782 = vmatpush1.bf16.msra.mxu0 %v776
    %783 = vmatprep.subr.bf16.mxu0 0
    %784 = vmatpush1.bf16.msra.mxu0 0
    %785 = vmatprep.subr.bf16.mxu0 0
    %786 = vmatpush1.bf16.msra.mxu0 0
    %787 = vmatprep.subr.bf16.mxu0 0
    %788 = vmatpush1.bf16.msra.mxu0 0
    %789 = vmatprep.subr.bf16.mxu0 0
    %790 = vmatpush1.bf16.msra.mxu0 0
    %791 = vmatprep.subr.bf16.mxu0 0
    %792 = vmatpush1.bf16.msra.mxu0 0
    %793 = vmatprep.subr.bf16.mxu0 0
    %794 = vmatpush1.bf16.msra.mxu0 0
    %795 = vmatprep.subr.bf16.mxu0 0
    %796 = vmatpush1.bf16.msra.mxu0 0
    %797 = vmatprep.subr.bf16.mxu0 0
    %798 = vmatpush1.bf16.msra.mxu0 0
    %799 = vmatprep.subr.bf16.mxu0 0
    %800 = vmatpush1.bf16.msra.mxu0 0
    %801 = vmatprep.subr.bf16.mxu0 0
    %802 = vmatpush1.bf16.msra.mxu0 0
    %803 = vmatprep.subr.bf16.mxu0 0
    %804 = vmatpush1.bf16.msra.mxu0 0
    %805 = vmatprep.subr.bf16.mxu0 0
    %806 = vmatpush1.bf16.msra.mxu0 0
    %807 = vmatprep.subr.bf16.mxu0 0
    %808 = vmatpush1.bf16.msra.mxu0 0
    %809 = vmatprep.subr.bf16.mxu0 0
    %810 = vmatpush1.bf16.msra.mxu0 0
    %811 = vmatprep.subr.bf16.mxu0 0
    %812 = vmatpush1.bf16.msra.mxu0 0
    %813 = vmatprep.mubr.bf16.mxu0 0
    %814 = vmatmul.mubr.bf16.gmra.mrb[0].mxu0 %v779
    %v815 = vpop.f32.mrb[0].mxu0
    %v816 = vadd.f32 0.0, %v815
    %v817 = vpop.f32.mrb[0].mxu0
    %v818 = vpop.f32.mrb[0].mxu0
    %v819 = vpop.f32.mrb[0].mxu0
    %820 = vdwg.mxu0
    %821 = vrot.lane.b32.xlu0 %v210, 48
    %v822 = vpop.permute.xlu0 %821
    %v825 = vsel %vm314, %v774, 0
    %827 = vmatprep.subr.bf16.mxu0 0
    %828 = vmatpush1.bf16.msra.mxu0 %v822
    %829 = vmatprep.subr.bf16.mxu0 0
    %830 = vmatpush1.bf16.msra.mxu0 0
    %831 = vmatprep.subr.bf16.mxu0 0
    %832 = vmatpush1.bf16.msra.mxu0 0
    %833 = vmatprep.subr.bf16.mxu0 0
    %834 = vmatpush1.bf16.msra.mxu0 0
    %835 = vmatprep.subr.bf16.mxu0 0
    %836 = vmatpush1.bf16.msra.mxu0 0
    %837 = vmatprep.subr.bf16.mxu0 0
    %838 = vmatpush1.bf16.msra.mxu0 0
    %839 = vmatprep.subr.bf16.mxu0 0
    %840 = vmatpush1.bf16.msra.mxu0 0
    %841 = vmatprep.subr.bf16.mxu0 0
    %842 = vmatpush1.bf16.msra.mxu0 0
    %843 = vmatprep.subr.bf16.mxu0 0
    %844 = vmatpush1.bf16.msra.mxu0 0
    %845 = vmatprep.subr.bf16.mxu0 0
    %846 = vmatpush1.bf16.msra.mxu0 0
    %847 = vmatprep.subr.bf16.mxu0 0
    %848 = vmatpush1.bf16.msra.mxu0 0
    %849 = vmatprep.subr.bf16.mxu0 0
    %850 = vmatpush1.bf16.msra.mxu0 0
    %851 = vmatprep.subr.bf16.mxu0 0
    %852 = vmatpush1.bf16.msra.mxu0 0
    %853 = vmatprep.subr.bf16.mxu0 0
    %854 = vmatpush1.bf16.msra.mxu0 0
    %855 = vmatprep.subr.bf16.mxu0 0
    %856 = vmatpush1.bf16.msra.mxu0 0
    %857 = vmatprep.subr.bf16.mxu0 0
    %858 = vmatpush1.bf16.msra.mxu0 0
    %859 = vmatprep.mubr.bf16.mxu0 0
    %860 = vmatmul.mubr.bf16.gmra.mrb[0].mxu0 %v825
    %v861 = vpop.f32.mrb[0].mxu0
    %v862 = vadd.f32 0.0, %v861
    %v863 = vpop.f32.mrb[0].mxu0
    %v864 = vpop.f32.mrb[0].mxu0
    %v865 = vpop.f32.mrb[0].mxu0
    %866 = vdwg.mxu0
    %v867 = vpack.c.bf16 %v816, %v816
    %v868 = vpack.c.bf16 %v862, %v862
    %869 = vrot.lane.b32.xlu0 %v209, 104
    %v870 = vpop.permute.xlu0 %869
    %871 = vrot.lane.b32.xlu0 %v209, 72
    %v872 = vpop.permute.xlu0 %871
    %v874 = vsel %vm218, %v870, 0
    %v877 = vsel %vm218, %v872, 0
    %879 = vmatprep.subr.bf16.mxu0 0
    %880 = vmatpush1.bf16.xpose.msra.mxu0 %v877
    %881 = vmatprep.subr.bf16.mxu0 0
    %882 = vmatpush1.bf16.xpose.msra.mxu0 0
    %883 = vmatprep.subr.bf16.mxu0 0
    %884 = vmatpush1.bf16.xpose.msra.mxu0 0
    %885 = vmatprep.subr.bf16.mxu0 0
    %886 = vmatpush1.bf16.xpose.msra.mxu0 0
    %887 = vmatprep.subr.bf16.mxu0 0
    %888 = vmatpush1.bf16.xpose.msra.mxu0 0
    %889 = vmatprep.subr.bf16.mxu0 0
    %890 = vmatpush1.bf16.xpose.msra.mxu0 0
    %891 = vmatprep.subr.bf16.mxu0 0
    %892 = vmatpush1.bf16.xpose.msra.mxu0 0
    %893 = vmatprep.subr.bf16.mxu0 0
    %894 = vmatpush1.bf16.xpose.msra.mxu0 0
    %895 = vmatprep.subr.bf16.mxu0 0
    %896 = vmatpush1.bf16.xpose.msra.mxu0 0
    %897 = vmatprep.subr.bf16.mxu0 0
    %898 = vmatpush1.bf16.xpose.msra.mxu0 0
    %899 = vmatprep.subr.bf16.mxu0 0
    %900 = vmatpush1.bf16.xpose.msra.mxu0 0
    %901 = vmatprep.subr.bf16.mxu0 0
    %902 = vmatpush1.bf16.xpose.msra.mxu0 0
    %903 = vmatprep.subr.bf16.mxu0 0
    %904 = vmatpush1.bf16.xpose.msra.mxu0 0
    %905 = vmatprep.subr.bf16.mxu0 0
    %906 = vmatpush1.bf16.xpose.msra.mxu0 0
    %907 = vmatprep.subr.bf16.mxu0 0
    %908 = vmatpush1.bf16.xpose.msra.mxu0 0
    %909 = vmatprep.subr.bf16.mxu0 0
    %910 = vmatpush1.bf16.xpose.msra.mxu0 0
    %911 = vmatprep.mubr.bf16.mxu0 0
    %912 = vmatmul.mubr.bf16.gmra.mrb[0].mxu0 %v874
    %v913 = vpop.f32.mrb[0].mxu0
    %v914 = vadd.f32 %v214, %v913
    %v915 = vpop.f32.mrb[0].mxu0
    %v916 = vpop.f32.mrb[0].mxu0
    %v917 = vpop.f32.mrb[0].mxu0
    %918 = vdwg.mxu0
    %919 = vrot.lane.b32.xlu0 %v210, 104
    %v920 = vpop.permute.xlu0 %919
    %921 = vrot.lane.b32.xlu0 %v210, 72
    %v922 = vpop.permute.xlu0 %921
    %v924 = vsel %vm218, %v920, 0
    %v927 = vsel %vm218, %v922, 0
    %929 = vmatprep.subr.bf16.mxu0 0
    %930 = vmatpush1.bf16.xpose.msra.mxu0 %v927
    %931 = vmatprep.subr.bf16.mxu0 0
    %932 = vmatpush1.bf16.xpose.msra.mxu0 0
    %933 = vmatprep.subr.bf16.mxu0 0
    %934 = vmatpush1.bf16.xpose.msra.mxu0 0
    %935 = vmatprep.subr.bf16.mxu0 0
    %936 = vmatpush1.bf16.xpose.msra.mxu0 0
    %937 = vmatprep.subr.bf16.mxu0 0
    %938 = vmatpush1.bf16.xpose.msra.mxu0 0
    %939 = vmatprep.subr.bf16.mxu0 0
    %940 = vmatpush1.bf16.xpose.msra.mxu0 0
    %941 = vmatprep.subr.bf16.mxu0 0
    %942 = vmatpush1.bf16.xpose.msra.mxu0 0
    %943 = vmatprep.subr.bf16.mxu0 0
    %944 = vmatpush1.bf16.xpose.msra.mxu0 0
    %945 = vmatprep.subr.bf16.mxu0 0
    %946 = vmatpush1.bf16.xpose.msra.mxu0 0
    %947 = vmatprep.subr.bf16.mxu0 0
    %948 = vmatpush1.bf16.xpose.msra.mxu0 0
    %949 = vmatprep.subr.bf16.mxu0 0
    %950 = vmatpush1.bf16.xpose.msra.mxu0 0
    %951 = vmatprep.subr.bf16.mxu0 0
    %952 = vmatpush1.bf16.xpose.msra.mxu0 0
    %953 = vmatprep.subr.bf16.mxu0 0
    %954 = vmatpush1.bf16.xpose.msra.mxu0 0
    %955 = vmatprep.subr.bf16.mxu0 0
    %956 = vmatpush1.bf16.xpose.msra.mxu0 0
    %957 = vmatprep.subr.bf16.mxu0 0
    %958 = vmatpush1.bf16.xpose.msra.mxu0 0
    %959 = vmatprep.subr.bf16.mxu0 0
    %960 = vmatpush1.bf16.xpose.msra.mxu0 0
    %961 = vmatprep.mubr.bf16.mxu0 0
    %962 = vmatmul.mubr.bf16.gmra.mrb[0].mxu0 %v924
    %v963 = vpop.f32.mrb[0].mxu0
    %v964 = vadd.f32 %v214, %v963
    %v965 = vpop.f32.mrb[0].mxu0
    %v966 = vpop.f32.mrb[0].mxu0
    %v967 = vpop.f32.mrb[0].mxu0
    %968 = vdwg.mxu0
    %v969 = vsel %vm314, %v914, -inf
    %970 = vmax.xlane.f32.xlu0 %v969
    %v971 = vpop.xlane.xlu0 %970
    %v972 = vsel %vm314, %v964, -inf
    %973 = vmax.xlane.f32.xlu0 %v972
    %v974 = vpop.xlane.xlu0 %973
    %v975 = vsub.f32 %v914, %v971
    %v976 = vsub.f32 %v964, %v974
    %v977 = vmul.f32 %v975, 1.442695
    %v978 = vpow.pop %v977
    %v979 = vmul.f32 %v976, 1.442695
    %v980 = vpow.pop %v979
    %v981 = vsel %vm314, %v978, 0.0
    %982 = vadd.xlane.f32.xlu0 %v981
    %v983 = vpop.xlane.xlu0 %982
    %v984 = vsel %vm314, %v980, 0.0
    %985 = vadd.xlane.f32.xlu0 %v984
    %v986 = vpop.xlane.xlu0 %985
    %v987 = vrcp.pop %v983
    %v988 = vrcp.pop %v986
    %v989 = vmul.f32 %v978, %v987
    %v990 = vmul.f32 %v980, %v988
    %v991 = vpack.c.bf16 %v989, %v989
    %v992 = vpack.c.bf16 %v990, %v990
    %993 = vrot.lane.b32.xlu0 %v209, 40
    %v994 = vpop.permute.xlu0 %993
    %v997 = vsel %vm314, %v991, 0
    %999 = vmatprep.subr.bf16.mxu0 0
    %1000 = vmatpush1.bf16.msra.mxu0 %v994
    %1001 = vmatprep.subr.bf16.mxu0 0
    %1002 = vmatpush1.bf16.msra.mxu0 0
    %1003 = vmatprep.subr.bf16.mxu0 0
    %1004 = vmatpush1.bf16.msra.mxu0 0
    %1005 = vmatprep.subr.bf16.mxu0 0
    %1006 = vmatpush1.bf16.msra.mxu0 0
    %1007 = vmatprep.subr.bf16.mxu0 0
    %1008 = vmatpush1.bf16.msra.mxu0 0
    %1009 = vmatprep.subr.bf16.mxu0 0
    %1010 = vmatpush1.bf16.msra.mxu0 0
    %1011 = vmatprep.subr.bf16.mxu0 0
    %1012 = vmatpush1.bf16.msra.mxu0 0
    %1013 = vmatprep.subr.bf16.mxu0 0
    %1014 = vmatpush1.bf16.msra.mxu0 0
    %1015 = vmatprep.subr.bf16.mxu0 0
    %1016 = vmatpush1.bf16.msra.mxu0 0
    %1017 = vmatprep.subr.bf16.mxu0 0
    %1018 = vmatpush1.bf16.msra.mxu0 0
    %1019 = vmatprep.subr.bf16.mxu0 0
    %1020 = vmatpush1.bf16.msra.mxu0 0
    %1021 = vmatprep.subr.bf16.mxu0 0
    %1022 = vmatpush1.bf16.msra.mxu0 0
    %1023 = vmatprep.subr.bf16.mxu0 0
    %1024 = vmatpush1.bf16.msra.mxu0 0
    %1025 = vmatprep.subr.bf16.mxu0 0
    %1026 = vmatpush1.bf16.msra.mxu0 0
    %1027 = vmatprep.subr.bf16.mxu0 0
    %1028 = vmatpush1.bf16.msra.mxu0 0
    %1029 = vmatprep.subr.bf16.mxu0 0
    %1030 = vmatpush1.bf16.msra.mxu0 0
    %1031 = vmatprep.mubr.bf16.mxu0 0
    %1032 = vmatmul.mubr.bf16.gmra.mrb[0].mxu0 %v997
    %v1033 = vpop.f32.mrb[0].mxu0
    %v1034 = vadd.f32 0.0, %v1033
    %v1035 = vpop.f32.mrb[0].mxu0
    %v1036 = vpop.f32.mrb[0].mxu0
    %v1037 = vpop.f32.mrb[0].mxu0
    %1038 = vdwg.mxu0
    %1039 = vrot.lane.b32.xlu0 %v210, 40
    %v1040 = vpop.permute.xlu0 %1039
    %v1043 = vsel %vm314, %v992, 0
    %1045 = vmatprep.subr.bf16.mxu0 0
    %1046 = vmatpush1.bf16.msra.mxu0 %v1040
    %1047 = vmatprep.subr.bf16.mxu0 0
    %1048 = vmatpush1.bf16.msra.mxu0 0
    %1049 = vmatprep.subr.bf16.mxu0 0
    %1050 = vmatpush1.bf16.msra.mxu0 0
    %1051 = vmatprep.subr.bf16.mxu0 0
    %1052 = vmatpush1.bf16.msra.mxu0 0
    %1053 = vmatprep.subr.bf16.mxu0 0
    %1054 = vmatpush1.bf16.msra.mxu0 0
    %1055 = vmatprep.subr.bf16.mxu0 0
    %1056 = vmatpush1.bf16.msra.mxu0 0
    %1057 = vmatprep.subr.bf16.mxu0 0
    %1058 = vmatpush1.bf16.msra.mxu0 0
    %1059 = vmatprep.subr.bf16.mxu0 0
    %1060 = vmatpush1.bf16.msra.mxu0 0
    %1061 = vmatprep.subr.bf16.mxu0 0
    %1062 = vmatpush1.bf16.msra.mxu0 0
    %1063 = vmatprep.subr.bf16.mxu0 0
    %1064 = vmatpush1.bf16.msra.mxu0 0
    %1065 = vmatprep.subr.bf16.mxu0 0
    %1066 = vmatpush1.bf16.msra.mxu0 0
    %1067 = vmatprep.subr.bf16.mxu0 0
    %1068 = vmatpush1.bf16.msra.mxu0 0
    %1069 = vmatprep.subr.bf16.mxu0 0
    %1070 = vmatpush1.bf16.msra.mxu0 0
    %1071 = vmatprep.subr.bf16.mxu0 0
    %1072 = vmatpush1.bf16.msra.mxu0 0
    %1073 = vmatprep.subr.bf16.mxu0 0
    %1074 = vmatpush1.bf16.msra.mxu0 0
    %1075 = vmatprep.subr.bf16.mxu0 0
    %1076 = vmatpush1.bf16.msra.mxu0 0
    %1077 = vmatprep.mubr.bf16.mxu0 0
    %1078 = vmatmul.mubr.bf16.gmra.mrb[0].mxu0 %v1043
    %v1079 = vpop.f32.mrb[0].mxu0
    %v1080 = vadd.f32 0.0, %v1079
    %v1081 = vpop.f32.mrb[0].mxu0
    %v1082 = vpop.f32.mrb[0].mxu0
    %v1083 = vpop.f32.mrb[0].mxu0
    %1084 = vdwg.mxu0
    %v1085 = vpack.c.bf16 %v1034, %v1034
    %v1086 = vpack.c.bf16 %v1080, %v1080
    %1089 = vrot.lane.b32.xlu0 %v649, 8
    %v1090 = vpop.permute.xlu0 %1089
    %1091 = vrot.lane.b32.xlu0 %v650, 8
    %v1092 = vpop.permute.xlu0 %1091
    %1095 = vrot.lane.b32.xlu0 %v867, 16
    %v1096 = vpop.permute.xlu0 %1095
    %1097 = vrot.lane.b32.xlu0 %v868, 16
    %v1098 = vpop.permute.xlu0 %1097
    %1101 = vrot.lane.b32.xlu0 %v1085, 24
    %v1102 = vpop.permute.xlu0 %1101
    %1103 = vrot.lane.b32.xlu0 %v1086, 24
    %v1104 = vpop.permute.xlu0 %1103
    %v1107 = vsel %vm218, %v431, %v1090
    %v1110 = vsel %vm218, %v432, %v1092
    %v1112 = vsel %vm314, %v1107, %v1096
    %v1114 = vsel %vm314, %v1110, %v1098
    %vm1115 = vcmask 195584
    %v1117 = vsel %vm1115, %v1112, %v1102
    %v1119 = vsel %vm1115, %v1114, %v1104
    %v1120 = vld [vmem:[%s5] sm:$0xf]
    %v1121 = vld [vmem:[%s5 + $0x4] sm:$0xf]
    %v1122 = vld [vmem:[%s5 + $0x8] sm:$0xf]
    %v1123 = vld [vmem:[%s5 + $0xc] sm:$0xf]
    %v1124 = vld [vmem:[%s6] sm:$0x1]
    %v1126 = vlaneseq
    %v1127 = vshrl.u32 %v1126, 7
    %v1128 = vsub.s32 0, %v1127
    %v1129 = vrot.slane %v1124, %v1128
    %v1133 = vunpack.c.l.b16 %v1117
    %v1134 = vunpack.c.l.b16 %v1119
    %v1135 = vpack.c.b16 %v1134, %v1133
    %v1140 = vunpack.c.l.b16 %v1120
    %v1141 = vunpack.c.l.b16 %v1121
    %v1142 = vunpack.c.l.b16 %v1122
    %v1143 = vunpack.c.l.b16 %v1123
    %v1144 = vpack.c.b16 %v1141, %v1140
    %v1145 = vpack.c.b16 %v1143, %v1142
    %v1149 = vsel %vm50, %v1135, 0
    %1151 = vmatprep.subr.bf16.mxu0 0
    %1152 = vmatpush1.bf16.msra.mxu0 %v1144
    %1153 = vmatprep.subr.bf16.mxu0 0
    %1154 = vmatpush1.bf16.msra.mxu0 %v1145
    %1155 = vmatprep.subr.bf16.mxu0 0
    %1156 = vmatpush1.bf16.msra.mxu0 0
    %1157 = vmatprep.subr.bf16.mxu0 0
    %1158 = vmatpush1.bf16.msra.mxu0 0
    %1159 = vmatprep.subr.bf16.mxu0 0
    %1160 = vmatpush1.bf16.msra.mxu0 0
    %1161 = vmatprep.subr.bf16.mxu0 0
    %1162 = vmatpush1.bf16.msra.mxu0 0
    %1163 = vmatprep.subr.bf16.mxu0 0
    %1164 = vmatpush1.bf16.msra.mxu0 0
    %1165 = vmatprep.subr.bf16.mxu0 0
    %1166 = vmatpush1.bf16.msra.mxu0 0
    %1167 = vmatprep.subr.bf16.mxu0 0
    %1168 = vmatpush1.bf16.msra.mxu0 0
    %1169 = vmatprep.subr.bf16.mxu0 0
    %1170 = vmatpush1.bf16.msra.mxu0 0
    %1171 = vmatprep.subr.bf16.mxu0 0
    %1172 = vmatpush1.bf16.msra.mxu0 0
    %1173 = vmatprep.subr.bf16.mxu0 0
    %1174 = vmatpush1.bf16.msra.mxu0 0
    %1175 = vmatprep.subr.bf16.mxu0 0
    %1176 = vmatpush1.bf16.msra.mxu0 0
    %1177 = vmatprep.subr.bf16.mxu0 0
    %1178 = vmatpush1.bf16.msra.mxu0 0
    %1179 = vmatprep.subr.bf16.mxu0 0
    %1180 = vmatpush1.bf16.msra.mxu0 0
    %1181 = vmatprep.subr.bf16.mxu0 0
    %1182 = vmatpush1.bf16.msra.mxu0 0
    %1183 = vmatprep.mubr.bf16.mxu0 0
    %1184 = vmatmul.mubr.bf16.gmra.mrb[0].mxu0 %v1149
    %v1185 = vpop.f32.mrb[0].mxu0
    %v1186 = vadd.f32 %v1129, %v1185
    %v1187 = vpop.f32.mrb[0].mxu0
    %v1188 = vpop.f32.mrb[0].mxu0
    %v1189 = vadd.f32 %v1129, %v1188
    %v1190 = vpop.f32.mrb[0].mxu0
    %1191 = vdwg.mxu0
    %v1192 = vadd.f32 %v46, %v1186
    %v1193 = vadd.f32 %v48, %v1189
    %v1194 = vsel %vm50, %v1192, 0.0
    %1195 = vadd.xlane.f32.xlu0 %v1194
    %v1196 = vpop.xlane.xlu0 %1195
    %v1197 = vsel %vm50, %v1193, 0.0
    %1198 = vadd.xlane.f32.xlu0 %v1197
    %v1199 = vpop.xlane.xlu0 %1198
    %v1200 = vmul.f32 %v1196, %v63
    %v1201 = vmul.f32 %v1199, %v63
    %v1202 = vsub.f32 %v1192, %v1200
    %v1203 = vsub.f32 %v1193, %v1201
    %v1204 = vmul.f32 %v1202, %v1202
    %v1205 = vmul.f32 %v1203, %v1203
    %v1206 = vsel %vm50, %v1204, 0.0
    %1207 = vadd.xlane.f32.xlu0 %v1206
    %v1208 = vpop.xlane.xlu0 %1207
    %v1209 = vsel %vm50, %v1205, 0.0
    %1210 = vadd.xlane.f32.xlu0 %v1209
    %v1211 = vpop.xlane.xlu0 %1210
    %v1212 = vmul.f32 %v1208, %v63
    %v1213 = vmul.f32 %v1211, %v63
    %v1214 = vadd.f32 %v1212, 1e-06
    %v1215 = vadd.f32 %v1213, 1e-06
    %v1216 = vrsqrt.pop %v1214
    %v1217 = vrsqrt.pop %v1215
    %v1218 = vmul.f32 %v1202, %v1216
    %v1219 = vmul.f32 %v1203, %v1217
    %v1220 = vld [vmem:[%s7] sm:$0x1]
    %v1222 = vlaneseq
    %v1223 = vshrl.u32 %v1222, 7
    %v1224 = vsub.s32 0, %v1223
    %v1225 = vrot.slane %v1220, %v1224
    %v1227 = vmul.f32 %v1218, %v1225
    %v1228 = vmul.f32 %v1219, %v1225
    %v1229 = vld [vmem:[%s8] sm:$0x1]
    %v1231 = vlaneseq
    %v1232 = vshrl.u32 %v1231, 7
    %v1233 = vsub.s32 0, %v1232
    %v1234 = vrot.slane %v1229, %v1233
    %v1236 = vadd.f32 %v1227, %v1234
    %v1237 = vadd.f32 %v1228, %v1234
    %v1238 = vpack.c.bf16 %v1237, %v1236
    %v1239 = vld [vmem:[%s9] sm:$0xf]
    %v1240 = vld [vmem:[%s9 + $0x4] sm:$0xf]
    %v1241 = vld [vmem:[%s9 + $0x8] sm:$0xf]
    %v1242 = vld [vmem:[%s9 + $0xc] sm:$0xf]
    %v1243 = vld [vmem:[%s10] sm:$0x1]
    %v1245 = vlaneseq
    %v1246 = vshrl.u32 %v1245, 7
    %v1247 = vsub.s32 0, %v1246
    %v1248 = vrot.slane %v1243, %v1247
    %v1254 = vunpack.c.l.b16 %v1239
    %v1255 = vunpack.c.l.b16 %v1240
    %v1256 = vunpack.c.l.b16 %v1241
    %v1257 = vunpack.c.l.b16 %v1242
    %v1258 = vpack.c.b16 %v1255, %v1254
    %v1259 = vpack.c.b16 %v1257, %v1256
    %v1263 = vsel %vm50, %v1238, 0
    %1265 = vmatprep.subr.bf16.mxu0 0
    %1266 = vmatpush1.bf16.msra.mxu0 %v1258
    %1267 = vmatprep.subr.bf16.mxu0 0
    %1268 = vmatpush1.bf16.msra.mxu0 %v1259
    %1269 = vmatprep.subr.bf16.mxu0 0
    %1270 = vmatpush1.bf16.msra.mxu0 0
    %1271 = vmatprep.subr.bf16.mxu0 0
    %1272 = vmatpush1.bf16.msra.mxu0 0
    %1273 = vmatprep.subr.bf16.mxu0 0
    %1274 = vmatpush1.bf16.msra.mxu0 0
    %1275 = vmatprep.subr.bf16.mxu0 0
    %1276 = vmatpush1.bf16.msra.mxu0 0
    %1277 = vmatprep.subr.bf16.mxu0 0
    %1278 = vmatpush1.bf16.msra.mxu0 0
    %1279 = vmatprep.subr.bf16.mxu0 0
    %1280 = vmatpush1.bf16.msra.mxu0 0
    %1281 = vmatprep.subr.bf16.mxu0 0
    %1282 = vmatpush1.bf16.msra.mxu0 0
    %1283 = vmatprep.subr.bf16.mxu0 0
    %1284 = vmatpush1.bf16.msra.mxu0 0
    %1285 = vmatprep.subr.bf16.mxu0 0
    %1286 = vmatpush1.bf16.msra.mxu0 0
    %1287 = vmatprep.subr.bf16.mxu0 0
    %1288 = vmatpush1.bf16.msra.mxu0 0
    %1289 = vmatprep.subr.bf16.mxu0 0
    %1290 = vmatpush1.bf16.msra.mxu0 0
    %1291 = vmatprep.subr.bf16.mxu0 0
    %1292 = vmatpush1.bf16.msra.mxu0 0
    %1293 = vmatprep.subr.bf16.mxu0 0
    %1294 = vmatpush1.bf16.msra.mxu0 0
    %1295 = vmatprep.subr.bf16.mxu0 0
    %1296 = vmatpush1.bf16.msra.mxu0 0
    %1297 = vmatprep.mubr.bf16.mxu0 0
    %1298 = vmatmul.mubr.bf16.gmra.mrb[0].mxu0 %v1263
    %v1299 = vpop.f32.mrb[0].mxu0
    %v1300 = vadd.f32 %v1248, %v1299
    %v1301 = vpop.f32.mrb[0].mxu0
    %v1302 = vpop.f32.mrb[0].mxu0
    %v1303 = vadd.f32 %v1248, %v1302
    %v1304 = vpop.f32.mrb[0].mxu0
    %1305 = vdwg.mxu0
    %v1306 = vmul.f32 %v1300, 0.5
    %v1307 = vmul.f32 %v1303, 0.5
    %v1308 = vmul.f32 %v1300, 0.70710677
    %v1309 = vmul.f32 %v1303, 0.70710677
    %vm1310 = vcmp.ge.f32.partialorder %v1308, 0.0
    %vm1311 = vcmp.ge.f32.partialorder %v1309, 0.0
    %v1312 = vsel %vm1310, 1.0, -1.0
    %v1313 = vsel %vm1311, 1.0, -1.0
    %v1314 = vand.u32 2147483647, %v1308
    %v1315 = vand.u32 2147483647, %v1309
    %v1316 = vmul.f32 %v1314, 0.3275911
    %v1317 = vmul.f32 %v1315, 0.3275911
    %v1318 = vadd.f32 %v1316, 1.0
    %v1319 = vadd.f32 %v1317, 1.0
    %v1320 = vrcp.pop %v1318
    %v1321 = vmul.f32 1.0, %v1320
    %v1322 = vrcp.pop %v1319
    %v1323 = vmul.f32 1.0, %v1322
    %v1324 = vmul.f32 %v1321, 1.0614054
    %v1325 = vmul.f32 %v1323, 1.0614054
    %v1326 = vadd.f32 %v1324, -1.4531521
    %v1327 = vadd.f32 %v1325, -1.4531521
    %v1328 = vmul.f32 %v1326, %v1321
    %v1329 = vmul.f32 %v1327, %v1323
    %v1330 = vadd.f32 %v1328, 1.4214138
    %v1331 = vadd.f32 %v1329, 1.4214138
    %v1332 = vmul.f32 %v1330, %v1321
    %v1333 = vmul.f32 %v1331, %v1323
    %v1334 = vadd.f32 %v1332, -0.28449672
    %v1335 = vadd.f32 %v1333, -0.28449672
    %v1336 = vmul.f32 %v1334, %v1321
    %v1337 = vmul.f32 %v1335, %v1323
    %v1338 = vadd.f32 %v1336, 0.2548296
    %v1339 = vadd.f32 %v1337, 0.2548296
    %v1340 = vmul.f32 %v1338, %v1321
    %v1341 = vmul.f32 %v1339, %v1323
    %v1342 = vsub.f32 0.0, %v1314
    %v1343 = vsub.f32 0.0, %v1315
    %v1344 = vmul.f32 %v1342, %v1314
    %v1345 = vmul.f32 %v1343, %v1315
    %v1346 = vmul.f32 %v1344, 1.442695
    %v1347 = vpow.pop %v1346
    %v1348 = vmul.f32 %v1345, 1.442695
    %v1349 = vpow.pop %v1348
    %v1350 = vmul.f32 %v1340, %v1347
    %v1351 = vmul.f32 %v1341, %v1349
    %v1352 = vsub.f32 1.0, %v1350
    %v1353 = vsub.f32 1.0, %v1351
    %v1354 = vmul.f32 %v1312, %v1352
    %v1355 = vmul.f32 %v1313, %v1353
    %v1356 = vadd.f32 %v1354, 1.0
    %v1357 = vadd.f32 %v1355, 1.0
    %v1358 = vmul.f32 %v1306, %v1356
    %v1359 = vmul.f32 %v1307, %v1357
    %v1360 = vpack.c.bf16 %v1359, %v1358
    %v1361 = vld [vmem:[%s11] sm:$0xf]
    %v1362 = vld [vmem:[%s11 + $0x4] sm:$0xf]
    %v1363 = vld [vmem:[%s11 + $0x8] sm:$0xf]
    %v1364 = vld [vmem:[%s11 + $0xc] sm:$0xf]
    %v1365 = vld [vmem:[%s11 + $0x10] sm:$0xf]
    %v1366 = vld [vmem:[%s11 + $0x14] sm:$0xf]
    %v1367 = vld [vmem:[%s11 + $0x18] sm:$0xf]
    %v1368 = vld [vmem:[%s11 + $0x1c] sm:$0xf]
    %v1369 = vld [vmem:[%s11 + $0x20] sm:$0xf]
    %v1370 = vld [vmem:[%s11 + $0x24] sm:$0xf]
    %v1371 = vld [vmem:[%s11 + $0x28] sm:$0xf]
    %v1372 = vld [vmem:[%s11 + $0x2c] sm:$0xf]
    %v1373 = vld [vmem:[%s11 + $0x30] sm:$0xf]
    %v1374 = vld [vmem:[%s11 + $0x34] sm:$0xf]
    %v1375 = vld [vmem:[%s11 + $0x38] sm:$0xf]
    %v1376 = vld [vmem:[%s11 + $0x3c] sm:$0xf]
    %v1377 = vld [vmem:[%s12] sm:$0x1]
    %v1379 = vlaneseq
    %v1380 = vshrl.u32 %v1379, 7
    %v1381 = vsub.s32 0, %v1380
    %v1382 = vrot.slane %v1377, %v1381
    %v1400 = vunpack.c.l.b16 %v1361
    %v1401 = vunpack.c.l.b16 %v1362
    %v1402 = vunpack.c.l.b16 %v1363
    %v1403 = vunpack.c.l.b16 %v1364
    %v1404 = vunpack.c.l.b16 %v1365
    %v1405 = vunpack.c.l.b16 %v1366
    %v1406 = vunpack.c.l.b16 %v1367
    %v1407 = vunpack.c.l.b16 %v1368
    %v1408 = vunpack.c.l.b16 %v1369
    %v1409 = vunpack.c.l.b16 %v1370
    %v1410 = vunpack.c.l.b16 %v1371
    %v1411 = vunpack.c.l.b16 %v1372
    %v1412 = vunpack.c.l.b16 %v1373
    %v1413 = vunpack.c.l.b16 %v1374
    %v1414 = vunpack.c.l.b16 %v1375
    %v1415 = vunpack.c.l.b16 %v1376
    %v1416 = vpack.c.b16 %v1401, %v1400
    %v1417 = vpack.c.b16 %v1403, %v1402
    %v1418 = vpack.c.b16 %v1405, %v1404
    %v1419 = vpack.c.b16 %v1407, %v1406
    %v1420 = vpack.c.b16 %v1409, %v1408
    %v1421 = vpack.c.b16 %v1411, %v1410
    %v1422 = vpack.c.b16 %v1413, %v1412
    %v1423 = vpack.c.b16 %v1415, %v1414
    %1432 = vmatprep.subr.bf16.mxu0 0
    %1433 = vmatpush1.bf16.msra.mxu0 %v1416
    %1434 = vmatprep.subr.bf16.mxu0 0
    %1435 = vmatpush1.bf16.msra.mxu0 %v1417
    %1436 = vmatprep.subr.bf16.mxu0 0
    %1437 = vmatpush1.bf16.msra.mxu0 %v1418
    %1438 = vmatprep.subr.bf16.mxu0 0
    %1439 = vmatpush1.bf16.msra.mxu0 %v1419
    %1440 = vmatprep.subr.bf16.mxu0 0
    %1441 = vmatpush1.bf16.msra.mxu0 %v1420
    %1442 = vmatprep.subr.bf16.mxu0 0
    %1443 = vmatpush1.bf16.msra.mxu0 %v1421
    %1444 = vmatprep.subr.bf16.mxu0 0
    %1445 = vmatpush1.bf16.msra.mxu0 %v1422
    %1446 = vmatprep.subr.bf16.mxu0 0
    %1447 = vmatpush1.bf16.msra.mxu0 %v1423
    %1448 = vmatprep.subr.bf16.mxu0 0
    %1449 = vmatpush1.bf16.msra.mxu0 0
    %1450 = vmatprep.subr.bf16.mxu0 0
    %1451 = vmatpush1.bf16.msra.mxu0 0
    %1452 = vmatprep.subr.bf16.mxu0 0
    %1453 = vmatpush1.bf16.msra.mxu0 0
    %1454 = vmatprep.subr.bf16.mxu0 0
    %1455 = vmatpush1.bf16.msra.mxu0 0
    %1456 = vmatprep.subr.bf16.mxu0 0
    %1457 = vmatpush1.bf16.msra.mxu0 0
    %1458 = vmatprep.subr.bf16.mxu0 0
    %1459 = vmatpush1.bf16.msra.mxu0 0
    %1460 = vmatprep.subr.bf16.mxu0 0
    %1461 = vmatpush1.bf16.msra.mxu0 0
    %1462 = vmatprep.subr.bf16.mxu0 0
    %1463 = vmatpush1.bf16.msra.mxu0 0
    %1464 = vmatprep.mubr.bf16.mxu0 0
    %1465 = vmatmul.mubr.bf16.gmra.mrb[0].mxu0 %v1360
    %v1466 = vpop.f32.mrb[0].mxu0
    %v1467 = vadd.f32 %v1382, %v1466
    %v1468 = vpop.f32.mrb[0].mxu0
    %v1469 = vpop.f32.mrb[0].mxu0
    %v1470 = vadd.f32 %v1382, %v1469
    %v1471 = vpop.f32.mrb[0].mxu0
    %1472 = vdwg.mxu0
    %v1473 = vadd.f32 %v1192, %v1467
    %v1474 = vadd.f32 %v1193, %v1470
    %1475 = vst.msk [vmem:[#allocation2] sm:$0xff] %vm50, %v1473
    %1476 = vst.msk [vmem:[#allocation2 + $0x8] sm:$0xff] %vm50, %v1474
    // Predicated region
    $region54: #{tpu_custom_call.1} parent=1 // pred_check
      _
    $region55: #{tpu_custom_call.1} parent=1 // pred_check_branch
      %1478 = sbr.rel (0) target = $region57
    $region56: #{tpu_custom_call.1} parent=1 // pred_region
      %s1480 = ssub.s32 256, 256
      %1481 = vsyncadd [#allocation3], %s1480
      %s1482 = sshll.u32 [#allocation2], 4
      %s1483 = int_to_ptr.vmem [resolvable:$true] %s1482
      %1488 = dma.vmem_to_hbm [thread:$0]  %s1483, 256, %s13, [#allocation3], 128, 128, 8
    $region57: #{tpu_custom_call.1} parent=1 // pred_fallthru
      _
    // Predicated region
    $region58: #{tpu_custom_call.1} parent=1 // pred_check
      _
    $region59: #{tpu_custom_call.1} parent=1 // pred_check_branch
      %1490 = sbr.rel (0) target = $region61
    $region60: #{tpu_custom_call.1} parent=1 // pred_region
      %1491 = dma.done [#allocation3], 256
    $region61: #{tpu_custom_call.1} parent=1 // pred_fallthru
      _
    %1492 = vsyncpa [#allocation3], 1

</llo_original>
